<compile_context>
chip_gen: v7x
topology: tpu7x:2x2x1
jax: 0.10.0
libtpu: 0.0.40
codegen_flags: <defaults>
</compile_context>

<pallas_src>
import jax
import jax.numpy as jnp
from jax.experimental import pallas as pl
from jax.experimental.pallas import tpu as pltpu

IN_FEATURES = 2883
HIDDEN = 330
OUT_FEATURES = 5

_LANE = 128
_SUBLANE = 8

H_PAD = 384          # round_up(330, 128)
O_PAD = 128          # round_up(5, 128) -> lane-dense output, unmasked stores
TM_DEFAULT = 512     # batch tile (sweepable; fits VMEM on v5e/v6e/v7x)
_MIN_SPLIT = 64      # below this, a single block; splitting gains nothing


def _round_up(x, m):
    return ((x + m - 1) // m) * m


def _mlp_kernel(x_ref, w1_ref, b1_ref, w2_ref, b2_ref, o_ref):
    # x may arrive as f32 or bf16; the cast is a no-op when already bf16.
    xb = x_ref[...].astype(jnp.bfloat16)
    h = jnp.dot(xb, w1_ref[...], preferred_element_type=jnp.float32)
    h = jnp.maximum(h + b1_ref[...], 0.0)          # f32 epilogue (VPU filler under MXU)
    y = jnp.dot(h.astype(jnp.bfloat16), w2_ref[...],
                preferred_element_type=jnp.float32)
    o_ref[...] = (y + b2_ref[...]).astype(o_ref.dtype)


def prepare_params(w1, b1, w2, b2):
    """One-time weight prep (hoisted out of the hot path).

    w1: (330, 2883), b1: (330,), w2: (5, 330), b2: (5,)  ->  pre-transposed,
    zero-padded to lane multiples on the hidden/output axes, weights cast to bf16.
    Padding columns/rows carry zero weight and zero bias, so they are inert.
    """
    w1p = jnp.zeros((IN_FEATURES, H_PAD), jnp.bfloat16).at[:, :HIDDEN].set(
        w1.T.astype(jnp.bfloat16))
    b1p = jnp.zeros((1, H_PAD), jnp.float32).at[0, :HIDDEN].set(b1)
    w2p = jnp.zeros((H_PAD, O_PAD), jnp.bfloat16).at[:HIDDEN, :OUT_FEATURES].set(
        w2.T.astype(jnp.bfloat16))
    b2p = jnp.zeros((1, O_PAD), jnp.float32).at[0, :OUT_FEATURES].set(b2)
    return w1p, b1p, w2p, b2p


def _choose_tile(n):
    """Pick (tm, grid_m): minimize ragged-tail waste, keep >=2 steps for v7x."""
    if n < _MIN_SPLIT:
        return n, 1                                   # block dim == full dim is legal
    # >= 2 grid steps so the "parallel" batch axis can shard across v7x's two TCs;
    # round tile to a sublane multiple so the tail block wastes at most 7 rows
    # per step instead of up to TM_DEFAULT-1.
    grid_m = max(2, pl.cdiv(n, TM_DEFAULT))
    tm = min(TM_DEFAULT, _round_up(pl.cdiv(n, grid_m), _SUBLANE))
    return tm, pl.cdiv(n, tm)


@jax.jit
def neural_net_forward(x, w1p, b1p, w2p, b2p):
    """x: (N, 2883) f32 or bf16; params from prepare_params(). Returns (N, 5) f32."""
    n = x.shape[0]
    tm, grid_m = _choose_tile(n)
    n_rows = grid_m * tm

    flops = 2 * n_rows * (IN_FEATURES * H_PAD + H_PAD * O_PAD)
    bytes_accessed = (n * IN_FEATURES * x.dtype.itemsize   # x (read once)
                      + IN_FEATURES * H_PAD * 2            # W1 (bf16, resident)
                      + H_PAD * O_PAD * 2                  # W2 (bf16, resident)
                      + (H_PAD + O_PAD) * 4                # biases (f32)
                      + n_rows * O_PAD * 2)                # output (bf16)

    out = pl.pallas_call(
        _mlp_kernel,
        out_shape=jax.ShapeDtypeStruct((n_rows, O_PAD), jnp.bfloat16),
        grid_spec=pltpu.PrefetchScalarGridSpec(
            num_scalar_prefetch=0,
            grid=(grid_m,),
            in_specs=[
                pl.BlockSpec((tm, IN_FEATURES), lambda i: (i, 0)),     # x tile
                pl.BlockSpec((IN_FEATURES, H_PAD), lambda i: (0, 0)),  # W1 (resident)
                pl.BlockSpec((1, H_PAD), lambda i: (0, 0)),            # b1
                pl.BlockSpec((H_PAD, O_PAD), lambda i: (0, 0)),        # W2 (resident)
                pl.BlockSpec((1, O_PAD), lambda i: (0, 0)),            # b2
            ],
            out_specs=pl.BlockSpec((tm, O_PAD), lambda i: (i, 0)),
        ),
        compiler_params=pltpu.CompilerParams(
            dimension_semantics=("parallel",),          # batch axis -> megacore
            vmem_limit_bytes=32 * 1024 * 1024,          # headroom (v5e default 16 MiB)
        ),
        cost_estimate=pl.CostEstimate(
            flops=flops, transcendentals=0, bytes_accessed=bytes_accessed),
    )(x, w1p, b1p, w2p, b2p)

    # Ragged tail: rows >= n of the last x block are read out-of-bounds (Pallas
    # does not zero-fill -> unspecified data), but they only ever land in output
    # rows >= n, which are sliced off here.  Do NOT add any cross-row reduction
    # before this slice.
    return out[:n, :OUT_FEATURES].astype(jnp.float32)


def init_params(key):
    """Deterministic init matching the nn.Linear shapes (out, in)."""
    k1, k2, k3, k4 = jax.random.split(key, 4)
    bound1 = 1.0 / (IN_FEATURES ** 0.5)
    bound2 = 1.0 / (HIDDEN ** 0.5)
    w1 = jax.random.uniform(k1, (HIDDEN, IN_FEATURES), jnp.float32, -bound1, bound1)
    b1 = jax.random.uniform(k2, (HIDDEN,), jnp.float32, -bound1, bound1)
    w2 = jax.random.uniform(k3, (OUT_FEATURES, HIDDEN), jnp.float32, -bound2, bound2)
    b2 = jax.random.uniform(k4, (OUT_FEATURES,), jnp.float32, -bound2, bound2)
    return w1, b1, w2, b2


if __name__ == "__main__":
    key = jax.random.PRNGKey(0)
    kx, kp = jax.random.split(key)
    w1, b1, w2, b2 = init_params(kp)
    params = prepare_params(w1, b1, w2, b2)        # one-time prep (not in hot path)

    def ref_forward(xf32):
        return jnp.maximum(xf32 @ w1.T + b1, 0.0) @ w2.T + b2

    # (n, dtype): tiny single-block f32 path; ragged batch on the bf16 fast path
    # (2 steps, tm=136 -> 12 wasted rows instead of 252); mid-size bf16 batch.
    for n, dt in ((4, jnp.float32), (260, jnp.bfloat16), (600, jnp.bfloat16)):
        xf32 = jax.random.normal(jax.random.fold_in(kx, n),
                                 (n, IN_FEATURES), jnp.float32)
        x = xf32.astype(dt)
        y = jax.block_until_ready(neural_net_forward(x, *params))
        ref = ref_forward(x.astype(jnp.float32))
        assert y.shape == (n, OUT_FEATURES), y.shape
        # bf16 MXU operands with f32 accumulation -> loosened tolerance vs f32 ref.
        err = float(jnp.max(jnp.abs(y - ref)))
        assert jnp.allclose(y, ref, atol=5e-2, rtol=5e-2), (
            f"mismatch vs reference for n={n} dtype={dt}: max abs err {err}")

    print("KERNEL_OK")
</pallas_src>

<mosaic_0001>
module attributes {stable_mosaic.version = 11 : i64} {
  func.func @_mlp_kernel(%arg0: i32, %arg1: memref<4x2883xf32, #tpu.memory_space<vmem>>, %arg2: memref<2883x384xbf16, #tpu.memory_space<vmem>>, %arg3: memref<1x384xf32, #tpu.memory_space<vmem>>, %arg4: memref<384x128xbf16, #tpu.memory_space<vmem>>, %arg5: memref<1x128xf32, #tpu.memory_space<vmem>>, %arg6: memref<4x128xbf16, #tpu.memory_space<vmem>>) attributes {dimension_semantics = [#tpu.dimension_semantics<parallel>], iteration_bounds = array<i64: 1>, scalar_prefetch = 0 : i64, scratch_operands = 0 : i64, tpu.core_type = #tpu.core_type<tc>, window_params = [{transform_indices = @transform_0, window_bounds = array<i64: 4, 2883>}, {pipeline_mode = #tpu.pipeline_mode<synchronous>, transform_indices = @transform_1, window_bounds = array<i64: 2883, 384>}, {pipeline_mode = #tpu.pipeline_mode<synchronous>, transform_indices = @transform_2, window_bounds = array<i64: 1, 384>}, {pipeline_mode = #tpu.pipeline_mode<synchronous>, transform_indices = @transform_3, window_bounds = array<i64: 384, 128>}, {pipeline_mode = #tpu.pipeline_mode<synchronous>, transform_indices = @transform_4, window_bounds = array<i64: 1, 128>}, {transform_indices = @transform_5, window_bounds = array<i64: 4, 128>}]} {
    %c0 = arith.constant 0 : index
    %c0_0 = arith.constant 0 : index
    %0 = vector.load %arg1[%c0, %c0_0] : memref<4x2883xf32, #tpu.memory_space<vmem>>, vector<4x2883xf32>
    %1 = arith.truncf %0 : vector<4x2883xf32> to vector<4x2883xbf16>
    %c0_1 = arith.constant 0 : index
    %c0_2 = arith.constant 0 : index
    %2 = vector.load %arg2[%c0_1, %c0_2] : memref<2883x384xbf16, #tpu.memory_space<vmem>>, vector<2883x384xbf16>
    %cst = arith.constant dense<0.000000e+00> : vector<4x384xf32>
    %3 = tpu.matmul %1, %2, %cst {dimension_numbers = #tpu.dot_dimension_numbers<[1], [0], [0], [1], [0, 0, 1, 1], [], []>} : vector<4x2883xbf16>, vector<2883x384xbf16>, vector<4x384xf32> -> vector<4x384xf32>
    %c0_3 = arith.constant 0 : index
    %c0_4 = arith.constant 0 : index
    %4 = vector.load %arg3[%c0_3, %c0_4] : memref<1x384xf32, #tpu.memory_space<vmem>>, vector<1x384xf32>
    %5 = vector.broadcast %4 : vector<1x384xf32> to vector<4x384xf32>
    %6 = arith.addf %3, %5 : vector<4x384xf32>
    %cst_5 = arith.constant 0.000000e+00 : f32
    %7 = vector.broadcast %cst_5 : f32 to vector<4x384xf32>
    %8 = arith.maximumf %6, %7 : vector<4x384xf32>
    %9 = arith.truncf %8 : vector<4x384xf32> to vector<4x384xbf16>
    %c0_6 = arith.constant 0 : index
    %c0_7 = arith.constant 0 : index
    %10 = vector.load %arg4[%c0_6, %c0_7] : memref<384x128xbf16, #tpu.memory_space<vmem>>, vector<384x128xbf16>
    %cst_8 = arith.constant dense<0.000000e+00> : vector<4x128xf32>
    %11 = tpu.matmul %9, %10, %cst_8 {dimension_numbers = #tpu.dot_dimension_numbers<[1], [0], [0], [1], [0, 0, 1, 1], [], []>} : vector<4x384xbf16>, vector<384x128xbf16>, vector<4x128xf32> -> vector<4x128xf32>
    %c0_9 = arith.constant 0 : index
    %c0_10 = arith.constant 0 : index
    %12 = vector.load %arg5[%c0_9, %c0_10] : memref<1x128xf32, #tpu.memory_space<vmem>>, vector<1x128xf32>
    %13 = vector.broadcast %12 : vector<1x128xf32> to vector<4x128xf32>
    %14 = arith.addf %11, %13 : vector<4x128xf32>
    %15 = arith.truncf %14 : vector<4x128xf32> to vector<4x128xbf16>
    %c0_11 = arith.constant 0 : index
    %c0_12 = arith.constant 0 : index
    %16 = vector.load %arg6[%c0_11, %c0_12] : memref<4x128xbf16, #tpu.memory_space<vmem>>, vector<4x128xbf16>
    tpu.vector_store %arg6[%c0_11, %c0_12], %15 {strides = array<i32>} : memref<4x128xbf16, #tpu.memory_space<vmem>>, vector<4x128xbf16>,
    return
  }
  func.func @transform_0(%arg0: i32) -> (i32, i32) {
    %c0_i32 = arith.constant 0 : i32
    %c0_i32_0 = arith.constant 0 : i32
    return %arg0, %c0_i32 : i32, i32
  }
  func.func @transform_1(%arg0: i32) -> (i32, i32) {
    %c0_i32 = arith.constant 0 : i32
    %c0_i32_0 = arith.constant 0 : i32
    %c0_i32_1 = arith.constant 0 : i32
    return %c0_i32, %c0_i32_0 : i32, i32
  }
  func.func @transform_2(%arg0: i32) -> (i32, i32) {
    %c0_i32 = arith.constant 0 : i32
    %c0_i32_0 = arith.constant 0 : i32
    %c0_i32_1 = arith.constant 0 : i32
    return %c0_i32, %c0_i32_0 : i32, i32
  }
  func.func @transform_3(%arg0: i32) -> (i32, i32) {
    %c0_i32 = arith.constant 0 : i32
    %c0_i32_0 = arith.constant 0 : i32
    %c0_i32_1 = arith.constant 0 : i32
    return %c0_i32, %c0_i32_0 : i32, i32
  }
  func.func @transform_4(%arg0: i32) -> (i32, i32) {
    %c0_i32 = arith.constant 0 : i32
    %c0_i32_0 = arith.constant 0 : i32
    %c0_i32_1 = arith.constant 0 : i32
    return %c0_i32, %c0_i32_0 : i32, i32
  }
  func.func @transform_5(%arg0: i32) -> (i32, i32) {
    %c0_i32 = arith.constant 0 : i32
    %c0_i32_0 = arith.constant 0 : i32
    return %arg0, %c0_i32 : i32, i32
  }
}

</mosaic_0001>

<llo_original>
// kernel: neural_net_forward.1
$region0: #{neural_net_forward.1}
  #allocation0 [shape = 'u32[]', space=smem, size = 0x4, offset = 0x4, fixed_abs, tag = 'smem constant byte address 0x4 - core index']
  #allocation1 [shape = 'u32[144,128]{1,0:T(1,128)}', space=vmem, size = 0x12000, scoped, tag = 'internal scratch']
  %s0 = inlined_call_operand.hbm [shape: f32[4,2883], index: 0, kind: input, shape index: {}]
  %s1 = inlined_call_operand.hbm [shape: bf16[2883,384], index: 1, kind: input, shape index: {}]
  %s2 = inlined_call_operand.hbm [shape: f32[1,384], index: 2, kind: input, shape index: {}]
  %s3 = inlined_call_operand.hbm [shape: bf16[384,128], index: 3, kind: input, shape index: {}]
  %s4 = inlined_call_operand.hbm [shape: f32[1,128], index: 4, kind: input, shape index: {}]
  %s5 = inlined_call_operand.vmem [shape: bf16[4,128], index: 5, kind: output, shape index: {}]
  %s6 = sld [smem:[#allocation0]]
  $region50: #{neural_net_forward.1} parent=0
    _
  %s8 = ssub.s32 1, %s6
  %s9 = scalar_select 0, %s8, %s6
  $region1: #{neural_net_forward.1} parent=0
    #allocation2 [shape = 'u8[47104]{0}', space=vmem, size = 0xb800, scoped, tag = 'input window, operand 0, single buffered']
    #allocation3 [shape = 's32[1]{0}', space=sflag, size = 0x4, scoped, tag = 'scoped memory for neural_net_forward.1']
    #allocation4 [shape = 'u8[2217984]{0}', space=vmem, size = 0x21d800, scoped, tag = 'input window, operand 1, single buffered']
    #allocation5 [shape = 's32[1]{0}', space=sflag, size = 0x4, scoped, tag = 'scoped memory for neural_net_forward.1']
    #allocation6 [shape = 'u8[1536]{0}', space=vmem, size = 0x800, scoped, tag = 'input window, operand 2, single buffered']
    #allocation7 [shape = 'u8[98304]{0}', space=vmem, size = 0x18000, scoped, tag = 'input window, operand 3, single buffered']
    #allocation8 [shape = 's32[1]{0}', space=sflag, size = 0x4, scoped, tag = 'scoped memory for neural_net_forward.1']
    #allocation9 [shape = 'u8[512]{0}', space=vmem, size = 0x400, scoped, tag = 'input window, operand 4, single buffered']
    %10 = vsyncpa [#allocation3], 0
    %11 = vsyncpa [#allocation5], 0
    %12 = vsyncpa [#allocation8], 0
    // Predicated region
    $region2: #{neural_net_forward.1} parent=1 // pred_check
      _
    $region3: #{neural_net_forward.1} parent=1 // pred_check_branch
      %14 = sbr.rel (0) target = $region5
    $region4: #{neural_net_forward.1} parent=1 // pred_region
      %s16 = ssub.s32 1472, 1472
      %17 = vsyncadd [#allocation3], %s16
      %s19 = sshll.u32 [#allocation2], 4
      %s20 = int_to_ptr.vmem [resolvable:$true] %s19
      %22 = dma.hbm_to_vmem [thread:$0]  %s0, 1472, %s20, [#allocation3]
    $region5: #{neural_net_forward.1} parent=1 // pred_fallthru
      _
    // Predicated region
    $region6: #{neural_net_forward.1} parent=1 // pred_check
      _
    $region7: #{neural_net_forward.1} parent=1 // pred_check_branch
      %24 = sbr.rel (0) target = $region9
    $region8: #{neural_net_forward.1} parent=1 // pred_region
      %s26 = ssub.s32 69312, 69312
      %27 = vsyncadd [#allocation5], %s26
      %s28 = sshll.u32 [#allocation4], 4
      %s29 = int_to_ptr.vmem [resolvable:$true] %s28
      %34 = dma.hbm_to_vmem [thread:$0]  %s1, 69312, %s29, [#allocation5], 192, 192, 12
    $region9: #{neural_net_forward.1} parent=1 // pred_fallthru
      _
    // Predicated region
    $region10: #{neural_net_forward.1} parent=1 // pred_check
      _
    $region11: #{neural_net_forward.1} parent=1 // pred_check_branch
      %36 = sbr.rel (0) target = $region13
    $region12: #{neural_net_forward.1} parent=1 // pred_region
      %s38 = ssub.s32 48, 48
      %39 = vsyncadd [#allocation5], %s38
      %s41 = sshll.u32 [#allocation6], 4
      %s42 = int_to_ptr.vmem [resolvable:$true] %s41
      %44 = dma.hbm_to_vmem [thread:$0]  %s2, 48, %s42, [#allocation5]
    $region13: #{neural_net_forward.1} parent=1 // pred_fallthru
      _
    // Predicated region
    $region14: #{neural_net_forward.1} parent=1 // pred_check
      _
    $region15: #{neural_net_forward.1} parent=1 // pred_check_branch
      %46 = sbr.rel (0) target = $region17
    $region16: #{neural_net_forward.1} parent=1 // pred_region
      %s48 = ssub.s32 3072, 3072
      %49 = vsyncadd [#allocation8], %s48
      %s50 = sshll.u32 [#allocation7], 4
      %s51 = int_to_ptr.vmem [resolvable:$true] %s50
      %56 = dma.hbm_to_vmem [thread:$0]  %s3, 3072, %s51, [#allocation8], 64, 64, 4
    $region17: #{neural_net_forward.1} parent=1 // pred_fallthru
      _
    // Predicated region
    $region18: #{neural_net_forward.1} parent=1 // pred_check
      _
    $region19: #{neural_net_forward.1} parent=1 // pred_check_branch
      %58 = sbr.rel (0) target = $region21
    $region20: #{neural_net_forward.1} parent=1 // pred_region
      %s60 = ssub.s32 16, 16
      %61 = vsyncadd [#allocation8], %s60
      %s63 = sshll.u32 [#allocation9], 4
      %s64 = int_to_ptr.vmem [resolvable:$true] %s63
      %66 = dma.hbm_to_vmem [thread:$0]  %s4, 16, %s64, [#allocation8]
    $region21: #{neural_net_forward.1} parent=1 // pred_fallthru
      _
    // Predicated region
    $region22: #{neural_net_forward.1} parent=1 // pred_check
      _
    $region23: #{neural_net_forward.1} parent=1 // pred_check_branch
      %68 = sbr.rel (0) target = $region25
    $region24: #{neural_net_forward.1} parent=1 // pred_region
      %69 = dma.done [#allocation3], 1472
    $region25: #{neural_net_forward.1} parent=1 // pred_fallthru
      _
    // Predicated region
    $region26: #{neural_net_forward.1} parent=1 // pred_check
      _
    $region27: #{neural_net_forward.1} parent=1 // pred_check_branch
      %71 = sbr.rel (0) target = $region29
    $region28: #{neural_net_forward.1} parent=1 // pred_region
      %72 = dma.done [#allocation5], 69312
    $region29: #{neural_net_forward.1} parent=1 // pred_fallthru
      _
    // Predicated region
    $region30: #{neural_net_forward.1} parent=1 // pred_check
      _
    $region31: #{neural_net_forward.1} parent=1 // pred_check_branch
      %74 = sbr.rel (0) target = $region33
    $region32: #{neural_net_forward.1} parent=1 // pred_region
      %75 = dma.done [#allocation5], 48
    $region33: #{neural_net_forward.1} parent=1 // pred_fallthru
      _
    // Predicated region
    $region34: #{neural_net_forward.1} parent=1 // pred_check
      _
    $region35: #{neural_net_forward.1} parent=1 // pred_check_branch
      %77 = sbr.rel (0) target = $region37
    $region36: #{neural_net_forward.1} parent=1 // pred_region
      %78 = dma.done [#allocation8], 3072
    $region37: #{neural_net_forward.1} parent=1 // pred_fallthru
      _
    // Predicated region
    $region38: #{neural_net_forward.1} parent=1 // pred_check
      _
    $region39: #{neural_net_forward.1} parent=1 // pred_check_branch
      %80 = sbr.rel (0) target = $region41
    $region40: #{neural_net_forward.1} parent=1 // pred_region
      %81 = dma.done [#allocation8], 16
    $region41: #{neural_net_forward.1} parent=1 // pred_fallthru
      _
    %v83 = vld [vmem:[#allocation2] sm:$0xff]
    %v84 = vld [vmem:[#allocation2 + $0x8] sm:$0xff]
    %v85 = vld [vmem:[#allocation2 + $0x10] sm:$0xff]
    %v86 = vld [vmem:[#allocation2 + $0x18] sm:$0xff]
    %v87 = vld [vmem:[#allocation2 + $0x20] sm:$0xff]
    %v88 = vld [vmem:[#allocation2 + $0x28] sm:$0xff]
    %v89 = vld [vmem:[#allocation2 + $0x30] sm:$0xff]
    %v90 = vld [vmem:[#allocation2 + $0x38] sm:$0xff]
    %v91 = vld [vmem:[#allocation2 + $0x40] sm:$0xff]
    %v92 = vld [vmem:[#allocation2 + $0x48] sm:$0xff]
    %v93 = vld [vmem:[#allocation2 + $0x50] sm:$0xff]
    %v94 = vld [vmem:[#allocation2 + $0x58] sm:$0xf]
    %v106 = vcombine.high %v83, %v83
    %v107 = vcombine.high %v84, %v84
    %v108 = vcombine.high %v85, %v85
    %v109 = vcombine.high %v86, %v86
    %v110 = vcombine.high %v87, %v87
    %v111 = vcombine.high %v88, %v88
    %v112 = vcombine.high %v89, %v89
    %v113 = vcombine.high %v90, %v90
    %v114 = vcombine.high %v91, %v91
    %v115 = vcombine.high %v92, %v92
    %v116 = vcombine.high %v93, %v93
    %v128 = vpack.c.bf16 %v83, %v83
    %v129 = vpack.c.bf16 %v106, %v106
    %v130 = vpack.c.bf16 %v84, %v84
    %v131 = vpack.c.bf16 %v107, %v107
    %v132 = vpack.c.bf16 %v85, %v85
    %v133 = vpack.c.bf16 %v108, %v108
    %v134 = vpack.c.bf16 %v86, %v86
    %v135 = vpack.c.bf16 %v109, %v109
    %v136 = vpack.c.bf16 %v87, %v87
    %v137 = vpack.c.bf16 %v110, %v110
    %v138 = vpack.c.bf16 %v88, %v88
    %v139 = vpack.c.bf16 %v111, %v111
    %v140 = vpack.c.bf16 %v89, %v89
    %v141 = vpack.c.bf16 %v112, %v112
    %v142 = vpack.c.bf16 %v90, %v90
    %v143 = vpack.c.bf16 %v113, %v113
    %v144 = vpack.c.bf16 %v91, %v91
    %v145 = vpack.c.bf16 %v114, %v114
    %v146 = vpack.c.bf16 %v92, %v92
    %v147 = vpack.c.bf16 %v115, %v115
    %v148 = vpack.c.bf16 %v93, %v93
    %v149 = vpack.c.bf16 %v116, %v116
    %v150 = vpack.c.bf16 %v94, %v94
    %v151 = vld [vmem:[#allocation4] sm:$0xff]
    %v152 = vld [vmem:[#allocation4 + $0x8] sm:$0xf]
    %v153 = vld [vmem:[#allocation4 + $0xc] sm:$0xff]
    %v154 = vld [vmem:[#allocation4 + $0x14] sm:$0xf]
    %v155 = vld [vmem:[#allocation4 + $0x18] sm:$0xff]
    %v156 = vld [vmem:[#allocation4 + $0x20] sm:$0xf]
    %v157 = vld [vmem:[#allocation4 + $0x24] sm:$0xff]
    %v158 = vld [vmem:[#allocation4 + $0x2c] sm:$0xf]
    %v159 = vld [vmem:[#allocation4 + $0x30] sm:$0xff]
    %v160 = vld [vmem:[#allocation4 + $0x38] sm:$0xf]
    %v161 = vld [vmem:[#allocation4 + $0x3c] sm:$0xff]
    %v162 = vld [vmem:[#allocation4 + $0x44] sm:$0xf]
    %v163 = vld [vmem:[#allocation4 + $0x48] sm:$0xff]
    %v164 = vld [vmem:[#allocation4 + $0x50] sm:$0xf]
    %v165 = vld [vmem:[#allocation4 + $0x54] sm:$0xff]
    %v166 = vld [vmem:[#allocation4 + $0x5c] sm:$0xf]
    %v167 = vld [vmem:[#allocation4 + $0x60] sm:$0xff]
    %v168 = vld [vmem:[#allocation4 + $0x68] sm:$0xf]
    %v169 = vld [vmem:[#allocation4 + $0x6c] sm:$0xff]
    %v170 = vld [vmem:[#allocation4 + $0x74] sm:$0xf]
    %v171 = vld [vmem:[#allocation4 + $0x78] sm:$0xff]
    %v172 = vld [vmem:[#allocation4 + $0x80] sm:$0xf]
    %v173 = vld [vmem:[#allocation4 + $0x84] sm:$0xff]
    %v174 = vld [vmem:[#allocation4 + $0x8c] sm:$0xf]
    %v175 = vld [vmem:[#allocation4 + $0x90] sm:$0xff]
    %v176 = vld [vmem:[#allocation4 + $0x98] sm:$0xf]
    %v177 = vld [vmem:[#allocation4 + $0x9c] sm:$0xff]
    %v178 = vld [vmem:[#allocation4 + $0xa4] sm:$0xf]
    %v179 = vld [vmem:[#allocation4 + $0xa8] sm:$0xff]
    %v180 = vld [vmem:[#allocation4 + $0xb0] sm:$0xf]
    %v181 = vld [vmem:[#allocation4 + $0xb4] sm:$0xff]
    %v182 = vld [vmem:[#allocation4 + $0xbc] sm:$0xf]
    %v183 = vld [vmem:[#allocation4 + $0xc0] sm:$0xff]
    %v184 = vld [vmem:[#allocation4 + $0xc8] sm:$0xf]
    %v185 = vld [vmem:[#allocation4 + $0xcc] sm:$0xff]
    %v186 = vld [vmem:[#allocation4 + $0xd4] sm:$0xf]
    %v187 = vld [vmem:[#allocation4 + $0xd8] sm:$0xff]
    %v188 = vld [vmem:[#allocation4 + $0xe0] sm:$0xf]
    %v189 = vld [vmem:[#allocation4 + $0xe4] sm:$0xff]
    %v190 = vld [vmem:[#allocation4 + $0xec] sm:$0xf]
    %v191 = vld [vmem:[#allocation4 + $0xf0] sm:$0xff]
    %v192 = vld [vmem:[#allocation4 + $0xf8] sm:$0xf]
    %v193 = vld [vmem:[#allocation4 + $0xfc] sm:$0xff]
    %v194 = vld [vmem:[#allocation4 + $0x104] sm:$0xf]
    %v195 = vld [vmem:[#allocation4 + $0x108] sm:$0xff]
    %v196 = vld [vmem:[#allocation4 + $0x110] sm:$0xf]
    %v197 = vld [vmem:[#allocation4 + $0x114] sm:$0xff]
    %v198 = vld [vmem:[#allocation4 + $0x11c] sm:$0xf]
    %v199 = vld [vmem:[#allocation4 + $0x120] sm:$0xff]
    %v200 = vld [vmem:[#allocation4 + $0x128] sm:$0xf]
    %v201 = vld [vmem:[#allocation4 + $0x12c] sm:$0xff]
    %v202 = vld [vmem:[#allocation4 + $0x134] sm:$0xf]
    %v203 = vld [vmem:[#allocation4 + $0x138] sm:$0xff]
    %v204 = vld [vmem:[#allocation4 + $0x140] sm:$0xf]
    %v205 = vld [vmem:[#allocation4 + $0x144] sm:$0xff]
    %v206 = vld [vmem:[#allocation4 + $0x14c] sm:$0xf]
    %v207 = vld [vmem:[#allocation4 + $0x150] sm:$0xff]
    %v208 = vld [vmem:[#allocation4 + $0x158] sm:$0xf]
    %v209 = vld [vmem:[#allocation4 + $0x15c] sm:$0xff]
    %v210 = vld [vmem:[#allocation4 + $0x164] sm:$0xf]
    %v211 = vld [vmem:[#allocation4 + $0x168] sm:$0xff]
    %v212 = vld [vmem:[#allocation4 + $0x170] sm:$0xf]
    %v213 = vld [vmem:[#allocation4 + $0x174] sm:$0xff]
    %v214 = vld [vmem:[#allocation4 + $0x17c] sm:$0xf]
    %v215 = vld [vmem:[#allocation4 + $0x180] sm:$0xff]
    %v216 = vld [vmem:[#allocation4 + $0x188] sm:$0xf]
    %v217 = vld [vmem:[#allocation4 + $0x18c] sm:$0xff]
    %v218 = vld [vmem:[#allocation4 + $0x194] sm:$0xf]
    %v219 = vld [vmem:[#allocation4 + $0x198] sm:$0xff]
    %v220 = vld [vmem:[#allocation4 + $0x1a0] sm:$0xf]
    %v221 = vld [vmem:[#allocation4 + $0x1a4] sm:$0xff]
    %v222 = vld [vmem:[#allocation4 + $0x1ac] sm:$0xf]
    %v223 = vld [vmem:[#allocation4 + $0x1b0] sm:$0xff]
    %v224 = vld [vmem:[#allocation4 + $0x1b8] sm:$0xf]
    %v225 = vld [vmem:[#allocation4 + $0x1bc] sm:$0xff]
    %v226 = vld [vmem:[#allocation4 + $0x1c4] sm:$0xf]
    %v227 = vld [vmem:[#allocation4 + $0x1c8] sm:$0xff]
    %v228 = vld [vmem:[#allocation4 + $0x1d0] sm:$0xf]
    %v229 = vld [vmem:[#allocation4 + $0x1d4] sm:$0xff]
    %v230 = vld [vmem:[#allocation4 + $0x1dc] sm:$0xf]
    %v231 = vld [vmem:[#allocation4 + $0x1e0] sm:$0xff]
    %v232 = vld [vmem:[#allocation4 + $0x1e8] sm:$0xf]
    %v233 = vld [vmem:[#allocation4 + $0x1ec] sm:$0xff]
    %v234 = vld [vmem:[#allocation4 + $0x1f4] sm:$0xf]
    %v235 = vld [vmem:[#allocation4 + $0x1f8] sm:$0xff]
    %v236 = vld [vmem:[#allocation4 + $0x200] sm:$0xf]
    %v237 = vld [vmem:[#allocation4 + $0x204] sm:$0xff]
    %v238 = vld [vmem:[#allocation4 + $0x20c] sm:$0xf]
    %v239 = vld [vmem:[#allocation4 + $0x210] sm:$0xff]
    %v240 = vld [vmem:[#allocation4 + $0x218] sm:$0xf]
    %v241 = vld [vmem:[#allocation4 + $0x21c] sm:$0xff]
    %v242 = vld [vmem:[#allocation4 + $0x224] sm:$0xf]
    %v243 = vld [vmem:[#allocation4 + $0x228] sm:$0xff]
    %v244 = vld [vmem:[#allocation4 + $0x230] sm:$0xf]
    %v245 = vld [vmem:[#allocation4 + $0x234] sm:$0xff]
    %v246 = vld [vmem:[#allocation4 + $0x23c] sm:$0xf]
    %v247 = vld [vmem:[#allocation4 + $0x240] sm:$0xff]
    %v248 = vld [vmem:[#allocation4 + $0x248] sm:$0xf]
    %v249 = vld [vmem:[#allocation4 + $0x24c] sm:$0xff]
    %v250 = vld [vmem:[#allocation4 + $0x254] sm:$0xf]
    %v251 = vld [vmem:[#allocation4 + $0x258] sm:$0xff]
    %v252 = vld [vmem:[#allocation4 + $0x260] sm:$0xf]
    %v253 = vld [vmem:[#allocation4 + $0x264] sm:$0xff]
    %v254 = vld [vmem:[#allocation4 + $0x26c] sm:$0xf]
    %v255 = vld [vmem:[#allocation4 + $0x270] sm:$0xff]
    %v256 = vld [vmem:[#allocation4 + $0x278] sm:$0xf]
    %v257 = vld [vmem:[#allocation4 + $0x27c] sm:$0xff]
    %v258 = vld [vmem:[#allocation4 + $0x284] sm:$0xf]
    %v259 = vld [vmem:[#allocation4 + $0x288] sm:$0xff]
    %v260 = vld [vmem:[#allocation4 + $0x290] sm:$0xf]
    %v261 = vld [vmem:[#allocation4 + $0x294] sm:$0xff]
    %v262 = vld [vmem:[#allocation4 + $0x29c] sm:$0xf]
    %v263 = vld [vmem:[#allocation4 + $0x2a0] sm:$0xff]
    %v264 = vld [vmem:[#allocation4 + $0x2a8] sm:$0xf]
    %v265 = vld [vmem:[#allocation4 + $0x2ac] sm:$0xff]
    %v266 = vld [vmem:[#allocation4 + $0x2b4] sm:$0xf]
    %v267 = vld [vmem:[#allocation4 + $0x2b8] sm:$0xff]
    %v268 = vld [vmem:[#allocation4 + $0x2c0] sm:$0xf]
    %v269 = vld [vmem:[#allocation4 + $0x2c4] sm:$0xff]
    %v270 = vld [vmem:[#allocation4 + $0x2cc] sm:$0xf]
    %v271 = vld [vmem:[#allocation4 + $0x2d0] sm:$0xff]
    %v272 = vld [vmem:[#allocation4 + $0x2d8] sm:$0xf]
    %v273 = vld [vmem:[#allocation4 + $0x2dc] sm:$0xff]
    %v274 = vld [vmem:[#allocation4 + $0x2e4] sm:$0xf]
    %v275 = vld [vmem:[#allocation4 + $0x2e8] sm:$0xff]
    %v276 = vld [vmem:[#allocation4 + $0x2f0] sm:$0xf]
    %v277 = vld [vmem:[#allocation4 + $0x2f4] sm:$0xff]
    %v278 = vld [vmem:[#allocation4 + $0x2fc] sm:$0xf]
    %v279 = vld [vmem:[#allocation4 + $0x300] sm:$0xff]
    %v280 = vld [vmem:[#allocation4 + $0x308] sm:$0xf]
    %v281 = vld [vmem:[#allocation4 + $0x30c] sm:$0xff]
    %v282 = vld [vmem:[#allocation4 + $0x314] sm:$0xf]
    %v283 = vld [vmem:[#allocation4 + $0x318] sm:$0xff]
    %v284 = vld [vmem:[#allocation4 + $0x320] sm:$0xf]
    %v285 = vld [vmem:[#allocation4 + $0x324] sm:$0xff]
    %v286 = vld [vmem:[#allocation4 + $0x32c] sm:$0xf]
    %v287 = vld [vmem:[#allocation4 + $0x330] sm:$0xff]
    %v288 = vld [vmem:[#allocation4 + $0x338] sm:$0xf]
    %v289 = vld [vmem:[#allocation4 + $0x33c] sm:$0xff]
    %v290 = vld [vmem:[#allocation4 + $0x344] sm:$0xf]
    %v291 = vld [vmem:[#allocation4 + $0x348] sm:$0xff]
    %v292 = vld [vmem:[#allocation4 + $0x350] sm:$0xf]
    %v293 = vld [vmem:[#allocation4 + $0x354] sm:$0xff]
    %v294 = vld [vmem:[#allocation4 + $0x35c] sm:$0xf]
    %v295 = vld [vmem:[#allocation4 + $0x360] sm:$0xff]
    %v296 = vld [vmem:[#allocation4 + $0x368] sm:$0xf]
    %v297 = vld [vmem:[#allocation4 + $0x36c] sm:$0xff]
    %v298 = vld [vmem:[#allocation4 + $0x374] sm:$0xf]
    %v299 = vld [vmem:[#allocation4 + $0x378] sm:$0xff]
    %v300 = vld [vmem:[#allocation4 + $0x380] sm:$0xf]
    %v301 = vld [vmem:[#allocation4 + $0x384] sm:$0xff]
    %v302 = vld [vmem:[#allocation4 + $0x38c] sm:$0xf]
    %v303 = vld [vmem:[#allocation4 + $0x390] sm:$0xff]
    %v304 = vld [vmem:[#allocation4 + $0x398] sm:$0xf]
    %v305 = vld [vmem:[#allocation4 + $0x39c] sm:$0xff]
    %v306 = vld [vmem:[#allocation4 + $0x3a4] sm:$0xf]
    %v307 = vld [vmem:[#allocation4 + $0x3a8] sm:$0xff]
    %v308 = vld [vmem:[#allocation4 + $0x3b0] sm:$0xf]
    %v309 = vld [vmem:[#allocation4 + $0x3b4] sm:$0xff]
    %v310 = vld [vmem:[#allocation4 + $0x3bc] sm:$0xf]
    %v311 = vld [vmem:[#allocation4 + $0x3c0] sm:$0xff]
    %v312 = vld [vmem:[#allocation4 + $0x3c8] sm:$0xf]
    %v313 = vld [vmem:[#allocation4 + $0x3cc] sm:$0xff]
    %v314 = vld [vmem:[#allocation4 + $0x3d4] sm:$0xf]
    %v315 = vld [vmem:[#allocation4 + $0x3d8] sm:$0xff]
    %v316 = vld [vmem:[#allocation4 + $0x3e0] sm:$0xf]
    %v317 = vld [vmem:[#allocation4 + $0x3e4] sm:$0xff]
    %v318 = vld [vmem:[#allocation4 + $0x3ec] sm:$0xf]
    %v319 = vld [vmem:[#allocation4 + $0x3f0] sm:$0xff]
    %v320 = vld [vmem:[#allocation4 + $0x3f8] sm:$0xf]
    %v321 = vld [vmem:[#allocation4 + $0x3fc] sm:$0xff]
    %v322 = vld [vmem:[#allocation4 + $0x404] sm:$0xf]
    %v323 = vld [vmem:[#allocation4 + $0x408] sm:$0xff]
    %v324 = vld [vmem:[#allocation4 + $0x410] sm:$0xf]
    %v325 = vld [vmem:[#allocation4 + $0x414] sm:$0xff]
    %v326 = vld [vmem:[#allocation4 + $0x41c] sm:$0xf]
    %v327 = vld [vmem:[#allocation4 + $0x420] sm:$0xff]
    %v328 = vld [vmem:[#allocation4 + $0x428] sm:$0xf]
    %v329 = vld [vmem:[#allocation4 + $0x42c] sm:$0xff]
    %v330 = vld [vmem:[#allocation4 + $0x434] sm:$0xf]
    %v331 = vld [vmem:[#allocation4 + $0x438] sm:$0xff]
    %v332 = vld [vmem:[#allocation4 + $0x440] sm:$0xf]
    %v333 = vld [vmem:[#allocation4 + $0x444] sm:$0xff]
    %v334 = vld [vmem:[#allocation4 + $0x44c] sm:$0xf]
    %v335 = vld [vmem:[#allocation4 + $0x450] sm:$0xff]
    %v336 = vld [vmem:[#allocation4 + $0x458] sm:$0xf]
    %v337 = vld [vmem:[#allocation4 + $0x45c] sm:$0xff]
    %v338 = vld [vmem:[#allocation4 + $0x464] sm:$0xf]
    %v339 = vld [vmem:[#allocation4 + $0x468] sm:$0xff]
    %v340 = vld [vmem:[#allocation4 + $0x470] sm:$0xf]
    %v341 = vld [vmem:[#allocation4 + $0x474] sm:$0xff]
    %v342 = vld [vmem:[#allocation4 + $0x47c] sm:$0xf]
    %v343 = vld [vmem:[#allocation4 + $0x480] sm:$0xff]
    %v344 = vld [vmem:[#allocation4 + $0x488] sm:$0xf]
    %v345 = vld [vmem:[#allocation4 + $0x48c] sm:$0xff]
    %v346 = vld [vmem:[#allocation4 + $0x494] sm:$0xf]
    %v347 = vld [vmem:[#allocation4 + $0x498] sm:$0xff]
    %v348 = vld [vmem:[#allocation4 + $0x4a0] sm:$0xf]
    %v349 = vld [vmem:[#allocation4 + $0x4a4] sm:$0xff]
    %v350 = vld [vmem:[#allocation4 + $0x4ac] sm:$0xf]
    %v351 = vld [vmem:[#allocation4 + $0x4b0] sm:$0xff]
    %v352 = vld [vmem:[#allocation4 + $0x4b8] sm:$0xf]
    %v353 = vld [vmem:[#allocation4 + $0x4bc] sm:$0xff]
    %v354 = vld [vmem:[#allocation4 + $0x4c4] sm:$0xf]
    %v355 = vld [vmem:[#allocation4 + $0x4c8] sm:$0xff]
    %v356 = vld [vmem:[#allocation4 + $0x4d0] sm:$0xf]
    %v357 = vld [vmem:[#allocation4 + $0x4d4] sm:$0xff]
    %v358 = vld [vmem:[#allocation4 + $0x4dc] sm:$0xf]
    %v359 = vld [vmem:[#allocation4 + $0x4e0] sm:$0xff]
    %v360 = vld [vmem:[#allocation4 + $0x4e8] sm:$0xf]
    %v361 = vld [vmem:[#allocation4 + $0x4ec] sm:$0xff]
    %v362 = vld [vmem:[#allocation4 + $0x4f4] sm:$0xf]
    %v363 = vld [vmem:[#allocation4 + $0x4f8] sm:$0xff]
    %v364 = vld [vmem:[#allocation4 + $0x500] sm:$0xf]
    %v365 = vld [vmem:[#allocation4 + $0x504] sm:$0xff]
    %v366 = vld [vmem:[#allocation4 + $0x50c] sm:$0xf]
    %v367 = vld [vmem:[#allocation4 + $0x510] sm:$0xff]
    %v368 = vld [vmem:[#allocation4 + $0x518] sm:$0xf]
    %v369 = vld [vmem:[#allocation4 + $0x51c] sm:$0xff]
    %v370 = vld [vmem:[#allocation4 + $0x524] sm:$0xf]
    %v371 = vld [vmem:[#allocation4 + $0x528] sm:$0xff]
    %v372 = vld [vmem:[#allocation4 + $0x530] sm:$0xf]
    %v373 = vld [vmem:[#allocation4 + $0x534] sm:$0xff]
    %v374 = vld [vmem:[#allocation4 + $0x53c] sm:$0xf]
    %v375 = vld [vmem:[#allocation4 + $0x540] sm:$0xff]
    %v376 = vld [vmem:[#allocation4 + $0x548] sm:$0xf]
    %v377 = vld [vmem:[#allocation4 + $0x54c] sm:$0xff]
    %v378 = vld [vmem:[#allocation4 + $0x554] sm:$0xf]
    %v379 = vld [vmem:[#allocation4 + $0x558] sm:$0xff]
    %v380 = vld [vmem:[#allocation4 + $0x560] sm:$0xf]
    %v381 = vld [vmem:[#allocation4 + $0x564] sm:$0xff]
    %v382 = vld [vmem:[#allocation4 + $0x56c] sm:$0xf]
    %v383 = vld [vmem:[#allocation4 + $0x570] sm:$0xff]
    %v384 = vld [vmem:[#allocation4 + $0x578] sm:$0xf]
    %v385 = vld [vmem:[#allocation4 + $0x57c] sm:$0xff]
    %v386 = vld [vmem:[#allocation4 + $0x584] sm:$0xf]
    %v387 = vld [vmem:[#allocation4 + $0x588] sm:$0xff]
    %v388 = vld [vmem:[#allocation4 + $0x590] sm:$0xf]
    %v389 = vld [vmem:[#allocation4 + $0x594] sm:$0xff]
    %v390 = vld [vmem:[#allocation4 + $0x59c] sm:$0xf]
    %v391 = vld [vmem:[#allocation4 + $0x5a0] sm:$0xff]
    %v392 = vld [vmem:[#allocation4 + $0x5a8] sm:$0xf]
    %v393 = vld [vmem:[#allocation4 + $0x5ac] sm:$0xff]
    %v394 = vld [vmem:[#allocation4 + $0x5b4] sm:$0xf]
    %v395 = vld [vmem:[#allocation4 + $0x5b8] sm:$0xff]
    %v396 = vld [vmem:[#allocation4 + $0x5c0] sm:$0xf]
    %v397 = vld [vmem:[#allocation4 + $0x5c4] sm:$0xff]
    %v398 = vld [vmem:[#allocation4 + $0x5cc] sm:$0xf]
    %v399 = vld [vmem:[#allocation4 + $0x5d0] sm:$0xff]
    %v400 = vld [vmem:[#allocation4 + $0x5d8] sm:$0xf]
    %v401 = vld [vmem:[#allocation4 + $0x5dc] sm:$0xff]
    %v402 = vld [vmem:[#allocation4 + $0x5e4] sm:$0xf]
    %v403 = vld [vmem:[#allocation4 + $0x5e8] sm:$0xff]
    %v404 = vld [vmem:[#allocation4 + $0x5f0] sm:$0xf]
    %v405 = vld [vmem:[#allocation4 + $0x5f4] sm:$0xff]
    %v406 = vld [vmem:[#allocation4 + $0x5fc] sm:$0xf]
    %v407 = vld [vmem:[#allocation4 + $0x600] sm:$0xff]
    %v408 = vld [vmem:[#allocation4 + $0x608] sm:$0xf]
    %v409 = vld [vmem:[#allocation4 + $0x60c] sm:$0xff]
    %v410 = vld [vmem:[#allocation4 + $0x614] sm:$0xf]
    %v411 = vld [vmem:[#allocation4 + $0x618] sm:$0xff]
    %v412 = vld [vmem:[#allocation4 + $0x620] sm:$0xf]
    %v413 = vld [vmem:[#allocation4 + $0x624] sm:$0xff]
    %v414 = vld [vmem:[#allocation4 + $0x62c] sm:$0xf]
    %v415 = vld [vmem:[#allocation4 + $0x630] sm:$0xff]
    %v416 = vld [vmem:[#allocation4 + $0x638] sm:$0xf]
    %v417 = vld [vmem:[#allocation4 + $0x63c] sm:$0xff]
    %v418 = vld [vmem:[#allocation4 + $0x644] sm:$0xf]
    %v419 = vld [vmem:[#allocation4 + $0x648] sm:$0xff]
    %v420 = vld [vmem:[#allocation4 + $0x650] sm:$0xf]
    %v421 = vld [vmem:[#allocation4 + $0x654] sm:$0xff]
    %v422 = vld [vmem:[#allocation4 + $0x65c] sm:$0xf]
    %v423 = vld [vmem:[#allocation4 + $0x660] sm:$0xff]
    %v424 = vld [vmem:[#allocation4 + $0x668] sm:$0xf]
    %v425 = vld [vmem:[#allocation4 + $0x66c] sm:$0xff]
    %v426 = vld [vmem:[#allocation4 + $0x674] sm:$0xf]
    %v427 = vld [vmem:[#allocation4 + $0x678] sm:$0xff]
    %v428 = vld [vmem:[#allocation4 + $0x680] sm:$0xf]
    %v429 = vld [vmem:[#allocation4 + $0x684] sm:$0xff]
    %v430 = vld [vmem:[#allocation4 + $0x68c] sm:$0xf]
    %v431 = vld [vmem:[#allocation4 + $0x690] sm:$0xff]
    %v432 = vld [vmem:[#allocation4 + $0x698] sm:$0xf]
    %v433 = vld [vmem:[#allocation4 + $0x69c] sm:$0xff]
    %v434 = vld [vmem:[#allocation4 + $0x6a4] sm:$0xf]
    %v435 = vld [vmem:[#allocation4 + $0x6a8] sm:$0xff]
    %v436 = vld [vmem:[#allocation4 + $0x6b0] sm:$0xf]
    %v437 = vld [vmem:[#allocation4 + $0x6b4] sm:$0xff]
    %v438 = vld [vmem:[#allocation4 + $0x6bc] sm:$0xf]
    %v439 = vld [vmem:[#allocation4 + $0x6c0] sm:$0xff]
    %v440 = vld [vmem:[#allocation4 + $0x6c8] sm:$0xf]
    %v441 = vld [vmem:[#allocation4 + $0x6cc] sm:$0xff]
    %v442 = vld [vmem:[#allocation4 + $0x6d4] sm:$0xf]
    %v443 = vld [vmem:[#allocation4 + $0x6d8] sm:$0xff]
    %v444 = vld [vmem:[#allocation4 + $0x6e0] sm:$0xf]
    %v445 = vld [vmem:[#allocation4 + $0x6e4] sm:$0xff]
    %v446 = vld [vmem:[#allocation4 + $0x6ec] sm:$0xf]
    %v447 = vld [vmem:[#allocation4 + $0x6f0] sm:$0xff]
    %v448 = vld [vmem:[#allocation4 + $0x6f8] sm:$0xf]
    %v449 = vld [vmem:[#allocation4 + $0x6fc] sm:$0xff]
    %v450 = vld [vmem:[#allocation4 + $0x704] sm:$0xf]
    %v451 = vld [vmem:[#allocation4 + $0x708] sm:$0xff]
    %v452 = vld [vmem:[#allocation4 + $0x710] sm:$0xf]
    %v453 = vld [vmem:[#allocation4 + $0x714] sm:$0xff]
    %v454 = vld [vmem:[#allocation4 + $0x71c] sm:$0xf]
    %v455 = vld [vmem:[#allocation4 + $0x720] sm:$0xff]
    %v456 = vld [vmem:[#allocation4 + $0x728] sm:$0xf]
    %v457 = vld [vmem:[#allocation4 + $0x72c] sm:$0xff]
    %v458 = vld [vmem:[#allocation4 + $0x734] sm:$0xf]
    %v459 = vld [vmem:[#allocation4 + $0x738] sm:$0xff]
    %v460 = vld [vmem:[#allocation4 + $0x740] sm:$0xf]
    %v461 = vld [vmem:[#allocation4 + $0x744] sm:$0xff]
    %v462 = vld [vmem:[#allocation4 + $0x74c] sm:$0xf]
    %v463 = vld [vmem:[#allocation4 + $0x750] sm:$0xff]
    %v464 = vld [vmem:[#allocation4 + $0x758] sm:$0xf]
    %v465 = vld [vmem:[#allocation4 + $0x75c] sm:$0xff]
    %v466 = vld [vmem:[#allocation4 + $0x764] sm:$0xf]
    %v467 = vld [vmem:[#allocation4 + $0x768] sm:$0xff]
    %v468 = vld [vmem:[#allocation4 + $0x770] sm:$0xf]
    %v469 = vld [vmem:[#allocation4 + $0x774] sm:$0xff]
    %v470 = vld [vmem:[#allocation4 + $0x77c] sm:$0xf]
    %v471 = vld [vmem:[#allocation4 + $0x780] sm:$0xff]
    %v472 = vld [vmem:[#allocation4 + $0x788] sm:$0xf]
    %v473 = vld [vmem:[#allocation4 + $0x78c] sm:$0xff]
    %v474 = vld [vmem:[#allocation4 + $0x794] sm:$0xf]
    %v475 = vld [vmem:[#allocation4 + $0x798] sm:$0xff]
    %v476 = vld [vmem:[#allocation4 + $0x7a0] sm:$0xf]
    %v477 = vld [vmem:[#allocation4 + $0x7a4] sm:$0xff]
    %v478 = vld [vmem:[#allocation4 + $0x7ac] sm:$0xf]
    %v479 = vld [vmem:[#allocation4 + $0x7b0] sm:$0xff]
    %v480 = vld [vmem:[#allocation4 + $0x7b8] sm:$0xf]
    %v481 = vld [vmem:[#allocation4 + $0x7bc] sm:$0xff]
    %v482 = vld [vmem:[#allocation4 + $0x7c4] sm:$0xf]
    %v483 = vld [vmem:[#allocation4 + $0x7c8] sm:$0xff]
    %v484 = vld [vmem:[#allocation4 + $0x7d0] sm:$0xf]
    %v485 = vld [vmem:[#allocation4 + $0x7d4] sm:$0xff]
    %v486 = vld [vmem:[#allocation4 + $0x7dc] sm:$0xf]
    %v487 = vld [vmem:[#allocation4 + $0x7e0] sm:$0xff]
    %v488 = vld [vmem:[#allocation4 + $0x7e8] sm:$0xf]
    %v489 = vld [vmem:[#allocation4 + $0x7ec] sm:$0xff]
    %v490 = vld [vmem:[#allocation4 + $0x7f4] sm:$0xf]
    %v491 = vld [vmem:[#allocation4 + $0x7f8] sm:$0xff]
    %v492 = vld [vmem:[#allocation4 + $0x800] sm:$0xf]
    %v493 = vld [vmem:[#allocation4 + $0x804] sm:$0xff]
    %v494 = vld [vmem:[#allocation4 + $0x80c] sm:$0xf]
    %v495 = vld [vmem:[#allocation4 + $0x810] sm:$0xff]
    %v496 = vld [vmem:[#allocation4 + $0x818] sm:$0xf]
    %v497 = vld [vmem:[#allocation4 + $0x81c] sm:$0xff]
    %v498 = vld [vmem:[#allocation4 + $0x824] sm:$0xf]
    %v499 = vld [vmem:[#allocation4 + $0x828] sm:$0xff]
    %v500 = vld [vmem:[#allocation4 + $0x830] sm:$0xf]
    %v501 = vld [vmem:[#allocation4 + $0x834] sm:$0xff]
    %v502 = vld [vmem:[#allocation4 + $0x83c] sm:$0xf]
    %v503 = vld [vmem:[#allocation4 + $0x840] sm:$0xff]
    %v504 = vld [vmem:[#allocation4 + $0x848] sm:$0xf]
    %v505 = vld [vmem:[#allocation4 + $0x84c] sm:$0xff]
    %v506 = vld [vmem:[#allocation4 + $0x854] sm:$0xf]
    %v507 = vld [vmem:[#allocation4 + $0x858] sm:$0xff]
    %v508 = vld [vmem:[#allocation4 + $0x860] sm:$0xf]
    %v509 = vld [vmem:[#allocation4 + $0x864] sm:$0xff]
    %v510 = vld [vmem:[#allocation4 + $0x86c] sm:$0xf]
    %v511 = vld [vmem:[#allocation4 + $0x870] sm:$0xff]
    %v512 = vld [vmem:[#allocation4 + $0x878] sm:$0xf]
    %v513 = vld [vmem:[#allocation4 + $0x87c] sm:$0xff]
    %v514 = vld [vmem:[#allocation4 + $0x884] sm:$0xf]
    %v515 = vld [vmem:[#allocation4 + $0x888] sm:$0xff]
    %v516 = vld [vmem:[#allocation4 + $0x890] sm:$0xf]
    %v517 = vld [vmem:[#allocation4 + $0x894] sm:$0xff]
    %v518 = vld [vmem:[#allocation4 + $0x89c] sm:$0xf]
    %v519 = vld [vmem:[#allocation4 + $0x8a0] sm:$0xff]
    %v520 = vld [vmem:[#allocation4 + $0x8a8] sm:$0xf]
    %v521 = vld [vmem:[#allocation4 + $0x8ac] sm:$0xff]
    %v522 = vld [vmem:[#allocation4 + $0x8b4] sm:$0xf]
    %v523 = vld [vmem:[#allocation4 + $0x8b8] sm:$0xff]
    %v524 = vld [vmem:[#allocation4 + $0x8c0] sm:$0xf]
    %v525 = vld [vmem:[#allocation4 + $0x8c4] sm:$0xff]
    %v526 = vld [vmem:[#allocation4 + $0x8cc] sm:$0xf]
    %v527 = vld [vmem:[#allocation4 + $0x8d0] sm:$0xff]
    %v528 = vld [vmem:[#allocation4 + $0x8d8] sm:$0xf]
    %v529 = vld [vmem:[#allocation4 + $0x8dc] sm:$0xff]
    %v530 = vld [vmem:[#allocation4 + $0x8e4] sm:$0xf]
    %v531 = vld [vmem:[#allocation4 + $0x8e8] sm:$0xff]
    %v532 = vld [vmem:[#allocation4 + $0x8f0] sm:$0xf]
    %v533 = vld [vmem:[#allocation4 + $0x8f4] sm:$0xff]
    %v534 = vld [vmem:[#allocation4 + $0x8fc] sm:$0xf]
    %v535 = vld [vmem:[#allocation4 + $0x900] sm:$0xff]
    %v536 = vld [vmem:[#allocation4 + $0x908] sm:$0xf]
    %v537 = vld [vmem:[#allocation4 + $0x90c] sm:$0xff]
    %v538 = vld [vmem:[#allocation4 + $0x914] sm:$0xf]
    %v539 = vld [vmem:[#allocation4 + $0x918] sm:$0xff]
    %v540 = vld [vmem:[#allocation4 + $0x920] sm:$0xf]
    %v541 = vld [vmem:[#allocation4 + $0x924] sm:$0xff]
    %v542 = vld [vmem:[#allocation4 + $0x92c] sm:$0xf]
    %v543 = vld [vmem:[#allocation4 + $0x930] sm:$0xff]
    %v544 = vld [vmem:[#allocation4 + $0x938] sm:$0xf]
    %v545 = vld [vmem:[#allocation4 + $0x93c] sm:$0xff]
    %v546 = vld [vmem:[#allocation4 + $0x944] sm:$0xf]
    %v547 = vld [vmem:[#allocation4 + $0x948] sm:$0xff]
    %v548 = vld [vmem:[#allocation4 + $0x950] sm:$0xf]
    %v549 = vld [vmem:[#allocation4 + $0x954] sm:$0xff]
    %v550 = vld [vmem:[#allocation4 + $0x95c] sm:$0xf]
    %v551 = vld [vmem:[#allocation4 + $0x960] sm:$0xff]
    %v552 = vld [vmem:[#allocation4 + $0x968] sm:$0xf]
    %v553 = vld [vmem:[#allocation4 + $0x96c] sm:$0xff]
    %v554 = vld [vmem:[#allocation4 + $0x974] sm:$0xf]
    %v555 = vld [vmem:[#allocation4 + $0x978] sm:$0xff]
    %v556 = vld [vmem:[#allocation4 + $0x980] sm:$0xf]
    %v557 = vld [vmem:[#allocation4 + $0x984] sm:$0xff]
    %v558 = vld [vmem:[#allocation4 + $0x98c] sm:$0xf]
    %v559 = vld [vmem:[#allocation4 + $0x990] sm:$0xff]
    %v560 = vld [vmem:[#allocation4 + $0x998] sm:$0xf]
    %v561 = vld [vmem:[#allocation4 + $0x99c] sm:$0xff]
    %v562 = vld [vmem:[#allocation4 + $0x9a4] sm:$0xf]
    %v563 = vld [vmem:[#allocation4 + $0x9a8] sm:$0xff]
    %v564 = vld [vmem:[#allocation4 + $0x9b0] sm:$0xf]
    %v565 = vld [vmem:[#allocation4 + $0x9b4] sm:$0xff]
    %v566 = vld [vmem:[#allocation4 + $0x9bc] sm:$0xf]
    %v567 = vld [vmem:[#allocation4 + $0x9c0] sm:$0xff]
    %v568 = vld [vmem:[#allocation4 + $0x9c8] sm:$0xf]
    %v569 = vld [vmem:[#allocation4 + $0x9cc] sm:$0xff]
    %v570 = vld [vmem:[#allocation4 + $0x9d4] sm:$0xf]
    %v571 = vld [vmem:[#allocation4 + $0x9d8] sm:$0xff]
    %v572 = vld [vmem:[#allocation4 + $0x9e0] sm:$0xf]
    %v573 = vld [vmem:[#allocation4 + $0x9e4] sm:$0xff]
    %v574 = vld [vmem:[#allocation4 + $0x9ec] sm:$0xf]
    %v575 = vld [vmem:[#allocation4 + $0x9f0] sm:$0xff]
    %v576 = vld [vmem:[#allocation4 + $0x9f8] sm:$0xf]
    %v577 = vld [vmem:[#allocation4 + $0x9fc] sm:$0xff]
    %v578 = vld [vmem:[#allocation4 + $0xa04] sm:$0xf]
    %v579 = vld [vmem:[#allocation4 + $0xa08] sm:$0xff]
    %v580 = vld [vmem:[#allocation4 + $0xa10] sm:$0xf]
    %v581 = vld [vmem:[#allocation4 + $0xa14] sm:$0xff]
    %v582 = vld [vmem:[#allocation4 + $0xa1c] sm:$0xf]
    %v583 = vld [vmem:[#allocation4 + $0xa20] sm:$0xff]
    %v584 = vld [vmem:[#allocation4 + $0xa28] sm:$0xf]
    %v585 = vld [vmem:[#allocation4 + $0xa2c] sm:$0xff]
    %v586 = vld [vmem:[#allocation4 + $0xa34] sm:$0xf]
    %v587 = vld [vmem:[#allocation4 + $0xa38] sm:$0xff]
    %v588 = vld [vmem:[#allocation4 + $0xa40] sm:$0xf]
    %v589 = vld [vmem:[#allocation4 + $0xa44] sm:$0xff]
    %v590 = vld [vmem:[#allocation4 + $0xa4c] sm:$0xf]
    %v591 = vld [vmem:[#allocation4 + $0xa50] sm:$0xff]
    %v592 = vld [vmem:[#allocation4 + $0xa58] sm:$0xf]
    %v593 = vld [vmem:[#allocation4 + $0xa5c] sm:$0xff]
    %v594 = vld [vmem:[#allocation4 + $0xa64] sm:$0xf]
    %v595 = vld [vmem:[#allocation4 + $0xa68] sm:$0xff]
    %v596 = vld [vmem:[#allocation4 + $0xa70] sm:$0xf]
    %v597 = vld [vmem:[#allocation4 + $0xa74] sm:$0xff]
    %v598 = vld [vmem:[#allocation4 + $0xa7c] sm:$0xf]
    %v599 = vld [vmem:[#allocation4 + $0xa80] sm:$0xff]
    %v600 = vld [vmem:[#allocation4 + $0xa88] sm:$0xf]
    %v601 = vld [vmem:[#allocation4 + $0xa8c] sm:$0xff]
    %v602 = vld [vmem:[#allocation4 + $0xa94] sm:$0xf]
    %v603 = vld [vmem:[#allocation4 + $0xa98] sm:$0xff]
    %v604 = vld [vmem:[#allocation4 + $0xaa0] sm:$0xf]
    %v605 = vld [vmem:[#allocation4 + $0xaa4] sm:$0xff]
    %v606 = vld [vmem:[#allocation4 + $0xaac] sm:$0xf]
    %v607 = vld [vmem:[#allocation4 + $0xab0] sm:$0xff]
    %v608 = vld [vmem:[#allocation4 + $0xab8] sm:$0xf]
    %v609 = vld [vmem:[#allocation4 + $0xabc] sm:$0xff]
    %v610 = vld [vmem:[#allocation4 + $0xac4] sm:$0xf]
    %v611 = vld [vmem:[#allocation4 + $0xac8] sm:$0xff]
    %v612 = vld [vmem:[#allocation4 + $0xad0] sm:$0xf]
    %v613 = vld [vmem:[#allocation4 + $0xad4] sm:$0xff]
    %v614 = vld [vmem:[#allocation4 + $0xadc] sm:$0xf]
    %v615 = vld [vmem:[#allocation4 + $0xae0] sm:$0xff]
    %v616 = vld [vmem:[#allocation4 + $0xae8] sm:$0xf]
    %v617 = vld [vmem:[#allocation4 + $0xaec] sm:$0xff]
    %v618 = vld [vmem:[#allocation4 + $0xaf4] sm:$0xf]
    %v619 = vld [vmem:[#allocation4 + $0xaf8] sm:$0xff]
    %v620 = vld [vmem:[#allocation4 + $0xb00] sm:$0xf]
    %v621 = vld [vmem:[#allocation4 + $0xb04] sm:$0xff]
    %v622 = vld [vmem:[#allocation4 + $0xb0c] sm:$0xf]
    %v623 = vld [vmem:[#allocation4 + $0xb10] sm:$0xff]
    %v624 = vld [vmem:[#allocation4 + $0xb18] sm:$0xf]
    %v625 = vld [vmem:[#allocation4 + $0xb1c] sm:$0xff]
    %v626 = vld [vmem:[#allocation4 + $0xb24] sm:$0xf]
    %v627 = vld [vmem:[#allocation4 + $0xb28] sm:$0xff]
    %v628 = vld [vmem:[#allocation4 + $0xb30] sm:$0xf]
    %v629 = vld [vmem:[#allocation4 + $0xb34] sm:$0xff]
    %v630 = vld [vmem:[#allocation4 + $0xb3c] sm:$0xf]
    %v631 = vld [vmem:[#allocation4 + $0xb40] sm:$0xff]
    %v632 = vld [vmem:[#allocation4 + $0xb48] sm:$0xf]
    %v633 = vld [vmem:[#allocation4 + $0xb4c] sm:$0xff]
    %v634 = vld [vmem:[#allocation4 + $0xb54] sm:$0xf]
    %v635 = vld [vmem:[#allocation4 + $0xb58] sm:$0xff]
    %v636 = vld [vmem:[#allocation4 + $0xb60] sm:$0xf]
    %v637 = vld [vmem:[#allocation4 + $0xb64] sm:$0xff]
    %v638 = vld [vmem:[#allocation4 + $0xb6c] sm:$0xf]
    %v639 = vld [vmem:[#allocation4 + $0xb70] sm:$0xff]
    %v640 = vld [vmem:[#allocation4 + $0xb78] sm:$0xf]
    %v641 = vld [vmem:[#allocation4 + $0xb7c] sm:$0xff]
    %v642 = vld [vmem:[#allocation4 + $0xb84] sm:$0xf]
    %v643 = vld [vmem:[#allocation4 + $0xb88] sm:$0xff]
    %v644 = vld [vmem:[#allocation4 + $0xb90] sm:$0xf]
    %v645 = vld [vmem:[#allocation4 + $0xb94] sm:$0xff]
    %v646 = vld [vmem:[#allocation4 + $0xb9c] sm:$0xf]
    %v647 = vld [vmem:[#allocation4 + $0xba0] sm:$0xff]
    %v648 = vld [vmem:[#allocation4 + $0xba8] sm:$0xf]
    %v649 = vld [vmem:[#allocation4 + $0xbac] sm:$0xff]
    %v650 = vld [vmem:[#allocation4 + $0xbb4] sm:$0xf]
    %v651 = vld [vmem:[#allocation4 + $0xbb8] sm:$0xff]
    %v652 = vld [vmem:[#allocation4 + $0xbc0] sm:$0xf]
    %v653 = vld [vmem:[#allocation4 + $0xbc4] sm:$0xff]
    %v654 = vld [vmem:[#allocation4 + $0xbcc] sm:$0xf]
    %v655 = vld [vmem:[#allocation4 + $0xbd0] sm:$0xff]
    %v656 = vld [vmem:[#allocation4 + $0xbd8] sm:$0xf]
    %v657 = vld [vmem:[#allocation4 + $0xbdc] sm:$0xff]
    %v658 = vld [vmem:[#allocation4 + $0xbe4] sm:$0xf]
    %v659 = vld [vmem:[#allocation4 + $0xbe8] sm:$0xff]
    %v660 = vld [vmem:[#allocation4 + $0xbf0] sm:$0xf]
    %v661 = vld [vmem:[#allocation4 + $0xbf4] sm:$0xff]
    %v662 = vld [vmem:[#allocation4 + $0xbfc] sm:$0xf]
    %v663 = vld [vmem:[#allocation4 + $0xc00] sm:$0xff]
    %v664 = vld [vmem:[#allocation4 + $0xc08] sm:$0xf]
    %v665 = vld [vmem:[#allocation4 + $0xc0c] sm:$0xff]
    %v666 = vld [vmem:[#allocation4 + $0xc14] sm:$0xf]
    %v667 = vld [vmem:[#allocation4 + $0xc18] sm:$0xff]
    %v668 = vld [vmem:[#allocation4 + $0xc20] sm:$0xf]
    %v669 = vld [vmem:[#allocation4 + $0xc24] sm:$0xff]
    %v670 = vld [vmem:[#allocation4 + $0xc2c] sm:$0xf]
    %v671 = vld [vmem:[#allocation4 + $0xc30] sm:$0xff]
    %v672 = vld [vmem:[#allocation4 + $0xc38] sm:$0xf]
    %v673 = vld [vmem:[#allocation4 + $0xc3c] sm:$0xff]
    %v674 = vld [vmem:[#allocation4 + $0xc44] sm:$0xf]
    %v675 = vld [vmem:[#allocation4 + $0xc48] sm:$0xff]
    %v676 = vld [vmem:[#allocation4 + $0xc50] sm:$0xf]
    %v677 = vld [vmem:[#allocation4 + $0xc54] sm:$0xff]
    %v678 = vld [vmem:[#allocation4 + $0xc5c] sm:$0xf]
    %v679 = vld [vmem:[#allocation4 + $0xc60] sm:$0xff]
    %v680 = vld [vmem:[#allocation4 + $0xc68] sm:$0xf]
    %v681 = vld [vmem:[#allocation4 + $0xc6c] sm:$0xff]
    %v682 = vld [vmem:[#allocation4 + $0xc74] sm:$0xf]
    %v683 = vld [vmem:[#allocation4 + $0xc78] sm:$0xff]
    %v684 = vld [vmem:[#allocation4 + $0xc80] sm:$0xf]
    %v685 = vld [vmem:[#allocation4 + $0xc84] sm:$0xff]
    %v686 = vld [vmem:[#allocation4 + $0xc8c] sm:$0xf]
    %v687 = vld [vmem:[#allocation4 + $0xc90] sm:$0xff]
    %v688 = vld [vmem:[#allocation4 + $0xc98] sm:$0xf]
    %v689 = vld [vmem:[#allocation4 + $0xc9c] sm:$0xff]
    %v690 = vld [vmem:[#allocation4 + $0xca4] sm:$0xf]
    %v691 = vld [vmem:[#allocation4 + $0xca8] sm:$0xff]
    %v692 = vld [vmem:[#allocation4 + $0xcb0] sm:$0xf]
    %v693 = vld [vmem:[#allocation4 + $0xcb4] sm:$0xff]
    %v694 = vld [vmem:[#allocation4 + $0xcbc] sm:$0xf]
    %v695 = vld [vmem:[#allocation4 + $0xcc0] sm:$0xff]
    %v696 = vld [vmem:[#allocation4 + $0xcc8] sm:$0xf]
    %v697 = vld [vmem:[#allocation4 + $0xccc] sm:$0xff]
    %v698 = vld [vmem:[#allocation4 + $0xcd4] sm:$0xf]
    %v699 = vld [vmem:[#allocation4 + $0xcd8] sm:$0xff]
    %v700 = vld [vmem:[#allocation4 + $0xce0] sm:$0xf]
    %v701 = vld [vmem:[#allocation4 + $0xce4] sm:$0xff]
    %v702 = vld [vmem:[#allocation4 + $0xcec] sm:$0xf]
    %v703 = vld [vmem:[#allocation4 + $0xcf0] sm:$0xff]
    %v704 = vld [vmem:[#allocation4 + $0xcf8] sm:$0xf]
    %v705 = vld [vmem:[#allocation4 + $0xcfc] sm:$0xff]
    %v706 = vld [vmem:[#allocation4 + $0xd04] sm:$0xf]
    %v707 = vld [vmem:[#allocation4 + $0xd08] sm:$0xff]
    %v708 = vld [vmem:[#allocation4 + $0xd10] sm:$0xf]
    %v709 = vld [vmem:[#allocation4 + $0xd14] sm:$0xff]
    %v710 = vld [vmem:[#allocation4 + $0xd1c] sm:$0xf]
    %v711 = vld [vmem:[#allocation4 + $0xd20] sm:$0xff]
    %v712 = vld [vmem:[#allocation4 + $0xd28] sm:$0xf]
    %v713 = vld [vmem:[#allocation4 + $0xd2c] sm:$0xff]
    %v714 = vld [vmem:[#allocation4 + $0xd34] sm:$0xf]
    %v715 = vld [vmem:[#allocation4 + $0xd38] sm:$0xff]
    %v716 = vld [vmem:[#allocation4 + $0xd40] sm:$0xf]
    %v717 = vld [vmem:[#allocation4 + $0xd44] sm:$0xff]
    %v718 = vld [vmem:[#allocation4 + $0xd4c] sm:$0xf]
    %v719 = vld [vmem:[#allocation4 + $0xd50] sm:$0xff]
    %v720 = vld [vmem:[#allocation4 + $0xd58] sm:$0xf]
    %v721 = vld [vmem:[#allocation4 + $0xd5c] sm:$0xff]
    %v722 = vld [vmem:[#allocation4 + $0xd64] sm:$0xf]
    %v723 = vld [vmem:[#allocation4 + $0xd68] sm:$0xff]
    %v724 = vld [vmem:[#allocation4 + $0xd70] sm:$0xf]
    %v725 = vld [vmem:[#allocation4 + $0xd74] sm:$0xff]
    %v726 = vld [vmem:[#allocation4 + $0xd7c] sm:$0xf]
    %v727 = vld [vmem:[#allocation4 + $0xd80] sm:$0xff]
    %v728 = vld [vmem:[#allocation4 + $0xd88] sm:$0xf]
    %v729 = vld [vmem:[#allocation4 + $0xd8c] sm:$0xff]
    %v730 = vld [vmem:[#allocation4 + $0xd94] sm:$0xf]
    %v731 = vld [vmem:[#allocation4 + $0xd98] sm:$0xff]
    %v732 = vld [vmem:[#allocation4 + $0xda0] sm:$0xf]
    %v733 = vld [vmem:[#allocation4 + $0xda4] sm:$0xff]
    %v734 = vld [vmem:[#allocation4 + $0xdac] sm:$0xf]
    %v735 = vld [vmem:[#allocation4 + $0xdb0] sm:$0xff]
    %v736 = vld [vmem:[#allocation4 + $0xdb8] sm:$0xf]
    %v737 = vld [vmem:[#allocation4 + $0xdbc] sm:$0xff]
    %v738 = vld [vmem:[#allocation4 + $0xdc4] sm:$0xf]
    %v739 = vld [vmem:[#allocation4 + $0xdc8] sm:$0xff]
    %v740 = vld [vmem:[#allocation4 + $0xdd0] sm:$0xf]
    %v741 = vld [vmem:[#allocation4 + $0xdd4] sm:$0xff]
    %v742 = vld [vmem:[#allocation4 + $0xddc] sm:$0xf]
    %v743 = vld [vmem:[#allocation4 + $0xde0] sm:$0xff]
    %v744 = vld [vmem:[#allocation4 + $0xde8] sm:$0xf]
    %v745 = vld [vmem:[#allocation4 + $0xdec] sm:$0xff]
    %v746 = vld [vmem:[#allocation4 + $0xdf4] sm:$0xf]
    %v747 = vld [vmem:[#allocation4 + $0xdf8] sm:$0xff]
    %v748 = vld [vmem:[#allocation4 + $0xe00] sm:$0xf]
    %v749 = vld [vmem:[#allocation4 + $0xe04] sm:$0xff]
    %v750 = vld [vmem:[#allocation4 + $0xe0c] sm:$0xf]
    %v751 = vld [vmem:[#allocation4 + $0xe10] sm:$0xff]
    %v752 = vld [vmem:[#allocation4 + $0xe18] sm:$0xf]
    %v753 = vld [vmem:[#allocation4 + $0xe1c] sm:$0xff]
    %v754 = vld [vmem:[#allocation4 + $0xe24] sm:$0xf]
    %v755 = vld [vmem:[#allocation4 + $0xe28] sm:$0xff]
    %v756 = vld [vmem:[#allocation4 + $0xe30] sm:$0xf]
    %v757 = vld [vmem:[#allocation4 + $0xe34] sm:$0xff]
    %v758 = vld [vmem:[#allocation4 + $0xe3c] sm:$0xf]
    %v759 = vld [vmem:[#allocation4 + $0xe40] sm:$0xff]
    %v760 = vld [vmem:[#allocation4 + $0xe48] sm:$0xf]
    %v761 = vld [vmem:[#allocation4 + $0xe4c] sm:$0xff]
    %v762 = vld [vmem:[#allocation4 + $0xe54] sm:$0xf]
    %v763 = vld [vmem:[#allocation4 + $0xe58] sm:$0xff]
    %v764 = vld [vmem:[#allocation4 + $0xe60] sm:$0xf]
    %v765 = vld [vmem:[#allocation4 + $0xe64] sm:$0xff]
    %v766 = vld [vmem:[#allocation4 + $0xe6c] sm:$0xf]
    %v767 = vld [vmem:[#allocation4 + $0xe70] sm:$0xff]
    %v768 = vld [vmem:[#allocation4 + $0xe78] sm:$0xf]
    %v769 = vld [vmem:[#allocation4 + $0xe7c] sm:$0xff]
    %v770 = vld [vmem:[#allocation4 + $0xe84] sm:$0xf]
    %v771 = vld [vmem:[#allocation4 + $0xe88] sm:$0xff]
    %v772 = vld [vmem:[#allocation4 + $0xe90] sm:$0xf]
    %v773 = vld [vmem:[#allocation4 + $0xe94] sm:$0xff]
    %v774 = vld [vmem:[#allocation4 + $0xe9c] sm:$0xf]
    %v775 = vld [vmem:[#allocation4 + $0xea0] sm:$0xff]
    %v776 = vld [vmem:[#allocation4 + $0xea8] sm:$0xf]
    %v777 = vld [vmem:[#allocation4 + $0xeac] sm:$0xff]
    %v778 = vld [vmem:[#allocation4 + $0xeb4] sm:$0xf]
    %v779 = vld [vmem:[#allocation4 + $0xeb8] sm:$0xff]
    %v780 = vld [vmem:[#allocation4 + $0xec0] sm:$0xf]
    %v781 = vld [vmem:[#allocation4 + $0xec4] sm:$0xff]
    %v782 = vld [vmem:[#allocation4 + $0xecc] sm:$0xf]
    %v783 = vld [vmem:[#allocation4 + $0xed0] sm:$0xff]
    %v784 = vld [vmem:[#allocation4 + $0xed8] sm:$0xf]
    %v785 = vld [vmem:[#allocation4 + $0xedc] sm:$0xff]
    %v786 = vld [vmem:[#allocation4 + $0xee4] sm:$0xf]
    %v787 = vld [vmem:[#allocation4 + $0xee8] sm:$0xff]
    %v788 = vld [vmem:[#allocation4 + $0xef0] sm:$0xf]
    %v789 = vld [vmem:[#allocation4 + $0xef4] sm:$0xff]
    %v790 = vld [vmem:[#allocation4 + $0xefc] sm:$0xf]
    %v791 = vld [vmem:[#allocation4 + $0xf00] sm:$0xff]
    %v792 = vld [vmem:[#allocation4 + $0xf08] sm:$0xf]
    %v793 = vld [vmem:[#allocation4 + $0xf0c] sm:$0xff]
    %v794 = vld [vmem:[#allocation4 + $0xf14] sm:$0xf]
    %v795 = vld [vmem:[#allocation4 + $0xf18] sm:$0xff]
    %v796 = vld [vmem:[#allocation4 + $0xf20] sm:$0xf]
    %v797 = vld [vmem:[#allocation4 + $0xf24] sm:$0xff]
    %v798 = vld [vmem:[#allocation4 + $0xf2c] sm:$0xf]
    %v799 = vld [vmem:[#allocation4 + $0xf30] sm:$0xff]
    %v800 = vld [vmem:[#allocation4 + $0xf38] sm:$0xf]
    %v801 = vld [vmem:[#allocation4 + $0xf3c] sm:$0xff]
    %v802 = vld [vmem:[#allocation4 + $0xf44] sm:$0xf]
    %v803 = vld [vmem:[#allocation4 + $0xf48] sm:$0xff]
    %v804 = vld [vmem:[#allocation4 + $0xf50] sm:$0xf]
    %v805 = vld [vmem:[#allocation4 + $0xf54] sm:$0xff]
    %v806 = vld [vmem:[#allocation4 + $0xf5c] sm:$0xf]
    %v807 = vld [vmem:[#allocation4 + $0xf60] sm:$0xff]
    %v808 = vld [vmem:[#allocation4 + $0xf68] sm:$0xf]
    %v809 = vld [vmem:[#allocation4 + $0xf6c] sm:$0xff]
    %v810 = vld [vmem:[#allocation4 + $0xf74] sm:$0xf]
    %v811 = vld [vmem:[#allocation4 + $0xf78] sm:$0xff]
    %v812 = vld [vmem:[#allocation4 + $0xf80] sm:$0xf]
    %v813 = vld [vmem:[#allocation4 + $0xf84] sm:$0xff]
    %v814 = vld [vmem:[#allocation4 + $0xf8c] sm:$0xf]
    %v815 = vld [vmem:[#allocation4 + $0xf90] sm:$0xff]
    %v816 = vld [vmem:[#allocation4 + $0xf98] sm:$0xf]
    %v817 = vld [vmem:[#allocation4 + $0xf9c] sm:$0xff]
    %v818 = vld [vmem:[#allocation4 + $0xfa4] sm:$0xf]
    %v819 = vld [vmem:[#allocation4 + $0xfa8] sm:$0xff]
    %v820 = vld [vmem:[#allocation4 + $0xfb0] sm:$0xf]
    %v821 = vld [vmem:[#allocation4 + $0xfb4] sm:$0xff]
    %v822 = vld [vmem:[#allocation4 + $0xfbc] sm:$0xf]
    %v823 = vld [vmem:[#allocation4 + $0xfc0] sm:$0xff]
    %v824 = vld [vmem:[#allocation4 + $0xfc8] sm:$0xf]
    %v825 = vld [vmem:[#allocation4 + $0xfcc] sm:$0xff]
    %v826 = vld [vmem:[#allocation4 + $0xfd4] sm:$0xf]
    %v827 = vld [vmem:[#allocation4 + $0xfd8] sm:$0xff]
    %v828 = vld [vmem:[#allocation4 + $0xfe0] sm:$0xf]
    %v829 = vld [vmem:[#allocation4 + $0xfe4] sm:$0xff]
    %v830 = vld [vmem:[#allocation4 + $0xfec] sm:$0xf]
    %v831 = vld [vmem:[#allocation4 + $0xff0] sm:$0xff]
    %v832 = vld [vmem:[#allocation4 + $0xff8] sm:$0xf]
    %v833 = vld [vmem:[#allocation4 + $0xffc] sm:$0xff]
    %v834 = vld [vmem:[#allocation4 + $0x1004] sm:$0xf]
    %v835 = vld [vmem:[#allocation4 + $0x1008] sm:$0xff]
    %v836 = vld [vmem:[#allocation4 + $0x1010] sm:$0xf]
    %v837 = vld [vmem:[#allocation4 + $0x1014] sm:$0xff]
    %v838 = vld [vmem:[#allocation4 + $0x101c] sm:$0xf]
    %v839 = vld [vmem:[#allocation4 + $0x1020] sm:$0xff]
    %v840 = vld [vmem:[#allocation4 + $0x1028] sm:$0xf]
    %v841 = vld [vmem:[#allocation4 + $0x102c] sm:$0xff]
    %v842 = vld [vmem:[#allocation4 + $0x1034] sm:$0xf]
    %v843 = vld [vmem:[#allocation4 + $0x1038] sm:$0xff]
    %v844 = vld [vmem:[#allocation4 + $0x1040] sm:$0xf]
    %v845 = vld [vmem:[#allocation4 + $0x1044] sm:$0xff]
    %v846 = vld [vmem:[#allocation4 + $0x104c] sm:$0xf]
    %v847 = vld [vmem:[#allocation4 + $0x1050] sm:$0xff]
    %v848 = vld [vmem:[#allocation4 + $0x1058] sm:$0xf]
    %v849 = vld [vmem:[#allocation4 + $0x105c] sm:$0xff]
    %v850 = vld [vmem:[#allocation4 + $0x1064] sm:$0xf]
    %v851 = vld [vmem:[#allocation4 + $0x1068] sm:$0xff]
    %v852 = vld [vmem:[#allocation4 + $0x1070] sm:$0xf]
    %v853 = vld [vmem:[#allocation4 + $0x1074] sm:$0xff]
    %v854 = vld [vmem:[#allocation4 + $0x107c] sm:$0xf]
    %v855 = vld [vmem:[#allocation4 + $0x1080] sm:$0xff]
    %v856 = vld [vmem:[#allocation4 + $0x1088] sm:$0xf]
    %v857 = vld [vmem:[#allocation4 + $0x108c] sm:$0xff]
    %v858 = vld [vmem:[#allocation4 + $0x1094] sm:$0xf]
    %v859 = vld [vmem:[#allocation4 + $0x1098] sm:$0xff]
    %v860 = vld [vmem:[#allocation4 + $0x10a0] sm:$0xf]
    %v861 = vld [vmem:[#allocation4 + $0x10a4] sm:$0xff]
    %v862 = vld [vmem:[#allocation4 + $0x10ac] sm:$0xf]
    %v863 = vld [vmem:[#allocation4 + $0x10b0] sm:$0xff]
    %v864 = vld [vmem:[#allocation4 + $0x10b8] sm:$0xf]
    %v865 = vld [vmem:[#allocation4 + $0x10bc] sm:$0xff]
    %v866 = vld [vmem:[#allocation4 + $0x10c4] sm:$0xf]
    %v867 = vld [vmem:[#allocation4 + $0x10c8] sm:$0xff]
    %v868 = vld [vmem:[#allocation4 + $0x10d0] sm:$0xf]
    %v869 = vld [vmem:[#allocation4 + $0x10d4] sm:$0xff]
    %v870 = vld [vmem:[#allocation4 + $0x10dc] sm:$0xf]
    %v871 = vld [vmem:[#allocation4 + $0x10e0] sm:$0x33]
    %v872 = vld [vmem:[#allocation4 + $0x10e8] sm:$0x3]
    %v873 = vld [vmem:[#allocation6] sm:$0x7]
    %v875 = vlaneseq
    %v876 = vshrl.u32 %v875, 7
    %v877 = vsub.s32 0, %v876
    %v878 = vrot.slane %v873, %v877
    %v879 = vlaneseq
    %v880 = vshrl.u32 %v879, 7
    %v881 = vsub.s32 1, %v880
    %v882 = vrot.slane %v873, %v881
    %v883 = vlaneseq
    %v884 = vshrl.u32 %v883, 7
    %v885 = vsub.s32 2, %v884
    %v886 = vrot.slane %v873, %v885
    %v1612 = vunpack.c.l.b16 %v151
    %v1613 = vunpack.c.h.b16 %v151
    %v1614 = vunpack.c.l.b16 %v152
    %v1615 = vunpack.c.l.b16 %v153
    %v1616 = vunpack.c.h.b16 %v153
    %v1617 = vunpack.c.l.b16 %v154
    %v1618 = vunpack.c.l.b16 %v155
    %v1619 = vunpack.c.h.b16 %v155
    %v1620 = vunpack.c.l.b16 %v156
    %v1621 = vunpack.c.l.b16 %v157
    %v1622 = vunpack.c.h.b16 %v157
    %v1623 = vunpack.c.l.b16 %v158
    %v1624 = vunpack.c.l.b16 %v159
    %v1625 = vunpack.c.h.b16 %v159
    %v1626 = vunpack.c.l.b16 %v160
    %v1627 = vunpack.c.l.b16 %v161
    %v1628 = vunpack.c.h.b16 %v161
    %v1629 = vunpack.c.l.b16 %v162
    %v1630 = vunpack.c.l.b16 %v163
    %v1631 = vunpack.c.h.b16 %v163
    %v1632 = vunpack.c.l.b16 %v164
    %v1633 = vunpack.c.l.b16 %v165
    %v1634 = vunpack.c.h.b16 %v165
    %v1635 = vunpack.c.l.b16 %v166
    %v1636 = vunpack.c.l.b16 %v167
    %v1637 = vunpack.c.h.b16 %v167
    %v1638 = vunpack.c.l.b16 %v168
    %v1639 = vunpack.c.l.b16 %v169
    %v1640 = vunpack.c.h.b16 %v169
    %v1641 = vunpack.c.l.b16 %v170
    %v1642 = vunpack.c.l.b16 %v171
    %v1643 = vunpack.c.h.b16 %v171
    %v1644 = vunpack.c.l.b16 %v172
    %v1645 = vunpack.c.l.b16 %v173
    %v1646 = vunpack.c.h.b16 %v173
    %v1647 = vunpack.c.l.b16 %v174
    %v1648 = vunpack.c.l.b16 %v175
    %v1649 = vunpack.c.h.b16 %v175
    %v1650 = vunpack.c.l.b16 %v176
    %v1651 = vunpack.c.l.b16 %v177
    %v1652 = vunpack.c.h.b16 %v177
    %v1653 = vunpack.c.l.b16 %v178
    %v1654 = vunpack.c.l.b16 %v179
    %v1655 = vunpack.c.h.b16 %v179
    %v1656 = vunpack.c.l.b16 %v180
    %v1657 = vunpack.c.l.b16 %v181
    %v1658 = vunpack.c.h.b16 %v181
    %v1659 = vunpack.c.l.b16 %v182
    %v1660 = vunpack.c.l.b16 %v183
    %v1661 = vunpack.c.h.b16 %v183
    %v1662 = vunpack.c.l.b16 %v184
    %v1663 = vunpack.c.l.b16 %v185
    %v1664 = vunpack.c.h.b16 %v185
    %v1665 = vunpack.c.l.b16 %v186
    %v1666 = vunpack.c.l.b16 %v187
    %v1667 = vunpack.c.h.b16 %v187
    %v1668 = vunpack.c.l.b16 %v188
    %v1669 = vunpack.c.l.b16 %v189
    %v1670 = vunpack.c.h.b16 %v189
    %v1671 = vunpack.c.l.b16 %v190
    %v1672 = vunpack.c.l.b16 %v191
    %v1673 = vunpack.c.h.b16 %v191
    %v1674 = vunpack.c.l.b16 %v192
    %v1675 = vunpack.c.l.b16 %v193
    %v1676 = vunpack.c.h.b16 %v193
    %v1677 = vunpack.c.l.b16 %v194
    %v1678 = vunpack.c.l.b16 %v195
    %v1679 = vunpack.c.h.b16 %v195
    %v1680 = vunpack.c.l.b16 %v196
    %v1681 = vunpack.c.l.b16 %v197
    %v1682 = vunpack.c.h.b16 %v197
    %v1683 = vunpack.c.l.b16 %v198
    %v1684 = vunpack.c.l.b16 %v199
    %v1685 = vunpack.c.h.b16 %v199
    %v1686 = vunpack.c.l.b16 %v200
    %v1687 = vunpack.c.l.b16 %v201
    %v1688 = vunpack.c.h.b16 %v201
    %v1689 = vunpack.c.l.b16 %v202
    %v1690 = vunpack.c.l.b16 %v203
    %v1691 = vunpack.c.h.b16 %v203
    %v1692 = vunpack.c.l.b16 %v204
    %v1693 = vunpack.c.l.b16 %v205
    %v1694 = vunpack.c.h.b16 %v205
    %v1695 = vunpack.c.l.b16 %v206
    %v1696 = vunpack.c.l.b16 %v207
    %v1697 = vunpack.c.h.b16 %v207
    %v1698 = vunpack.c.l.b16 %v208
    %v1699 = vunpack.c.l.b16 %v209
    %v1700 = vunpack.c.h.b16 %v209
    %v1701 = vunpack.c.l.b16 %v210
    %v1702 = vunpack.c.l.b16 %v211
    %v1703 = vunpack.c.h.b16 %v211
    %v1704 = vunpack.c.l.b16 %v212
    %v1705 = vunpack.c.l.b16 %v213
    %v1706 = vunpack.c.h.b16 %v213
    %v1707 = vunpack.c.l.b16 %v214
    %v1708 = vunpack.c.l.b16 %v215
    %v1709 = vunpack.c.h.b16 %v215
    %v1710 = vunpack.c.l.b16 %v216
    %v1711 = vunpack.c.l.b16 %v217
    %v1712 = vunpack.c.h.b16 %v217
    %v1713 = vunpack.c.l.b16 %v218
    %v1714 = vunpack.c.l.b16 %v219
    %v1715 = vunpack.c.h.b16 %v219
    %v1716 = vunpack.c.l.b16 %v220
    %v1717 = vunpack.c.l.b16 %v221
    %v1718 = vunpack.c.h.b16 %v221
    %v1719 = vunpack.c.l.b16 %v222
    %v1720 = vunpack.c.l.b16 %v223
    %v1721 = vunpack.c.h.b16 %v223
    %v1722 = vunpack.c.l.b16 %v224
    %v1723 = vunpack.c.l.b16 %v225
    %v1724 = vunpack.c.h.b16 %v225
    %v1725 = vunpack.c.l.b16 %v226
    %v1726 = vunpack.c.l.b16 %v227
    %v1727 = vunpack.c.h.b16 %v227
    %v1728 = vunpack.c.l.b16 %v228
    %v1729 = vunpack.c.l.b16 %v229
    %v1730 = vunpack.c.h.b16 %v229
    %v1731 = vunpack.c.l.b16 %v230
    %v1732 = vunpack.c.l.b16 %v231
    %v1733 = vunpack.c.h.b16 %v231
    %v1734 = vunpack.c.l.b16 %v232
    %v1735 = vunpack.c.l.b16 %v233
    %v1736 = vunpack.c.h.b16 %v233
    %v1737 = vunpack.c.l.b16 %v234
    %v1738 = vunpack.c.l.b16 %v235
    %v1739 = vunpack.c.h.b16 %v235
    %v1740 = vunpack.c.l.b16 %v236
    %v1741 = vunpack.c.l.b16 %v237
    %v1742 = vunpack.c.h.b16 %v237
    %v1743 = vunpack.c.l.b16 %v238
    %v1744 = vunpack.c.l.b16 %v239
    %v1745 = vunpack.c.h.b16 %v239
    %v1746 = vunpack.c.l.b16 %v240
    %v1747 = vunpack.c.l.b16 %v241
    %v1748 = vunpack.c.h.b16 %v241
    %v1749 = vunpack.c.l.b16 %v242
    %v1750 = vunpack.c.l.b16 %v243
    %v1751 = vunpack.c.h.b16 %v243
    %v1752 = vunpack.c.l.b16 %v244
    %v1753 = vunpack.c.l.b16 %v245
    %v1754 = vunpack.c.h.b16 %v245
    %v1755 = vunpack.c.l.b16 %v246
    %v1756 = vunpack.c.l.b16 %v247
    %v1757 = vunpack.c.h.b16 %v247
    %v1758 = vunpack.c.l.b16 %v248
    %v1759 = vunpack.c.l.b16 %v249
    %v1760 = vunpack.c.h.b16 %v249
    %v1761 = vunpack.c.l.b16 %v250
    %v1762 = vunpack.c.l.b16 %v251
    %v1763 = vunpack.c.h.b16 %v251
    %v1764 = vunpack.c.l.b16 %v252
    %v1765 = vunpack.c.l.b16 %v253
    %v1766 = vunpack.c.h.b16 %v253
    %v1767 = vunpack.c.l.b16 %v254
    %v1768 = vunpack.c.l.b16 %v255
    %v1769 = vunpack.c.h.b16 %v255
    %v1770 = vunpack.c.l.b16 %v256
    %v1771 = vunpack.c.l.b16 %v257
    %v1772 = vunpack.c.h.b16 %v257
    %v1773 = vunpack.c.l.b16 %v258
    %v1774 = vunpack.c.l.b16 %v259
    %v1775 = vunpack.c.h.b16 %v259
    %v1776 = vunpack.c.l.b16 %v260
    %v1777 = vunpack.c.l.b16 %v261
    %v1778 = vunpack.c.h.b16 %v261
    %v1779 = vunpack.c.l.b16 %v262
    %v1780 = vunpack.c.l.b16 %v263
    %v1781 = vunpack.c.h.b16 %v263
    %v1782 = vunpack.c.l.b16 %v264
    %v1783 = vunpack.c.l.b16 %v265
    %v1784 = vunpack.c.h.b16 %v265
    %v1785 = vunpack.c.l.b16 %v266
    %v1786 = vunpack.c.l.b16 %v267
    %v1787 = vunpack.c.h.b16 %v267
    %v1788 = vunpack.c.l.b16 %v268
    %v1789 = vunpack.c.l.b16 %v269
    %v1790 = vunpack.c.h.b16 %v269
    %v1791 = vunpack.c.l.b16 %v270
    %v1792 = vunpack.c.l.b16 %v271
    %v1793 = vunpack.c.h.b16 %v271
    %v1794 = vunpack.c.l.b16 %v272
    %v1795 = vunpack.c.l.b16 %v273
    %v1796 = vunpack.c.h.b16 %v273
    %v1797 = vunpack.c.l.b16 %v274
    %v1798 = vunpack.c.l.b16 %v275
    %v1799 = vunpack.c.h.b16 %v275
    %v1800 = vunpack.c.l.b16 %v276
    %v1801 = vunpack.c.l.b16 %v277
    %v1802 = vunpack.c.h.b16 %v277
    %v1803 = vunpack.c.l.b16 %v278
    %v1804 = vunpack.c.l.b16 %v279
    %v1805 = vunpack.c.h.b16 %v279
    %v1806 = vunpack.c.l.b16 %v280
    %v1807 = vunpack.c.l.b16 %v281
    %v1808 = vunpack.c.h.b16 %v281
    %v1809 = vunpack.c.l.b16 %v282
    %v1810 = vunpack.c.l.b16 %v283
    %v1811 = vunpack.c.h.b16 %v283
    %v1812 = vunpack.c.l.b16 %v284
    %v1813 = vunpack.c.l.b16 %v285
    %v1814 = vunpack.c.h.b16 %v285
    %v1815 = vunpack.c.l.b16 %v286
    %v1816 = vunpack.c.l.b16 %v287
    %v1817 = vunpack.c.h.b16 %v287
    %v1818 = vunpack.c.l.b16 %v288
    %v1819 = vunpack.c.l.b16 %v289
    %v1820 = vunpack.c.h.b16 %v289
    %v1821 = vunpack.c.l.b16 %v290
    %v1822 = vunpack.c.l.b16 %v291
    %v1823 = vunpack.c.h.b16 %v291
    %v1824 = vunpack.c.l.b16 %v292
    %v1825 = vunpack.c.l.b16 %v293
    %v1826 = vunpack.c.h.b16 %v293
    %v1827 = vunpack.c.l.b16 %v294
    %v1828 = vunpack.c.l.b16 %v295
    %v1829 = vunpack.c.h.b16 %v295
    %v1830 = vunpack.c.l.b16 %v296
    %v1831 = vunpack.c.l.b16 %v297
    %v1832 = vunpack.c.h.b16 %v297
    %v1833 = vunpack.c.l.b16 %v298
    %v1834 = vunpack.c.l.b16 %v299
    %v1835 = vunpack.c.h.b16 %v299
    %v1836 = vunpack.c.l.b16 %v300
    %v1837 = vunpack.c.l.b16 %v301
    %v1838 = vunpack.c.h.b16 %v301
    %v1839 = vunpack.c.l.b16 %v302
    %v1840 = vunpack.c.l.b16 %v303
    %v1841 = vunpack.c.h.b16 %v303
    %v1842 = vunpack.c.l.b16 %v304
    %v1843 = vunpack.c.l.b16 %v305
    %v1844 = vunpack.c.h.b16 %v305
    %v1845 = vunpack.c.l.b16 %v306
    %v1846 = vunpack.c.l.b16 %v307
    %v1847 = vunpack.c.h.b16 %v307
    %v1848 = vunpack.c.l.b16 %v308
    %v1849 = vunpack.c.l.b16 %v309
    %v1850 = vunpack.c.h.b16 %v309
    %v1851 = vunpack.c.l.b16 %v310
    %v1852 = vunpack.c.l.b16 %v311
    %v1853 = vunpack.c.h.b16 %v311
    %v1854 = vunpack.c.l.b16 %v312
    %v1855 = vunpack.c.l.b16 %v313
    %v1856 = vunpack.c.h.b16 %v313
    %v1857 = vunpack.c.l.b16 %v314
    %v1858 = vunpack.c.l.b16 %v315
    %v1859 = vunpack.c.h.b16 %v315
    %v1860 = vunpack.c.l.b16 %v316
    %v1861 = vunpack.c.l.b16 %v317
    %v1862 = vunpack.c.h.b16 %v317
    %v1863 = vunpack.c.l.b16 %v318
    %v1864 = vunpack.c.l.b16 %v319
    %v1865 = vunpack.c.h.b16 %v319
    %v1866 = vunpack.c.l.b16 %v320
    %v1867 = vunpack.c.l.b16 %v321
    %v1868 = vunpack.c.h.b16 %v321
    %v1869 = vunpack.c.l.b16 %v322
    %v1870 = vunpack.c.l.b16 %v323
    %v1871 = vunpack.c.h.b16 %v323
    %v1872 = vunpack.c.l.b16 %v324
    %v1873 = vunpack.c.l.b16 %v325
    %v1874 = vunpack.c.h.b16 %v325
    %v1875 = vunpack.c.l.b16 %v326
    %v1876 = vunpack.c.l.b16 %v327
    %v1877 = vunpack.c.h.b16 %v327
    %v1878 = vunpack.c.l.b16 %v328
    %v1879 = vunpack.c.l.b16 %v329
    %v1880 = vunpack.c.h.b16 %v329
    %v1881 = vunpack.c.l.b16 %v330
    %v1882 = vunpack.c.l.b16 %v331
    %v1883 = vunpack.c.h.b16 %v331
    %v1884 = vunpack.c.l.b16 %v332
    %v1885 = vunpack.c.l.b16 %v333
    %v1886 = vunpack.c.h.b16 %v333
    %v1887 = vunpack.c.l.b16 %v334
    %v1888 = vunpack.c.l.b16 %v335
    %v1889 = vunpack.c.h.b16 %v335
    %v1890 = vunpack.c.l.b16 %v336
    %v1891 = vunpack.c.l.b16 %v337
    %v1892 = vunpack.c.h.b16 %v337
    %v1893 = vunpack.c.l.b16 %v338
    %v1894 = vunpack.c.l.b16 %v339
    %v1895 = vunpack.c.h.b16 %v339
    %v1896 = vunpack.c.l.b16 %v340
    %v1897 = vunpack.c.l.b16 %v341
    %v1898 = vunpack.c.h.b16 %v341
    %v1899 = vunpack.c.l.b16 %v342
    %v1900 = vunpack.c.l.b16 %v343
    %v1901 = vunpack.c.h.b16 %v343
    %v1902 = vunpack.c.l.b16 %v344
    %v1903 = vunpack.c.l.b16 %v345
    %v1904 = vunpack.c.h.b16 %v345
    %v1905 = vunpack.c.l.b16 %v346
    %v1906 = vunpack.c.l.b16 %v347
    %v1907 = vunpack.c.h.b16 %v347
    %v1908 = vunpack.c.l.b16 %v348
    %v1909 = vunpack.c.l.b16 %v349
    %v1910 = vunpack.c.h.b16 %v349
    %v1911 = vunpack.c.l.b16 %v350
    %v1912 = vunpack.c.l.b16 %v351
    %v1913 = vunpack.c.h.b16 %v351
    %v1914 = vunpack.c.l.b16 %v352
    %v1915 = vunpack.c.l.b16 %v353
    %v1916 = vunpack.c.h.b16 %v353
    %v1917 = vunpack.c.l.b16 %v354
    %v1918 = vunpack.c.l.b16 %v355
    %v1919 = vunpack.c.h.b16 %v355
    %v1920 = vunpack.c.l.b16 %v356
    %v1921 = vunpack.c.l.b16 %v357
    %v1922 = vunpack.c.h.b16 %v357
    %v1923 = vunpack.c.l.b16 %v358
    %v1924 = vunpack.c.l.b16 %v359
    %v1925 = vunpack.c.h.b16 %v359
    %v1926 = vunpack.c.l.b16 %v360
    %v1927 = vunpack.c.l.b16 %v361
    %v1928 = vunpack.c.h.b16 %v361
    %v1929 = vunpack.c.l.b16 %v362
    %v1930 = vunpack.c.l.b16 %v363
    %v1931 = vunpack.c.h.b16 %v363
    %v1932 = vunpack.c.l.b16 %v364
    %v1933 = vunpack.c.l.b16 %v365
    %v1934 = vunpack.c.h.b16 %v365
    %v1935 = vunpack.c.l.b16 %v366
    %v1936 = vunpack.c.l.b16 %v367
    %v1937 = vunpack.c.h.b16 %v367
    %v1938 = vunpack.c.l.b16 %v368
    %v1939 = vunpack.c.l.b16 %v369
    %v1940 = vunpack.c.h.b16 %v369
    %v1941 = vunpack.c.l.b16 %v370
    %v1942 = vunpack.c.l.b16 %v371
    %v1943 = vunpack.c.h.b16 %v371
    %v1944 = vunpack.c.l.b16 %v372
    %v1945 = vunpack.c.l.b16 %v373
    %v1946 = vunpack.c.h.b16 %v373
    %v1947 = vunpack.c.l.b16 %v374
    %v1948 = vunpack.c.l.b16 %v375
    %v1949 = vunpack.c.h.b16 %v375
    %v1950 = vunpack.c.l.b16 %v376
    %v1951 = vunpack.c.l.b16 %v377
    %v1952 = vunpack.c.h.b16 %v377
    %v1953 = vunpack.c.l.b16 %v378
    %v1954 = vunpack.c.l.b16 %v379
    %v1955 = vunpack.c.h.b16 %v379
    %v1956 = vunpack.c.l.b16 %v380
    %v1957 = vunpack.c.l.b16 %v381
    %v1958 = vunpack.c.h.b16 %v381
    %v1959 = vunpack.c.l.b16 %v382
    %v1960 = vunpack.c.l.b16 %v383
    %v1961 = vunpack.c.h.b16 %v383
    %v1962 = vunpack.c.l.b16 %v384
    %v1963 = vunpack.c.l.b16 %v385
    %v1964 = vunpack.c.h.b16 %v385
    %v1965 = vunpack.c.l.b16 %v386
    %v1966 = vunpack.c.l.b16 %v387
    %v1967 = vunpack.c.h.b16 %v387
    %v1968 = vunpack.c.l.b16 %v388
    %v1969 = vunpack.c.l.b16 %v389
    %v1970 = vunpack.c.h.b16 %v389
    %v1971 = vunpack.c.l.b16 %v390
    %v1972 = vunpack.c.l.b16 %v391
    %v1973 = vunpack.c.h.b16 %v391
    %v1974 = vunpack.c.l.b16 %v392
    %v1975 = vunpack.c.l.b16 %v393
    %v1976 = vunpack.c.h.b16 %v393
    %v1977 = vunpack.c.l.b16 %v394
    %v1978 = vunpack.c.l.b16 %v395
    %v1979 = vunpack.c.h.b16 %v395
    %v1980 = vunpack.c.l.b16 %v396
    %v1981 = vunpack.c.l.b16 %v397
    %v1982 = vunpack.c.h.b16 %v397
    %v1983 = vunpack.c.l.b16 %v398
    %v1984 = vunpack.c.l.b16 %v399
    %v1985 = vunpack.c.h.b16 %v399
    %v1986 = vunpack.c.l.b16 %v400
    %v1987 = vunpack.c.l.b16 %v401
    %v1988 = vunpack.c.h.b16 %v401
    %v1989 = vunpack.c.l.b16 %v402
    %v1990 = vunpack.c.l.b16 %v403
    %v1991 = vunpack.c.h.b16 %v403
    %v1992 = vunpack.c.l.b16 %v404
    %v1993 = vunpack.c.l.b16 %v405
    %v1994 = vunpack.c.h.b16 %v405
    %v1995 = vunpack.c.l.b16 %v406
    %v1996 = vunpack.c.l.b16 %v407
    %v1997 = vunpack.c.h.b16 %v407
    %v1998 = vunpack.c.l.b16 %v408
    %v1999 = vunpack.c.l.b16 %v409
    %v2000 = vunpack.c.h.b16 %v409
    %v2001 = vunpack.c.l.b16 %v410
    %v2002 = vunpack.c.l.b16 %v411
    %v2003 = vunpack.c.h.b16 %v411
    %v2004 = vunpack.c.l.b16 %v412
    %v2005 = vunpack.c.l.b16 %v413
    %v2006 = vunpack.c.h.b16 %v413
    %v2007 = vunpack.c.l.b16 %v414
    %v2008 = vunpack.c.l.b16 %v415
    %v2009 = vunpack.c.h.b16 %v415
    %v2010 = vunpack.c.l.b16 %v416
    %v2011 = vunpack.c.l.b16 %v417
    %v2012 = vunpack.c.h.b16 %v417
    %v2013 = vunpack.c.l.b16 %v418
    %v2014 = vunpack.c.l.b16 %v419
    %v2015 = vunpack.c.h.b16 %v419
    %v2016 = vunpack.c.l.b16 %v420
    %v2017 = vunpack.c.l.b16 %v421
    %v2018 = vunpack.c.h.b16 %v421
    %v2019 = vunpack.c.l.b16 %v422
    %v2020 = vunpack.c.l.b16 %v423
    %v2021 = vunpack.c.h.b16 %v423
    %v2022 = vunpack.c.l.b16 %v424
    %v2023 = vunpack.c.l.b16 %v425
    %v2024 = vunpack.c.h.b16 %v425
    %v2025 = vunpack.c.l.b16 %v426
    %v2026 = vunpack.c.l.b16 %v427
    %v2027 = vunpack.c.h.b16 %v427
    %v2028 = vunpack.c.l.b16 %v428
    %v2029 = vunpack.c.l.b16 %v429
    %v2030 = vunpack.c.h.b16 %v429
    %v2031 = vunpack.c.l.b16 %v430
    %v2032 = vunpack.c.l.b16 %v431
    %v2033 = vunpack.c.h.b16 %v431
    %v2034 = vunpack.c.l.b16 %v432
    %v2035 = vunpack.c.l.b16 %v433
    %v2036 = vunpack.c.h.b16 %v433
    %v2037 = vunpack.c.l.b16 %v434
    %v2038 = vunpack.c.l.b16 %v435
    %v2039 = vunpack.c.h.b16 %v435
    %v2040 = vunpack.c.l.b16 %v436
    %v2041 = vunpack.c.l.b16 %v437
    %v2042 = vunpack.c.h.b16 %v437
    %v2043 = vunpack.c.l.b16 %v438
    %v2044 = vunpack.c.l.b16 %v439
    %v2045 = vunpack.c.h.b16 %v439
    %v2046 = vunpack.c.l.b16 %v440
    %v2047 = vunpack.c.l.b16 %v441
    %v2048 = vunpack.c.h.b16 %v441
    %v2049 = vunpack.c.l.b16 %v442
    %v2050 = vunpack.c.l.b16 %v443
    %v2051 = vunpack.c.h.b16 %v443
    %v2052 = vunpack.c.l.b16 %v444
    %v2053 = vunpack.c.l.b16 %v445
    %v2054 = vunpack.c.h.b16 %v445
    %v2055 = vunpack.c.l.b16 %v446
    %v2056 = vunpack.c.l.b16 %v447
    %v2057 = vunpack.c.h.b16 %v447
    %v2058 = vunpack.c.l.b16 %v448
    %v2059 = vunpack.c.l.b16 %v449
    %v2060 = vunpack.c.h.b16 %v449
    %v2061 = vunpack.c.l.b16 %v450
    %v2062 = vunpack.c.l.b16 %v451
    %v2063 = vunpack.c.h.b16 %v451
    %v2064 = vunpack.c.l.b16 %v452
    %v2065 = vunpack.c.l.b16 %v453
    %v2066 = vunpack.c.h.b16 %v453
    %v2067 = vunpack.c.l.b16 %v454
    %v2068 = vunpack.c.l.b16 %v455
    %v2069 = vunpack.c.h.b16 %v455
    %v2070 = vunpack.c.l.b16 %v456
    %v2071 = vunpack.c.l.b16 %v457
    %v2072 = vunpack.c.h.b16 %v457
    %v2073 = vunpack.c.l.b16 %v458
    %v2074 = vunpack.c.l.b16 %v459
    %v2075 = vunpack.c.h.b16 %v459
    %v2076 = vunpack.c.l.b16 %v460
    %v2077 = vunpack.c.l.b16 %v461
    %v2078 = vunpack.c.h.b16 %v461
    %v2079 = vunpack.c.l.b16 %v462
    %v2080 = vunpack.c.l.b16 %v463
    %v2081 = vunpack.c.h.b16 %v463
    %v2082 = vunpack.c.l.b16 %v464
    %v2083 = vunpack.c.l.b16 %v465
    %v2084 = vunpack.c.h.b16 %v465
    %v2085 = vunpack.c.l.b16 %v466
    %v2086 = vunpack.c.l.b16 %v467
    %v2087 = vunpack.c.h.b16 %v467
    %v2088 = vunpack.c.l.b16 %v468
    %v2089 = vunpack.c.l.b16 %v469
    %v2090 = vunpack.c.h.b16 %v469
    %v2091 = vunpack.c.l.b16 %v470
    %v2092 = vunpack.c.l.b16 %v471
    %v2093 = vunpack.c.h.b16 %v471
    %v2094 = vunpack.c.l.b16 %v472
    %v2095 = vunpack.c.l.b16 %v473
    %v2096 = vunpack.c.h.b16 %v473
    %v2097 = vunpack.c.l.b16 %v474
    %v2098 = vunpack.c.l.b16 %v475
    %v2099 = vunpack.c.h.b16 %v475
    %v2100 = vunpack.c.l.b16 %v476
    %v2101 = vunpack.c.l.b16 %v477
    %v2102 = vunpack.c.h.b16 %v477
    %v2103 = vunpack.c.l.b16 %v478
    %v2104 = vunpack.c.l.b16 %v479
    %v2105 = vunpack.c.h.b16 %v479
    %v2106 = vunpack.c.l.b16 %v480
    %v2107 = vunpack.c.l.b16 %v481
    %v2108 = vunpack.c.h.b16 %v481
    %v2109 = vunpack.c.l.b16 %v482
    %v2110 = vunpack.c.l.b16 %v483
    %v2111 = vunpack.c.h.b16 %v483
    %v2112 = vunpack.c.l.b16 %v484
    %v2113 = vunpack.c.l.b16 %v485
    %v2114 = vunpack.c.h.b16 %v485
    %v2115 = vunpack.c.l.b16 %v486
    %v2116 = vunpack.c.l.b16 %v487
    %v2117 = vunpack.c.h.b16 %v487
    %v2118 = vunpack.c.l.b16 %v488
    %v2119 = vunpack.c.l.b16 %v489
    %v2120 = vunpack.c.h.b16 %v489
    %v2121 = vunpack.c.l.b16 %v490
    %v2122 = vunpack.c.l.b16 %v491
    %v2123 = vunpack.c.h.b16 %v491
    %v2124 = vunpack.c.l.b16 %v492
    %v2125 = vunpack.c.l.b16 %v493
    %v2126 = vunpack.c.h.b16 %v493
    %v2127 = vunpack.c.l.b16 %v494
    %v2128 = vunpack.c.l.b16 %v495
    %v2129 = vunpack.c.h.b16 %v495
    %v2130 = vunpack.c.l.b16 %v496
    %v2131 = vunpack.c.l.b16 %v497
    %v2132 = vunpack.c.h.b16 %v497
    %v2133 = vunpack.c.l.b16 %v498
    %v2134 = vunpack.c.l.b16 %v499
    %v2135 = vunpack.c.h.b16 %v499
    %v2136 = vunpack.c.l.b16 %v500
    %v2137 = vunpack.c.l.b16 %v501
    %v2138 = vunpack.c.h.b16 %v501
    %v2139 = vunpack.c.l.b16 %v502
    %v2140 = vunpack.c.l.b16 %v503
    %v2141 = vunpack.c.h.b16 %v503
    %v2142 = vunpack.c.l.b16 %v504
    %v2143 = vunpack.c.l.b16 %v505
    %v2144 = vunpack.c.h.b16 %v505
    %v2145 = vunpack.c.l.b16 %v506
    %v2146 = vunpack.c.l.b16 %v507
    %v2147 = vunpack.c.h.b16 %v507
    %v2148 = vunpack.c.l.b16 %v508
    %v2149 = vunpack.c.l.b16 %v509
    %v2150 = vunpack.c.h.b16 %v509
    %v2151 = vunpack.c.l.b16 %v510
    %v2152 = vunpack.c.l.b16 %v511
    %v2153 = vunpack.c.h.b16 %v511
    %v2154 = vunpack.c.l.b16 %v512
    %v2155 = vunpack.c.l.b16 %v513
    %v2156 = vunpack.c.h.b16 %v513
    %v2157 = vunpack.c.l.b16 %v514
    %v2158 = vunpack.c.l.b16 %v515
    %v2159 = vunpack.c.h.b16 %v515
    %v2160 = vunpack.c.l.b16 %v516
    %v2161 = vunpack.c.l.b16 %v517
    %v2162 = vunpack.c.h.b16 %v517
    %v2163 = vunpack.c.l.b16 %v518
    %v2164 = vunpack.c.l.b16 %v519
    %v2165 = vunpack.c.h.b16 %v519
    %v2166 = vunpack.c.l.b16 %v520
    %v2167 = vunpack.c.l.b16 %v521
    %v2168 = vunpack.c.h.b16 %v521
    %v2169 = vunpack.c.l.b16 %v522
    %v2170 = vunpack.c.l.b16 %v523
    %v2171 = vunpack.c.h.b16 %v523
    %v2172 = vunpack.c.l.b16 %v524
    %v2173 = vunpack.c.l.b16 %v525
    %v2174 = vunpack.c.h.b16 %v525
    %v2175 = vunpack.c.l.b16 %v526
    %v2176 = vunpack.c.l.b16 %v527
    %v2177 = vunpack.c.h.b16 %v527
    %v2178 = vunpack.c.l.b16 %v528
    %v2179 = vunpack.c.l.b16 %v529
    %v2180 = vunpack.c.h.b16 %v529
    %v2181 = vunpack.c.l.b16 %v530
    %v2182 = vunpack.c.l.b16 %v531
    %v2183 = vunpack.c.h.b16 %v531
    %v2184 = vunpack.c.l.b16 %v532
    %v2185 = vunpack.c.l.b16 %v533
    %v2186 = vunpack.c.h.b16 %v533
    %v2187 = vunpack.c.l.b16 %v534
    %v2188 = vunpack.c.l.b16 %v535
    %v2189 = vunpack.c.h.b16 %v535
    %v2190 = vunpack.c.l.b16 %v536
    %v2191 = vunpack.c.l.b16 %v537
    %v2192 = vunpack.c.h.b16 %v537
    %v2193 = vunpack.c.l.b16 %v538
    %v2194 = vunpack.c.l.b16 %v539
    %v2195 = vunpack.c.h.b16 %v539
    %v2196 = vunpack.c.l.b16 %v540
    %v2197 = vunpack.c.l.b16 %v541
    %v2198 = vunpack.c.h.b16 %v541
    %v2199 = vunpack.c.l.b16 %v542
    %v2200 = vunpack.c.l.b16 %v543
    %v2201 = vunpack.c.h.b16 %v543
    %v2202 = vunpack.c.l.b16 %v544
    %v2203 = vunpack.c.l.b16 %v545
    %v2204 = vunpack.c.h.b16 %v545
    %v2205 = vunpack.c.l.b16 %v546
    %v2206 = vunpack.c.l.b16 %v547
    %v2207 = vunpack.c.h.b16 %v547
    %v2208 = vunpack.c.l.b16 %v548
    %v2209 = vunpack.c.l.b16 %v549
    %v2210 = vunpack.c.h.b16 %v549
    %v2211 = vunpack.c.l.b16 %v550
    %v2212 = vunpack.c.l.b16 %v551
    %v2213 = vunpack.c.h.b16 %v551
    %v2214 = vunpack.c.l.b16 %v552
    %v2215 = vunpack.c.l.b16 %v553
    %v2216 = vunpack.c.h.b16 %v553
    %v2217 = vunpack.c.l.b16 %v554
    %v2218 = vunpack.c.l.b16 %v555
    %v2219 = vunpack.c.h.b16 %v555
    %v2220 = vunpack.c.l.b16 %v556
    %v2221 = vunpack.c.l.b16 %v557
    %v2222 = vunpack.c.h.b16 %v557
    %v2223 = vunpack.c.l.b16 %v558
    %v2224 = vunpack.c.l.b16 %v559
    %v2225 = vunpack.c.h.b16 %v559
    %v2226 = vunpack.c.l.b16 %v560
    %v2227 = vunpack.c.l.b16 %v561
    %v2228 = vunpack.c.h.b16 %v561
    %v2229 = vunpack.c.l.b16 %v562
    %v2230 = vunpack.c.l.b16 %v563
    %v2231 = vunpack.c.h.b16 %v563
    %v2232 = vunpack.c.l.b16 %v564
    %v2233 = vunpack.c.l.b16 %v565
    %v2234 = vunpack.c.h.b16 %v565
    %v2235 = vunpack.c.l.b16 %v566
    %v2236 = vunpack.c.l.b16 %v567
    %v2237 = vunpack.c.h.b16 %v567
    %v2238 = vunpack.c.l.b16 %v568
    %v2239 = vunpack.c.l.b16 %v569
    %v2240 = vunpack.c.h.b16 %v569
    %v2241 = vunpack.c.l.b16 %v570
    %v2242 = vunpack.c.l.b16 %v571
    %v2243 = vunpack.c.h.b16 %v571
    %v2244 = vunpack.c.l.b16 %v572
    %v2245 = vunpack.c.l.b16 %v573
    %v2246 = vunpack.c.h.b16 %v573
    %v2247 = vunpack.c.l.b16 %v574
    %v2248 = vunpack.c.l.b16 %v575
    %v2249 = vunpack.c.h.b16 %v575
    %v2250 = vunpack.c.l.b16 %v576
    %v2251 = vunpack.c.l.b16 %v577
    %v2252 = vunpack.c.h.b16 %v577
    %v2253 = vunpack.c.l.b16 %v578
    %v2254 = vunpack.c.l.b16 %v579
    %v2255 = vunpack.c.h.b16 %v579
    %v2256 = vunpack.c.l.b16 %v580
    %v2257 = vunpack.c.l.b16 %v581
    %v2258 = vunpack.c.h.b16 %v581
    %v2259 = vunpack.c.l.b16 %v582
    %v2260 = vunpack.c.l.b16 %v583
    %v2261 = vunpack.c.h.b16 %v583
    %v2262 = vunpack.c.l.b16 %v584
    %v2263 = vunpack.c.l.b16 %v585
    %v2264 = vunpack.c.h.b16 %v585
    %v2265 = vunpack.c.l.b16 %v586
    %v2266 = vunpack.c.l.b16 %v587
    %v2267 = vunpack.c.h.b16 %v587
    %v2268 = vunpack.c.l.b16 %v588
    %v2269 = vunpack.c.l.b16 %v589
    %v2270 = vunpack.c.h.b16 %v589
    %v2271 = vunpack.c.l.b16 %v590
    %v2272 = vunpack.c.l.b16 %v591
    %v2273 = vunpack.c.h.b16 %v591
    %v2274 = vunpack.c.l.b16 %v592
    %v2275 = vunpack.c.l.b16 %v593
    %v2276 = vunpack.c.h.b16 %v593
    %v2277 = vunpack.c.l.b16 %v594
    %v2278 = vunpack.c.l.b16 %v595
    %v2279 = vunpack.c.h.b16 %v595
    %v2280 = vunpack.c.l.b16 %v596
    %v2281 = vunpack.c.l.b16 %v597
    %v2282 = vunpack.c.h.b16 %v597
    %v2283 = vunpack.c.l.b16 %v598
    %v2284 = vunpack.c.l.b16 %v599
    %v2285 = vunpack.c.h.b16 %v599
    %v2286 = vunpack.c.l.b16 %v600
    %v2287 = vunpack.c.l.b16 %v601
    %v2288 = vunpack.c.h.b16 %v601
    %v2289 = vunpack.c.l.b16 %v602
    %v2290 = vunpack.c.l.b16 %v603
    %v2291 = vunpack.c.h.b16 %v603
    %v2292 = vunpack.c.l.b16 %v604
    %v2293 = vunpack.c.l.b16 %v605
    %v2294 = vunpack.c.h.b16 %v605
    %v2295 = vunpack.c.l.b16 %v606
    %v2296 = vunpack.c.l.b16 %v607
    %v2297 = vunpack.c.h.b16 %v607
    %v2298 = vunpack.c.l.b16 %v608
    %v2299 = vunpack.c.l.b16 %v609
    %v2300 = vunpack.c.h.b16 %v609
    %v2301 = vunpack.c.l.b16 %v610
    %v2302 = vunpack.c.l.b16 %v611
    %v2303 = vunpack.c.h.b16 %v611
    %v2304 = vunpack.c.l.b16 %v612
    %v2305 = vunpack.c.l.b16 %v613
    %v2306 = vunpack.c.h.b16 %v613
    %v2307 = vunpack.c.l.b16 %v614
    %v2308 = vunpack.c.l.b16 %v615
    %v2309 = vunpack.c.h.b16 %v615
    %v2310 = vunpack.c.l.b16 %v616
    %v2311 = vunpack.c.l.b16 %v617
    %v2312 = vunpack.c.h.b16 %v617
    %v2313 = vunpack.c.l.b16 %v618
    %v2314 = vunpack.c.l.b16 %v619
    %v2315 = vunpack.c.h.b16 %v619
    %v2316 = vunpack.c.l.b16 %v620
    %v2317 = vunpack.c.l.b16 %v621
    %v2318 = vunpack.c.h.b16 %v621
    %v2319 = vunpack.c.l.b16 %v622
    %v2320 = vunpack.c.l.b16 %v623
    %v2321 = vunpack.c.h.b16 %v623
    %v2322 = vunpack.c.l.b16 %v624
    %v2323 = vunpack.c.l.b16 %v625
    %v2324 = vunpack.c.h.b16 %v625
    %v2325 = vunpack.c.l.b16 %v626
    %v2326 = vunpack.c.l.b16 %v627
    %v2327 = vunpack.c.h.b16 %v627
    %v2328 = vunpack.c.l.b16 %v628
    %v2329 = vunpack.c.l.b16 %v629
    %v2330 = vunpack.c.h.b16 %v629
    %v2331 = vunpack.c.l.b16 %v630
    %v2332 = vunpack.c.l.b16 %v631
    %v2333 = vunpack.c.h.b16 %v631
    %v2334 = vunpack.c.l.b16 %v632
    %v2335 = vunpack.c.l.b16 %v633
    %v2336 = vunpack.c.h.b16 %v633
    %v2337 = vunpack.c.l.b16 %v634
    %v2338 = vunpack.c.l.b16 %v635
    %v2339 = vunpack.c.h.b16 %v635
    %v2340 = vunpack.c.l.b16 %v636
    %v2341 = vunpack.c.l.b16 %v637
    %v2342 = vunpack.c.h.b16 %v637
    %v2343 = vunpack.c.l.b16 %v638
    %v2344 = vunpack.c.l.b16 %v639
    %v2345 = vunpack.c.h.b16 %v639
    %v2346 = vunpack.c.l.b16 %v640
    %v2347 = vunpack.c.l.b16 %v641
    %v2348 = vunpack.c.h.b16 %v641
    %v2349 = vunpack.c.l.b16 %v642
    %v2350 = vunpack.c.l.b16 %v643
    %v2351 = vunpack.c.h.b16 %v643
    %v2352 = vunpack.c.l.b16 %v644
    %v2353 = vunpack.c.l.b16 %v645
    %v2354 = vunpack.c.h.b16 %v645
    %v2355 = vunpack.c.l.b16 %v646
    %v2356 = vunpack.c.l.b16 %v647
    %v2357 = vunpack.c.h.b16 %v647
    %v2358 = vunpack.c.l.b16 %v648
    %v2359 = vunpack.c.l.b16 %v649
    %v2360 = vunpack.c.h.b16 %v649
    %v2361 = vunpack.c.l.b16 %v650
    %v2362 = vunpack.c.l.b16 %v651
    %v2363 = vunpack.c.h.b16 %v651
    %v2364 = vunpack.c.l.b16 %v652
    %v2365 = vunpack.c.l.b16 %v653
    %v2366 = vunpack.c.h.b16 %v653
    %v2367 = vunpack.c.l.b16 %v654
    %v2368 = vunpack.c.l.b16 %v655
    %v2369 = vunpack.c.h.b16 %v655
    %v2370 = vunpack.c.l.b16 %v656
    %v2371 = vunpack.c.l.b16 %v657
    %v2372 = vunpack.c.h.b16 %v657
    %v2373 = vunpack.c.l.b16 %v658
    %v2374 = vunpack.c.l.b16 %v659
    %v2375 = vunpack.c.h.b16 %v659
    %v2376 = vunpack.c.l.b16 %v660
    %v2377 = vunpack.c.l.b16 %v661
    %v2378 = vunpack.c.h.b16 %v661
    %v2379 = vunpack.c.l.b16 %v662
    %v2380 = vunpack.c.l.b16 %v663
    %v2381 = vunpack.c.h.b16 %v663
    %v2382 = vunpack.c.l.b16 %v664
    %v2383 = vunpack.c.l.b16 %v665
    %v2384 = vunpack.c.h.b16 %v665
    %v2385 = vunpack.c.l.b16 %v666
    %v2386 = vunpack.c.l.b16 %v667
    %v2387 = vunpack.c.h.b16 %v667
    %v2388 = vunpack.c.l.b16 %v668
    %v2389 = vunpack.c.l.b16 %v669
    %v2390 = vunpack.c.h.b16 %v669
    %v2391 = vunpack.c.l.b16 %v670
    %v2392 = vunpack.c.l.b16 %v671
    %v2393 = vunpack.c.h.b16 %v671
    %v2394 = vunpack.c.l.b16 %v672
    %v2395 = vunpack.c.l.b16 %v673
    %v2396 = vunpack.c.h.b16 %v673
    %v2397 = vunpack.c.l.b16 %v674
    %v2398 = vunpack.c.l.b16 %v675
    %v2399 = vunpack.c.h.b16 %v675
    %v2400 = vunpack.c.l.b16 %v676
    %v2401 = vunpack.c.l.b16 %v677
    %v2402 = vunpack.c.h.b16 %v677
    %v2403 = vunpack.c.l.b16 %v678
    %v2404 = vunpack.c.l.b16 %v679
    %v2405 = vunpack.c.h.b16 %v679
    %v2406 = vunpack.c.l.b16 %v680
    %v2407 = vunpack.c.l.b16 %v681
    %v2408 = vunpack.c.h.b16 %v681
    %v2409 = vunpack.c.l.b16 %v682
    %v2410 = vunpack.c.l.b16 %v683
    %v2411 = vunpack.c.h.b16 %v683
    %v2412 = vunpack.c.l.b16 %v684
    %v2413 = vunpack.c.l.b16 %v685
    %v2414 = vunpack.c.h.b16 %v685
    %v2415 = vunpack.c.l.b16 %v686
    %v2416 = vunpack.c.l.b16 %v687
    %v2417 = vunpack.c.h.b16 %v687
    %v2418 = vunpack.c.l.b16 %v688
    %v2419 = vunpack.c.l.b16 %v689
    %v2420 = vunpack.c.h.b16 %v689
    %v2421 = vunpack.c.l.b16 %v690
    %v2422 = vunpack.c.l.b16 %v691
    %v2423 = vunpack.c.h.b16 %v691
    %v2424 = vunpack.c.l.b16 %v692
    %v2425 = vunpack.c.l.b16 %v693
    %v2426 = vunpack.c.h.b16 %v693
    %v2427 = vunpack.c.l.b16 %v694
    %v2428 = vunpack.c.l.b16 %v695
    %v2429 = vunpack.c.h.b16 %v695
    %v2430 = vunpack.c.l.b16 %v696
    %v2431 = vunpack.c.l.b16 %v697
    %v2432 = vunpack.c.h.b16 %v697
    %v2433 = vunpack.c.l.b16 %v698
    %v2434 = vunpack.c.l.b16 %v699
    %v2435 = vunpack.c.h.b16 %v699
    %v2436 = vunpack.c.l.b16 %v700
    %v2437 = vunpack.c.l.b16 %v701
    %v2438 = vunpack.c.h.b16 %v701
    %v2439 = vunpack.c.l.b16 %v702
    %v2440 = vunpack.c.l.b16 %v703
    %v2441 = vunpack.c.h.b16 %v703
    %v2442 = vunpack.c.l.b16 %v704
    %v2443 = vunpack.c.l.b16 %v705
    %v2444 = vunpack.c.h.b16 %v705
    %v2445 = vunpack.c.l.b16 %v706
    %v2446 = vunpack.c.l.b16 %v707
    %v2447 = vunpack.c.h.b16 %v707
    %v2448 = vunpack.c.l.b16 %v708
    %v2449 = vunpack.c.l.b16 %v709
    %v2450 = vunpack.c.h.b16 %v709
    %v2451 = vunpack.c.l.b16 %v710
    %v2452 = vunpack.c.l.b16 %v711
    %v2453 = vunpack.c.h.b16 %v711
    %v2454 = vunpack.c.l.b16 %v712
    %v2455 = vunpack.c.l.b16 %v713
    %v2456 = vunpack.c.h.b16 %v713
    %v2457 = vunpack.c.l.b16 %v714
    %v2458 = vunpack.c.l.b16 %v715
    %v2459 = vunpack.c.h.b16 %v715
    %v2460 = vunpack.c.l.b16 %v716
    %v2461 = vunpack.c.l.b16 %v717
    %v2462 = vunpack.c.h.b16 %v717
    %v2463 = vunpack.c.l.b16 %v718
    %v2464 = vunpack.c.l.b16 %v719
    %v2465 = vunpack.c.h.b16 %v719
    %v2466 = vunpack.c.l.b16 %v720
    %v2467 = vunpack.c.l.b16 %v721
    %v2468 = vunpack.c.h.b16 %v721
    %v2469 = vunpack.c.l.b16 %v722
    %v2470 = vunpack.c.l.b16 %v723
    %v2471 = vunpack.c.h.b16 %v723
    %v2472 = vunpack.c.l.b16 %v724
    %v2473 = vunpack.c.l.b16 %v725
    %v2474 = vunpack.c.h.b16 %v725
    %v2475 = vunpack.c.l.b16 %v726
    %v2476 = vunpack.c.l.b16 %v727
    %v2477 = vunpack.c.h.b16 %v727
    %v2478 = vunpack.c.l.b16 %v728
    %v2479 = vunpack.c.l.b16 %v729
    %v2480 = vunpack.c.h.b16 %v729
    %v2481 = vunpack.c.l.b16 %v730
    %v2482 = vunpack.c.l.b16 %v731
    %v2483 = vunpack.c.h.b16 %v731
    %v2484 = vunpack.c.l.b16 %v732
    %v2485 = vunpack.c.l.b16 %v733
    %v2486 = vunpack.c.h.b16 %v733
    %v2487 = vunpack.c.l.b16 %v734
    %v2488 = vunpack.c.l.b16 %v735
    %v2489 = vunpack.c.h.b16 %v735
    %v2490 = vunpack.c.l.b16 %v736
    %v2491 = vunpack.c.l.b16 %v737
    %v2492 = vunpack.c.h.b16 %v737
    %v2493 = vunpack.c.l.b16 %v738
    %v2494 = vunpack.c.l.b16 %v739
    %v2495 = vunpack.c.h.b16 %v739
    %v2496 = vunpack.c.l.b16 %v740
    %v2497 = vunpack.c.l.b16 %v741
    %v2498 = vunpack.c.h.b16 %v741
    %v2499 = vunpack.c.l.b16 %v742
    %v2500 = vunpack.c.l.b16 %v743
    %v2501 = vunpack.c.h.b16 %v743
    %v2502 = vunpack.c.l.b16 %v744
    %v2503 = vunpack.c.l.b16 %v745
    %v2504 = vunpack.c.h.b16 %v745
    %v2505 = vunpack.c.l.b16 %v746
    %v2506 = vunpack.c.l.b16 %v747
    %v2507 = vunpack.c.h.b16 %v747
    %v2508 = vunpack.c.l.b16 %v748
    %v2509 = vunpack.c.l.b16 %v749
    %v2510 = vunpack.c.h.b16 %v749
    %v2511 = vunpack.c.l.b16 %v750
    %v2512 = vunpack.c.l.b16 %v751
    %v2513 = vunpack.c.h.b16 %v751
    %v2514 = vunpack.c.l.b16 %v752
    %v2515 = vunpack.c.l.b16 %v753
    %v2516 = vunpack.c.h.b16 %v753
    %v2517 = vunpack.c.l.b16 %v754
    %v2518 = vunpack.c.l.b16 %v755
    %v2519 = vunpack.c.h.b16 %v755
    %v2520 = vunpack.c.l.b16 %v756
    %v2521 = vunpack.c.l.b16 %v757
    %v2522 = vunpack.c.h.b16 %v757
    %v2523 = vunpack.c.l.b16 %v758
    %v2524 = vunpack.c.l.b16 %v759
    %v2525 = vunpack.c.h.b16 %v759
    %v2526 = vunpack.c.l.b16 %v760
    %v2527 = vunpack.c.l.b16 %v761
    %v2528 = vunpack.c.h.b16 %v761
    %v2529 = vunpack.c.l.b16 %v762
    %v2530 = vunpack.c.l.b16 %v763
    %v2531 = vunpack.c.h.b16 %v763
    %v2532 = vunpack.c.l.b16 %v764
    %v2533 = vunpack.c.l.b16 %v765
    %v2534 = vunpack.c.h.b16 %v765
    %v2535 = vunpack.c.l.b16 %v766
    %v2536 = vunpack.c.l.b16 %v767
    %v2537 = vunpack.c.h.b16 %v767
    %v2538 = vunpack.c.l.b16 %v768
    %v2539 = vunpack.c.l.b16 %v769
    %v2540 = vunpack.c.h.b16 %v769
    %v2541 = vunpack.c.l.b16 %v770
    %v2542 = vunpack.c.l.b16 %v771
    %v2543 = vunpack.c.h.b16 %v771
    %v2544 = vunpack.c.l.b16 %v772
    %v2545 = vunpack.c.l.b16 %v773
    %v2546 = vunpack.c.h.b16 %v773
    %v2547 = vunpack.c.l.b16 %v774
    %v2548 = vunpack.c.l.b16 %v775
    %v2549 = vunpack.c.h.b16 %v775
    %v2550 = vunpack.c.l.b16 %v776
    %v2551 = vunpack.c.l.b16 %v777
    %v2552 = vunpack.c.h.b16 %v777
    %v2553 = vunpack.c.l.b16 %v778
    %v2554 = vunpack.c.l.b16 %v779
    %v2555 = vunpack.c.h.b16 %v779
    %v2556 = vunpack.c.l.b16 %v780
    %v2557 = vunpack.c.l.b16 %v781
    %v2558 = vunpack.c.h.b16 %v781
    %v2559 = vunpack.c.l.b16 %v782
    %v2560 = vunpack.c.l.b16 %v783
    %v2561 = vunpack.c.h.b16 %v783
    %v2562 = vunpack.c.l.b16 %v784
    %v2563 = vunpack.c.l.b16 %v785
    %v2564 = vunpack.c.h.b16 %v785
    %v2565 = vunpack.c.l.b16 %v786
    %v2566 = vunpack.c.l.b16 %v787
    %v2567 = vunpack.c.h.b16 %v787
    %v2568 = vunpack.c.l.b16 %v788
    %v2569 = vunpack.c.l.b16 %v789
    %v2570 = vunpack.c.h.b16 %v789
    %v2571 = vunpack.c.l.b16 %v790
    %v2572 = vunpack.c.l.b16 %v791
    %v2573 = vunpack.c.h.b16 %v791
    %v2574 = vunpack.c.l.b16 %v792
    %v2575 = vunpack.c.l.b16 %v793
    %v2576 = vunpack.c.h.b16 %v793
    %v2577 = vunpack.c.l.b16 %v794
    %v2578 = vunpack.c.l.b16 %v795
    %v2579 = vunpack.c.h.b16 %v795
    %v2580 = vunpack.c.l.b16 %v796
    %v2581 = vunpack.c.l.b16 %v797
    %v2582 = vunpack.c.h.b16 %v797
    %v2583 = vunpack.c.l.b16 %v798
    %v2584 = vunpack.c.l.b16 %v799
    %v2585 = vunpack.c.h.b16 %v799
    %v2586 = vunpack.c.l.b16 %v800
    %v2587 = vunpack.c.l.b16 %v801
    %v2588 = vunpack.c.h.b16 %v801
    %v2589 = vunpack.c.l.b16 %v802
    %v2590 = vunpack.c.l.b16 %v803
    %v2591 = vunpack.c.h.b16 %v803
    %v2592 = vunpack.c.l.b16 %v804
    %v2593 = vunpack.c.l.b16 %v805
    %v2594 = vunpack.c.h.b16 %v805
    %v2595 = vunpack.c.l.b16 %v806
    %v2596 = vunpack.c.l.b16 %v807
    %v2597 = vunpack.c.h.b16 %v807
    %v2598 = vunpack.c.l.b16 %v808
    %v2599 = vunpack.c.l.b16 %v809
    %v2600 = vunpack.c.h.b16 %v809
    %v2601 = vunpack.c.l.b16 %v810
    %v2602 = vunpack.c.l.b16 %v811
    %v2603 = vunpack.c.h.b16 %v811
    %v2604 = vunpack.c.l.b16 %v812
    %v2605 = vunpack.c.l.b16 %v813
    %v2606 = vunpack.c.h.b16 %v813
    %v2607 = vunpack.c.l.b16 %v814
    %v2608 = vunpack.c.l.b16 %v815
    %v2609 = vunpack.c.h.b16 %v815
    %v2610 = vunpack.c.l.b16 %v816
    %v2611 = vunpack.c.l.b16 %v817
    %v2612 = vunpack.c.h.b16 %v817
    %v2613 = vunpack.c.l.b16 %v818
    %v2614 = vunpack.c.l.b16 %v819
    %v2615 = vunpack.c.h.b16 %v819
    %v2616 = vunpack.c.l.b16 %v820
    %v2617 = vunpack.c.l.b16 %v821
    %v2618 = vunpack.c.h.b16 %v821
    %v2619 = vunpack.c.l.b16 %v822
    %v2620 = vunpack.c.l.b16 %v823
    %v2621 = vunpack.c.h.b16 %v823
    %v2622 = vunpack.c.l.b16 %v824
    %v2623 = vunpack.c.l.b16 %v825
    %v2624 = vunpack.c.h.b16 %v825
    %v2625 = vunpack.c.l.b16 %v826
    %v2626 = vunpack.c.l.b16 %v827
    %v2627 = vunpack.c.h.b16 %v827
    %v2628 = vunpack.c.l.b16 %v828
    %v2629 = vunpack.c.l.b16 %v829
    %v2630 = vunpack.c.h.b16 %v829
    %v2631 = vunpack.c.l.b16 %v830
    %v2632 = vunpack.c.l.b16 %v831
    %v2633 = vunpack.c.h.b16 %v831
    %v2634 = vunpack.c.l.b16 %v832
    %v2635 = vunpack.c.l.b16 %v833
    %v2636 = vunpack.c.h.b16 %v833
    %v2637 = vunpack.c.l.b16 %v834
    %v2638 = vunpack.c.l.b16 %v835
    %v2639 = vunpack.c.h.b16 %v835
    %v2640 = vunpack.c.l.b16 %v836
    %v2641 = vunpack.c.l.b16 %v837
    %v2642 = vunpack.c.h.b16 %v837
    %v2643 = vunpack.c.l.b16 %v838
    %v2644 = vunpack.c.l.b16 %v839
    %v2645 = vunpack.c.h.b16 %v839
    %v2646 = vunpack.c.l.b16 %v840
    %v2647 = vunpack.c.l.b16 %v841
    %v2648 = vunpack.c.h.b16 %v841
    %v2649 = vunpack.c.l.b16 %v842
    %v2650 = vunpack.c.l.b16 %v843
    %v2651 = vunpack.c.h.b16 %v843
    %v2652 = vunpack.c.l.b16 %v844
    %v2653 = vunpack.c.l.b16 %v845
    %v2654 = vunpack.c.h.b16 %v845
    %v2655 = vunpack.c.l.b16 %v846
    %v2656 = vunpack.c.l.b16 %v847
    %v2657 = vunpack.c.h.b16 %v847
    %v2658 = vunpack.c.l.b16 %v848
    %v2659 = vunpack.c.l.b16 %v849
    %v2660 = vunpack.c.h.b16 %v849
    %v2661 = vunpack.c.l.b16 %v850
    %v2662 = vunpack.c.l.b16 %v851
    %v2663 = vunpack.c.h.b16 %v851
    %v2664 = vunpack.c.l.b16 %v852
    %v2665 = vunpack.c.l.b16 %v853
    %v2666 = vunpack.c.h.b16 %v853
    %v2667 = vunpack.c.l.b16 %v854
    %v2668 = vunpack.c.l.b16 %v855
    %v2669 = vunpack.c.h.b16 %v855
    %v2670 = vunpack.c.l.b16 %v856
    %v2671 = vunpack.c.l.b16 %v857
    %v2672 = vunpack.c.h.b16 %v857
    %v2673 = vunpack.c.l.b16 %v858
    %v2674 = vunpack.c.l.b16 %v859
    %v2675 = vunpack.c.h.b16 %v859
    %v2676 = vunpack.c.l.b16 %v860
    %v2677 = vunpack.c.l.b16 %v861
    %v2678 = vunpack.c.h.b16 %v861
    %v2679 = vunpack.c.l.b16 %v862
    %v2680 = vunpack.c.l.b16 %v863
    %v2681 = vunpack.c.h.b16 %v863
    %v2682 = vunpack.c.l.b16 %v864
    %v2683 = vunpack.c.l.b16 %v865
    %v2684 = vunpack.c.h.b16 %v865
    %v2685 = vunpack.c.l.b16 %v866
    %v2686 = vunpack.c.l.b16 %v867
    %v2687 = vunpack.c.h.b16 %v867
    %v2688 = vunpack.c.l.b16 %v868
    %v2689 = vunpack.c.l.b16 %v869
    %v2690 = vunpack.c.h.b16 %v869
    %v2691 = vunpack.c.l.b16 %v870
    %v2692 = vunpack.c.l.b16 %v871
    %v2693 = vunpack.c.h.b16 %v871
    %v2694 = vunpack.c.l.b16 %v872
    %v2695 = vpack.c.b16 %v1615, %v1612
    %v2696 = vpack.c.b16 %v1616, %v1613
    %v2697 = vpack.c.b16 %v1617, %v1614
    %v2698 = vpack.c.b16 %v1621, %v1618
    %v2699 = vpack.c.b16 %v1622, %v1619
    %v2700 = vpack.c.b16 %v1623, %v1620
    %v2701 = vpack.c.b16 %v1627, %v1624
    %v2702 = vpack.c.b16 %v1628, %v1625
    %v2703 = vpack.c.b16 %v1629, %v1626
    %v2704 = vpack.c.b16 %v1633, %v1630
    %v2705 = vpack.c.b16 %v1634, %v1631
    %v2706 = vpack.c.b16 %v1635, %v1632
    %v2707 = vpack.c.b16 %v1639, %v1636
    %v2708 = vpack.c.b16 %v1640, %v1637
    %v2709 = vpack.c.b16 %v1641, %v1638
    %v2710 = vpack.c.b16 %v1645, %v1642
    %v2711 = vpack.c.b16 %v1646, %v1643
    %v2712 = vpack.c.b16 %v1647, %v1644
    %v2713 = vpack.c.b16 %v1651, %v1648
    %v2714 = vpack.c.b16 %v1652, %v1649
    %v2715 = vpack.c.b16 %v1653, %v1650
    %v2716 = vpack.c.b16 %v1657, %v1654
    %v2717 = vpack.c.b16 %v1658, %v1655
    %v2718 = vpack.c.b16 %v1659, %v1656
    %v2719 = vpack.c.b16 %v1663, %v1660
    %v2720 = vpack.c.b16 %v1664, %v1661
    %v2721 = vpack.c.b16 %v1665, %v1662
    %v2722 = vpack.c.b16 %v1669, %v1666
    %v2723 = vpack.c.b16 %v1670, %v1667
    %v2724 = vpack.c.b16 %v1671, %v1668
    %v2725 = vpack.c.b16 %v1675, %v1672
    %v2726 = vpack.c.b16 %v1676, %v1673
    %v2727 = vpack.c.b16 %v1677, %v1674
    %v2728 = vpack.c.b16 %v1681, %v1678
    %v2729 = vpack.c.b16 %v1682, %v1679
    %v2730 = vpack.c.b16 %v1683, %v1680
    %v2731 = vpack.c.b16 %v1687, %v1684
    %v2732 = vpack.c.b16 %v1688, %v1685
    %v2733 = vpack.c.b16 %v1689, %v1686
    %v2734 = vpack.c.b16 %v1693, %v1690
    %v2735 = vpack.c.b16 %v1694, %v1691
    %v2736 = vpack.c.b16 %v1695, %v1692
    %v2737 = vpack.c.b16 %v1699, %v1696
    %v2738 = vpack.c.b16 %v1700, %v1697
    %v2739 = vpack.c.b16 %v1701, %v1698
    %v2740 = vpack.c.b16 %v1705, %v1702
    %v2741 = vpack.c.b16 %v1706, %v1703
    %v2742 = vpack.c.b16 %v1707, %v1704
    %v2743 = vpack.c.b16 %v1711, %v1708
    %v2744 = vpack.c.b16 %v1712, %v1709
    %v2745 = vpack.c.b16 %v1713, %v1710
    %v2746 = vpack.c.b16 %v1717, %v1714
    %v2747 = vpack.c.b16 %v1718, %v1715
    %v2748 = vpack.c.b16 %v1719, %v1716
    %v2749 = vpack.c.b16 %v1723, %v1720
    %v2750 = vpack.c.b16 %v1724, %v1721
    %v2751 = vpack.c.b16 %v1725, %v1722
    %v2752 = vpack.c.b16 %v1729, %v1726
    %v2753 = vpack.c.b16 %v1730, %v1727
    %v2754 = vpack.c.b16 %v1731, %v1728
    %v2755 = vpack.c.b16 %v1735, %v1732
    %v2756 = vpack.c.b16 %v1736, %v1733
    %v2757 = vpack.c.b16 %v1737, %v1734
    %v2758 = vpack.c.b16 %v1741, %v1738
    %v2759 = vpack.c.b16 %v1742, %v1739
    %v2760 = vpack.c.b16 %v1743, %v1740
    %v2761 = vpack.c.b16 %v1747, %v1744
    %v2762 = vpack.c.b16 %v1748, %v1745
    %v2763 = vpack.c.b16 %v1749, %v1746
    %v2764 = vpack.c.b16 %v1753, %v1750
    %v2765 = vpack.c.b16 %v1754, %v1751
    %v2766 = vpack.c.b16 %v1755, %v1752
    %v2767 = vpack.c.b16 %v1759, %v1756
    %v2768 = vpack.c.b16 %v1760, %v1757
    %v2769 = vpack.c.b16 %v1761, %v1758
    %v2770 = vpack.c.b16 %v1765, %v1762
    %v2771 = vpack.c.b16 %v1766, %v1763
    %v2772 = vpack.c.b16 %v1767, %v1764
    %v2773 = vpack.c.b16 %v1771, %v1768
    %v2774 = vpack.c.b16 %v1772, %v1769
    %v2775 = vpack.c.b16 %v1773, %v1770
    %v2776 = vpack.c.b16 %v1777, %v1774
    %v2777 = vpack.c.b16 %v1778, %v1775
    %v2778 = vpack.c.b16 %v1779, %v1776
    %v2779 = vpack.c.b16 %v1783, %v1780
    %v2780 = vpack.c.b16 %v1784, %v1781
    %v2781 = vpack.c.b16 %v1785, %v1782
    %v2782 = vpack.c.b16 %v1789, %v1786
    %v2783 = vpack.c.b16 %v1790, %v1787
    %v2784 = vpack.c.b16 %v1791, %v1788
    %v2785 = vpack.c.b16 %v1795, %v1792
    %v2786 = vpack.c.b16 %v1796, %v1793
    %v2787 = vpack.c.b16 %v1797, %v1794
    %v2788 = vpack.c.b16 %v1801, %v1798
    %v2789 = vpack.c.b16 %v1802, %v1799
    %v2790 = vpack.c.b16 %v1803, %v1800
    %v2791 = vpack.c.b16 %v1807, %v1804
    %v2792 = vpack.c.b16 %v1808, %v1805
    %v2793 = vpack.c.b16 %v1809, %v1806
    %v2794 = vpack.c.b16 %v1813, %v1810
    %v2795 = vpack.c.b16 %v1814, %v1811
    %v2796 = vpack.c.b16 %v1815, %v1812
    %v2797 = vpack.c.b16 %v1819, %v1816
    %v2798 = vpack.c.b16 %v1820, %v1817
    %v2799 = vpack.c.b16 %v1821, %v1818
    %v2800 = vpack.c.b16 %v1825, %v1822
    %v2801 = vpack.c.b16 %v1826, %v1823
    %v2802 = vpack.c.b16 %v1827, %v1824
    %v2803 = vpack.c.b16 %v1831, %v1828
    %v2804 = vpack.c.b16 %v1832, %v1829
    %v2805 = vpack.c.b16 %v1833, %v1830
    %v2806 = vpack.c.b16 %v1837, %v1834
    %v2807 = vpack.c.b16 %v1838, %v1835
    %v2808 = vpack.c.b16 %v1839, %v1836
    %v2809 = vpack.c.b16 %v1843, %v1840
    %v2810 = vpack.c.b16 %v1844, %v1841
    %v2811 = vpack.c.b16 %v1845, %v1842
    %v2812 = vpack.c.b16 %v1849, %v1846
    %v2813 = vpack.c.b16 %v1850, %v1847
    %v2814 = vpack.c.b16 %v1851, %v1848
    %v2815 = vpack.c.b16 %v1855, %v1852
    %v2816 = vpack.c.b16 %v1856, %v1853
    %v2817 = vpack.c.b16 %v1857, %v1854
    %v2818 = vpack.c.b16 %v1861, %v1858
    %v2819 = vpack.c.b16 %v1862, %v1859
    %v2820 = vpack.c.b16 %v1863, %v1860
    %v2821 = vpack.c.b16 %v1867, %v1864
    %v2822 = vpack.c.b16 %v1868, %v1865
    %v2823 = vpack.c.b16 %v1869, %v1866
    %v2824 = vpack.c.b16 %v1873, %v1870
    %v2825 = vpack.c.b16 %v1874, %v1871
    %v2826 = vpack.c.b16 %v1875, %v1872
    %v2827 = vpack.c.b16 %v1879, %v1876
    %v2828 = vpack.c.b16 %v1880, %v1877
    %v2829 = vpack.c.b16 %v1881, %v1878
    %v2830 = vpack.c.b16 %v1885, %v1882
    %v2831 = vpack.c.b16 %v1886, %v1883
    %v2832 = vpack.c.b16 %v1887, %v1884
    %v2833 = vpack.c.b16 %v1891, %v1888
    %v2834 = vpack.c.b16 %v1892, %v1889
    %v2835 = vpack.c.b16 %v1893, %v1890
    %v2836 = vpack.c.b16 %v1897, %v1894
    %v2837 = vpack.c.b16 %v1898, %v1895
    %v2838 = vpack.c.b16 %v1899, %v1896
    %v2839 = vpack.c.b16 %v1903, %v1900
    %v2840 = vpack.c.b16 %v1904, %v1901
    %v2841 = vpack.c.b16 %v1905, %v1902
    %v2842 = vpack.c.b16 %v1909, %v1906
    %v2843 = vpack.c.b16 %v1910, %v1907
    %v2844 = vpack.c.b16 %v1911, %v1908
    %v2845 = vpack.c.b16 %v1915, %v1912
    %v2846 = vpack.c.b16 %v1916, %v1913
    %v2847 = vpack.c.b16 %v1917, %v1914
    %v2848 = vpack.c.b16 %v1921, %v1918
    %v2849 = vpack.c.b16 %v1922, %v1919
    %v2850 = vpack.c.b16 %v1923, %v1920
    %v2851 = vpack.c.b16 %v1927, %v1924
    %v2852 = vpack.c.b16 %v1928, %v1925
    %v2853 = vpack.c.b16 %v1929, %v1926
    %v2854 = vpack.c.b16 %v1933, %v1930
    %v2855 = vpack.c.b16 %v1934, %v1931
    %v2856 = vpack.c.b16 %v1935, %v1932
    %v2857 = vpack.c.b16 %v1939, %v1936
    %v2858 = vpack.c.b16 %v1940, %v1937
    %v2859 = vpack.c.b16 %v1941, %v1938
    %v2860 = vpack.c.b16 %v1945, %v1942
    %v2861 = vpack.c.b16 %v1946, %v1943
    %v2862 = vpack.c.b16 %v1947, %v1944
    %v2863 = vpack.c.b16 %v1951, %v1948
    %v2864 = vpack.c.b16 %v1952, %v1949
    %v2865 = vpack.c.b16 %v1953, %v1950
    %v2866 = vpack.c.b16 %v1957, %v1954
    %v2867 = vpack.c.b16 %v1958, %v1955
    %v2868 = vpack.c.b16 %v1959, %v1956
    %v2869 = vpack.c.b16 %v1963, %v1960
    %v2870 = vpack.c.b16 %v1964, %v1961
    %v2871 = vpack.c.b16 %v1965, %v1962
    %v2872 = vpack.c.b16 %v1969, %v1966
    %v2873 = vpack.c.b16 %v1970, %v1967
    %v2874 = vpack.c.b16 %v1971, %v1968
    %v2875 = vpack.c.b16 %v1975, %v1972
    %v2876 = vpack.c.b16 %v1976, %v1973
    %v2877 = vpack.c.b16 %v1977, %v1974
    %v2878 = vpack.c.b16 %v1981, %v1978
    %v2879 = vpack.c.b16 %v1982, %v1979
    %v2880 = vpack.c.b16 %v1983, %v1980
    %v2881 = vpack.c.b16 %v1987, %v1984
    %v2882 = vpack.c.b16 %v1988, %v1985
    %v2883 = vpack.c.b16 %v1989, %v1986
    %v2884 = vpack.c.b16 %v1993, %v1990
    %v2885 = vpack.c.b16 %v1994, %v1991
    %v2886 = vpack.c.b16 %v1995, %v1992
    %v2887 = vpack.c.b16 %v1999, %v1996
    %v2888 = vpack.c.b16 %v2000, %v1997
    %v2889 = vpack.c.b16 %v2001, %v1998
    %v2890 = vpack.c.b16 %v2005, %v2002
    %v2891 = vpack.c.b16 %v2006, %v2003
    %v2892 = vpack.c.b16 %v2007, %v2004
    %v2893 = vpack.c.b16 %v2011, %v2008
    %v2894 = vpack.c.b16 %v2012, %v2009
    %v2895 = vpack.c.b16 %v2013, %v2010
    %v2896 = vpack.c.b16 %v2017, %v2014
    %v2897 = vpack.c.b16 %v2018, %v2015
    %v2898 = vpack.c.b16 %v2019, %v2016
    %v2899 = vpack.c.b16 %v2023, %v2020
    %v2900 = vpack.c.b16 %v2024, %v2021
    %v2901 = vpack.c.b16 %v2025, %v2022
    %v2902 = vpack.c.b16 %v2029, %v2026
    %v2903 = vpack.c.b16 %v2030, %v2027
    %v2904 = vpack.c.b16 %v2031, %v2028
    %v2905 = vpack.c.b16 %v2035, %v2032
    %v2906 = vpack.c.b16 %v2036, %v2033
    %v2907 = vpack.c.b16 %v2037, %v2034
    %v2908 = vpack.c.b16 %v2041, %v2038
    %v2909 = vpack.c.b16 %v2042, %v2039
    %v2910 = vpack.c.b16 %v2043, %v2040
    %v2911 = vpack.c.b16 %v2047, %v2044
    %v2912 = vpack.c.b16 %v2048, %v2045
    %v2913 = vpack.c.b16 %v2049, %v2046
    %v2914 = vpack.c.b16 %v2053, %v2050
    %v2915 = vpack.c.b16 %v2054, %v2051
    %v2916 = vpack.c.b16 %v2055, %v2052
    %v2917 = vpack.c.b16 %v2059, %v2056
    %v2918 = vpack.c.b16 %v2060, %v2057
    %v2919 = vpack.c.b16 %v2061, %v2058
    %v2920 = vpack.c.b16 %v2065, %v2062
    %v2921 = vpack.c.b16 %v2066, %v2063
    %v2922 = vpack.c.b16 %v2067, %v2064
    %v2923 = vpack.c.b16 %v2071, %v2068
    %v2924 = vpack.c.b16 %v2072, %v2069
    %v2925 = vpack.c.b16 %v2073, %v2070
    %v2926 = vpack.c.b16 %v2077, %v2074
    %v2927 = vpack.c.b16 %v2078, %v2075
    %v2928 = vpack.c.b16 %v2079, %v2076
    %v2929 = vpack.c.b16 %v2083, %v2080
    %v2930 = vpack.c.b16 %v2084, %v2081
    %v2931 = vpack.c.b16 %v2085, %v2082
    %v2932 = vpack.c.b16 %v2089, %v2086
    %v2933 = vpack.c.b16 %v2090, %v2087
    %v2934 = vpack.c.b16 %v2091, %v2088
    %v2935 = vpack.c.b16 %v2095, %v2092
    %v2936 = vpack.c.b16 %v2096, %v2093
    %v2937 = vpack.c.b16 %v2097, %v2094
    %v2938 = vpack.c.b16 %v2101, %v2098
    %v2939 = vpack.c.b16 %v2102, %v2099
    %v2940 = vpack.c.b16 %v2103, %v2100
    %v2941 = vpack.c.b16 %v2107, %v2104
    %v2942 = vpack.c.b16 %v2108, %v2105
    %v2943 = vpack.c.b16 %v2109, %v2106
    %v2944 = vpack.c.b16 %v2113, %v2110
    %v2945 = vpack.c.b16 %v2114, %v2111
    %v2946 = vpack.c.b16 %v2115, %v2112
    %v2947 = vpack.c.b16 %v2119, %v2116
    %v2948 = vpack.c.b16 %v2120, %v2117
    %v2949 = vpack.c.b16 %v2121, %v2118
    %v2950 = vpack.c.b16 %v2125, %v2122
    %v2951 = vpack.c.b16 %v2126, %v2123
    %v2952 = vpack.c.b16 %v2127, %v2124
    %v2953 = vpack.c.b16 %v2131, %v2128
    %v2954 = vpack.c.b16 %v2132, %v2129
    %v2955 = vpack.c.b16 %v2133, %v2130
    %v2956 = vpack.c.b16 %v2137, %v2134
    %v2957 = vpack.c.b16 %v2138, %v2135
    %v2958 = vpack.c.b16 %v2139, %v2136
    %v2959 = vpack.c.b16 %v2143, %v2140
    %v2960 = vpack.c.b16 %v2144, %v2141
    %v2961 = vpack.c.b16 %v2145, %v2142
    %v2962 = vpack.c.b16 %v2149, %v2146
    %v2963 = vpack.c.b16 %v2150, %v2147
    %v2964 = vpack.c.b16 %v2151, %v2148
    %v2965 = vpack.c.b16 %v2155, %v2152
    %v2966 = vpack.c.b16 %v2156, %v2153
    %v2967 = vpack.c.b16 %v2157, %v2154
    %v2968 = vpack.c.b16 %v2161, %v2158
    %v2969 = vpack.c.b16 %v2162, %v2159
    %v2970 = vpack.c.b16 %v2163, %v2160
    %v2971 = vpack.c.b16 %v2167, %v2164
    %v2972 = vpack.c.b16 %v2168, %v2165
    %v2973 = vpack.c.b16 %v2169, %v2166
    %v2974 = vpack.c.b16 %v2173, %v2170
    %v2975 = vpack.c.b16 %v2174, %v2171
    %v2976 = vpack.c.b16 %v2175, %v2172
    %v2977 = vpack.c.b16 %v2179, %v2176
    %v2978 = vpack.c.b16 %v2180, %v2177
    %v2979 = vpack.c.b16 %v2181, %v2178
    %v2980 = vpack.c.b16 %v2185, %v2182
    %v2981 = vpack.c.b16 %v2186, %v2183
    %v2982 = vpack.c.b16 %v2187, %v2184
    %v2983 = vpack.c.b16 %v2191, %v2188
    %v2984 = vpack.c.b16 %v2192, %v2189
    %v2985 = vpack.c.b16 %v2193, %v2190
    %v2986 = vpack.c.b16 %v2197, %v2194
    %v2987 = vpack.c.b16 %v2198, %v2195
    %v2988 = vpack.c.b16 %v2199, %v2196
    %v2989 = vpack.c.b16 %v2203, %v2200
    %v2990 = vpack.c.b16 %v2204, %v2201
    %v2991 = vpack.c.b16 %v2205, %v2202
    %v2992 = vpack.c.b16 %v2209, %v2206
    %v2993 = vpack.c.b16 %v2210, %v2207
    %v2994 = vpack.c.b16 %v2211, %v2208
    %v2995 = vpack.c.b16 %v2215, %v2212
    %v2996 = vpack.c.b16 %v2216, %v2213
    %v2997 = vpack.c.b16 %v2217, %v2214
    %v2998 = vpack.c.b16 %v2221, %v2218
    %v2999 = vpack.c.b16 %v2222, %v2219
    %v3000 = vpack.c.b16 %v2223, %v2220
    %v3001 = vpack.c.b16 %v2227, %v2224
    %v3002 = vpack.c.b16 %v2228, %v2225
    %v3003 = vpack.c.b16 %v2229, %v2226
    %v3004 = vpack.c.b16 %v2233, %v2230
    %v3005 = vpack.c.b16 %v2234, %v2231
    %v3006 = vpack.c.b16 %v2235, %v2232
    %v3007 = vpack.c.b16 %v2239, %v2236
    %v3008 = vpack.c.b16 %v2240, %v2237
    %v3009 = vpack.c.b16 %v2241, %v2238
    %v3010 = vpack.c.b16 %v2245, %v2242
    %v3011 = vpack.c.b16 %v2246, %v2243
    %v3012 = vpack.c.b16 %v2247, %v2244
    %v3013 = vpack.c.b16 %v2251, %v2248
    %v3014 = vpack.c.b16 %v2252, %v2249
    %v3015 = vpack.c.b16 %v2253, %v2250
    %v3016 = vpack.c.b16 %v2257, %v2254
    %v3017 = vpack.c.b16 %v2258, %v2255
    %v3018 = vpack.c.b16 %v2259, %v2256
    %v3019 = vpack.c.b16 %v2263, %v2260
    %v3020 = vpack.c.b16 %v2264, %v2261
    %v3021 = vpack.c.b16 %v2265, %v2262
    %v3022 = vpack.c.b16 %v2269, %v2266
    %v3023 = vpack.c.b16 %v2270, %v2267
    %v3024 = vpack.c.b16 %v2271, %v2268
    %v3025 = vpack.c.b16 %v2275, %v2272
    %v3026 = vpack.c.b16 %v2276, %v2273
    %v3027 = vpack.c.b16 %v2277, %v2274
    %v3028 = vpack.c.b16 %v2281, %v2278
    %v3029 = vpack.c.b16 %v2282, %v2279
    %v3030 = vpack.c.b16 %v2283, %v2280
    %v3031 = vpack.c.b16 %v2287, %v2284
    %v3032 = vpack.c.b16 %v2288, %v2285
    %v3033 = vpack.c.b16 %v2289, %v2286
    %v3034 = vpack.c.b16 %v2293, %v2290
    %v3035 = vpack.c.b16 %v2294, %v2291
    %v3036 = vpack.c.b16 %v2295, %v2292
    %v3037 = vpack.c.b16 %v2299, %v2296
    %v3038 = vpack.c.b16 %v2300, %v2297
    %v3039 = vpack.c.b16 %v2301, %v2298
    %v3040 = vpack.c.b16 %v2305, %v2302
    %v3041 = vpack.c.b16 %v2306, %v2303
    %v3042 = vpack.c.b16 %v2307, %v2304
    %v3043 = vpack.c.b16 %v2311, %v2308
    %v3044 = vpack.c.b16 %v2312, %v2309
    %v3045 = vpack.c.b16 %v2313, %v2310
    %v3046 = vpack.c.b16 %v2317, %v2314
    %v3047 = vpack.c.b16 %v2318, %v2315
    %v3048 = vpack.c.b16 %v2319, %v2316
    %v3049 = vpack.c.b16 %v2323, %v2320
    %v3050 = vpack.c.b16 %v2324, %v2321
    %v3051 = vpack.c.b16 %v2325, %v2322
    %v3052 = vpack.c.b16 %v2329, %v2326
    %v3053 = vpack.c.b16 %v2330, %v2327
    %v3054 = vpack.c.b16 %v2331, %v2328
    %v3055 = vpack.c.b16 %v2335, %v2332
    %v3056 = vpack.c.b16 %v2336, %v2333
    %v3057 = vpack.c.b16 %v2337, %v2334
    %v3058 = vpack.c.b16 %v2341, %v2338
    %v3059 = vpack.c.b16 %v2342, %v2339
    %v3060 = vpack.c.b16 %v2343, %v2340
    %v3061 = vpack.c.b16 %v2347, %v2344
    %v3062 = vpack.c.b16 %v2348, %v2345
    %v3063 = vpack.c.b16 %v2349, %v2346
    %v3064 = vpack.c.b16 %v2353, %v2350
    %v3065 = vpack.c.b16 %v2354, %v2351
    %v3066 = vpack.c.b16 %v2355, %v2352
    %v3067 = vpack.c.b16 %v2359, %v2356
    %v3068 = vpack.c.b16 %v2360, %v2357
    %v3069 = vpack.c.b16 %v2361, %v2358
    %v3070 = vpack.c.b16 %v2365, %v2362
    %v3071 = vpack.c.b16 %v2366, %v2363
    %v3072 = vpack.c.b16 %v2367, %v2364
    %v3073 = vpack.c.b16 %v2371, %v2368
    %v3074 = vpack.c.b16 %v2372, %v2369
    %v3075 = vpack.c.b16 %v2373, %v2370
    %v3076 = vpack.c.b16 %v2377, %v2374
    %v3077 = vpack.c.b16 %v2378, %v2375
    %v3078 = vpack.c.b16 %v2379, %v2376
    %v3079 = vpack.c.b16 %v2383, %v2380
    %v3080 = vpack.c.b16 %v2384, %v2381
    %v3081 = vpack.c.b16 %v2385, %v2382
    %v3082 = vpack.c.b16 %v2389, %v2386
    %v3083 = vpack.c.b16 %v2390, %v2387
    %v3084 = vpack.c.b16 %v2391, %v2388
    %v3085 = vpack.c.b16 %v2395, %v2392
    %v3086 = vpack.c.b16 %v2396, %v2393
    %v3087 = vpack.c.b16 %v2397, %v2394
    %v3088 = vpack.c.b16 %v2401, %v2398
    %v3089 = vpack.c.b16 %v2402, %v2399
    %v3090 = vpack.c.b16 %v2403, %v2400
    %v3091 = vpack.c.b16 %v2407, %v2404
    %v3092 = vpack.c.b16 %v2408, %v2405
    %v3093 = vpack.c.b16 %v2409, %v2406
    %v3094 = vpack.c.b16 %v2413, %v2410
    %v3095 = vpack.c.b16 %v2414, %v2411
    %v3096 = vpack.c.b16 %v2415, %v2412
    %v3097 = vpack.c.b16 %v2419, %v2416
    %v3098 = vpack.c.b16 %v2420, %v2417
    %v3099 = vpack.c.b16 %v2421, %v2418
    %v3100 = vpack.c.b16 %v2425, %v2422
    %v3101 = vpack.c.b16 %v2426, %v2423
    %v3102 = vpack.c.b16 %v2427, %v2424
    %v3103 = vpack.c.b16 %v2431, %v2428
    %v3104 = vpack.c.b16 %v2432, %v2429
    %v3105 = vpack.c.b16 %v2433, %v2430
    %v3106 = vpack.c.b16 %v2437, %v2434
    %v3107 = vpack.c.b16 %v2438, %v2435
    %v3108 = vpack.c.b16 %v2439, %v2436
    %v3109 = vpack.c.b16 %v2443, %v2440
    %v3110 = vpack.c.b16 %v2444, %v2441
    %v3111 = vpack.c.b16 %v2445, %v2442
    %v3112 = vpack.c.b16 %v2449, %v2446
    %v3113 = vpack.c.b16 %v2450, %v2447
    %v3114 = vpack.c.b16 %v2451, %v2448
    %v3115 = vpack.c.b16 %v2455, %v2452
    %v3116 = vpack.c.b16 %v2456, %v2453
    %v3117 = vpack.c.b16 %v2457, %v2454
    %v3118 = vpack.c.b16 %v2461, %v2458
    %v3119 = vpack.c.b16 %v2462, %v2459
    %v3120 = vpack.c.b16 %v2463, %v2460
    %v3121 = vpack.c.b16 %v2467, %v2464
    %v3122 = vpack.c.b16 %v2468, %v2465
    %v3123 = vpack.c.b16 %v2469, %v2466
    %v3124 = vpack.c.b16 %v2473, %v2470
    %v3125 = vpack.c.b16 %v2474, %v2471
    %v3126 = vpack.c.b16 %v2475, %v2472
    %v3127 = vpack.c.b16 %v2479, %v2476
    %v3128 = vpack.c.b16 %v2480, %v2477
    %v3129 = vpack.c.b16 %v2481, %v2478
    %v3130 = vpack.c.b16 %v2485, %v2482
    %v3131 = vpack.c.b16 %v2486, %v2483
    %v3132 = vpack.c.b16 %v2487, %v2484
    %v3133 = vpack.c.b16 %v2491, %v2488
    %v3134 = vpack.c.b16 %v2492, %v2489
    %v3135 = vpack.c.b16 %v2493, %v2490
    %v3136 = vpack.c.b16 %v2497, %v2494
    %v3137 = vpack.c.b16 %v2498, %v2495
    %v3138 = vpack.c.b16 %v2499, %v2496
    %v3139 = vpack.c.b16 %v2503, %v2500
    %v3140 = vpack.c.b16 %v2504, %v2501
    %v3141 = vpack.c.b16 %v2505, %v2502
    %v3142 = vpack.c.b16 %v2509, %v2506
    %v3143 = vpack.c.b16 %v2510, %v2507
    %v3144 = vpack.c.b16 %v2511, %v2508
    %v3145 = vpack.c.b16 %v2515, %v2512
    %v3146 = vpack.c.b16 %v2516, %v2513
    %v3147 = vpack.c.b16 %v2517, %v2514
    %v3148 = vpack.c.b16 %v2521, %v2518
    %v3149 = vpack.c.b16 %v2522, %v2519
    %v3150 = vpack.c.b16 %v2523, %v2520
    %v3151 = vpack.c.b16 %v2527, %v2524
    %v3152 = vpack.c.b16 %v2528, %v2525
    %v3153 = vpack.c.b16 %v2529, %v2526
    %v3154 = vpack.c.b16 %v2533, %v2530
    %v3155 = vpack.c.b16 %v2534, %v2531
    %v3156 = vpack.c.b16 %v2535, %v2532
    %v3157 = vpack.c.b16 %v2539, %v2536
    %v3158 = vpack.c.b16 %v2540, %v2537
    %v3159 = vpack.c.b16 %v2541, %v2538
    %v3160 = vpack.c.b16 %v2545, %v2542
    %v3161 = vpack.c.b16 %v2546, %v2543
    %v3162 = vpack.c.b16 %v2547, %v2544
    %v3163 = vpack.c.b16 %v2551, %v2548
    %v3164 = vpack.c.b16 %v2552, %v2549
    %v3165 = vpack.c.b16 %v2553, %v2550
    %v3166 = vpack.c.b16 %v2557, %v2554
    %v3167 = vpack.c.b16 %v2558, %v2555
    %v3168 = vpack.c.b16 %v2559, %v2556
    %v3169 = vpack.c.b16 %v2563, %v2560
    %v3170 = vpack.c.b16 %v2564, %v2561
    %v3171 = vpack.c.b16 %v2565, %v2562
    %v3172 = vpack.c.b16 %v2569, %v2566
    %v3173 = vpack.c.b16 %v2570, %v2567
    %v3174 = vpack.c.b16 %v2571, %v2568
    %v3175 = vpack.c.b16 %v2575, %v2572
    %v3176 = vpack.c.b16 %v2576, %v2573
    %v3177 = vpack.c.b16 %v2577, %v2574
    %v3178 = vpack.c.b16 %v2581, %v2578
    %v3179 = vpack.c.b16 %v2582, %v2579
    %v3180 = vpack.c.b16 %v2583, %v2580
    %v3181 = vpack.c.b16 %v2587, %v2584
    %v3182 = vpack.c.b16 %v2588, %v2585
    %v3183 = vpack.c.b16 %v2589, %v2586
    %v3184 = vpack.c.b16 %v2593, %v2590
    %v3185 = vpack.c.b16 %v2594, %v2591
    %v3186 = vpack.c.b16 %v2595, %v2592
    %v3187 = vpack.c.b16 %v2599, %v2596
    %v3188 = vpack.c.b16 %v2600, %v2597
    %v3189 = vpack.c.b16 %v2601, %v2598
    %v3190 = vpack.c.b16 %v2605, %v2602
    %v3191 = vpack.c.b16 %v2606, %v2603
    %v3192 = vpack.c.b16 %v2607, %v2604
    %v3193 = vpack.c.b16 %v2611, %v2608
    %v3194 = vpack.c.b16 %v2612, %v2609
    %v3195 = vpack.c.b16 %v2613, %v2610
    %v3196 = vpack.c.b16 %v2617, %v2614
    %v3197 = vpack.c.b16 %v2618, %v2615
    %v3198 = vpack.c.b16 %v2619, %v2616
    %v3199 = vpack.c.b16 %v2623, %v2620
    %v3200 = vpack.c.b16 %v2624, %v2621
    %v3201 = vpack.c.b16 %v2625, %v2622
    %v3202 = vpack.c.b16 %v2629, %v2626
    %v3203 = vpack.c.b16 %v2630, %v2627
    %v3204 = vpack.c.b16 %v2631, %v2628
    %v3205 = vpack.c.b16 %v2635, %v2632
    %v3206 = vpack.c.b16 %v2636, %v2633
    %v3207 = vpack.c.b16 %v2637, %v2634
    %v3208 = vpack.c.b16 %v2641, %v2638
    %v3209 = vpack.c.b16 %v2642, %v2639
    %v3210 = vpack.c.b16 %v2643, %v2640
    %v3211 = vpack.c.b16 %v2647, %v2644
    %v3212 = vpack.c.b16 %v2648, %v2645
    %v3213 = vpack.c.b16 %v2649, %v2646
    %v3214 = vpack.c.b16 %v2653, %v2650
    %v3215 = vpack.c.b16 %v2654, %v2651
    %v3216 = vpack.c.b16 %v2655, %v2652
    %v3217 = vpack.c.b16 %v2659, %v2656
    %v3218 = vpack.c.b16 %v2660, %v2657
    %v3219 = vpack.c.b16 %v2661, %v2658
    %v3220 = vpack.c.b16 %v2665, %v2662
    %v3221 = vpack.c.b16 %v2666, %v2663
    %v3222 = vpack.c.b16 %v2667, %v2664
    %v3223 = vpack.c.b16 %v2671, %v2668
    %v3224 = vpack.c.b16 %v2672, %v2669
    %v3225 = vpack.c.b16 %v2673, %v2670
    %v3226 = vpack.c.b16 %v2677, %v2674
    %v3227 = vpack.c.b16 %v2678, %v2675
    %v3228 = vpack.c.b16 %v2679, %v2676
    %v3229 = vpack.c.b16 %v2683, %v2680
    %v3230 = vpack.c.b16 %v2684, %v2681
    %v3231 = vpack.c.b16 %v2685, %v2682
    %v3232 = vpack.c.b16 %v2689, %v2686
    %v3233 = vpack.c.b16 %v2690, %v2687
    %v3234 = vpack.c.b16 %v2691, %v2688
    %v3235 = vpack.c.b16 %v2692, %v2692
    %v3236 = vpack.c.b16 %v2693, %v2693
    %v3237 = vpack.c.b16 %v2694, %v2694
    %vm3778 = vcmask 547840
    %v3780 = vsel %vm3778, %v150, 0
    %vm3782 = vcmask 1040384
    %vm3783 = vcmask 1041408
    %v3784 = vsel %vm3782, 4294967295, 65535
    %v3785 = vsel %vm3783, %v3784, 0
    %v3787 = vand.u32 %v3235, %v3785
    %v3790 = vand.u32 %v3236, %v3785
    %v3793 = vand.u32 %v3237, %v3785
    %3795 = vmatprep.subr.bf16.mxu0 %v2696
    %3796 = vmatpush1.bf16.msra.mxu0 %v2695
    %3797 = vmatprep.subr.bf16.mxu0 %v2699
    %3798 = vmatpush1.bf16.msra.mxu0 %v2698
    %3799 = vmatprep.subr.bf16.mxu0 %v2702
    %3800 = vmatpush1.bf16.msra.mxu0 %v2701
    %3801 = vmatprep.subr.bf16.mxu0 %v2705
    %3802 = vmatpush1.bf16.msra.mxu0 %v2704
    %3803 = vmatprep.subr.bf16.mxu0 %v2708
    %3804 = vmatpush1.bf16.msra.mxu0 %v2707
    %3805 = vmatprep.subr.bf16.mxu0 %v2711
    %3806 = vmatpush1.bf16.msra.mxu0 %v2710
    %3807 = vmatprep.subr.bf16.mxu0 %v2714
    %3808 = vmatpush1.bf16.msra.mxu0 %v2713
    %3809 = vmatprep.subr.bf16.mxu0 %v2717
    %3810 = vmatpush1.bf16.msra.mxu0 %v2716
    %3811 = vmatprep.subr.bf16.mxu0 %v2720
    %3812 = vmatpush1.bf16.msra.mxu0 %v2719
    %3813 = vmatprep.subr.bf16.mxu0 %v2723
    %3814 = vmatpush1.bf16.msra.mxu0 %v2722
    %3815 = vmatprep.subr.bf16.mxu0 %v2726
    %3816 = vmatpush1.bf16.msra.mxu0 %v2725
    %3817 = vmatprep.subr.bf16.mxu0 %v2729
    %3818 = vmatpush1.bf16.msra.mxu0 %v2728
    %3819 = vmatprep.subr.bf16.mxu0 %v2732
    %3820 = vmatpush1.bf16.msra.mxu0 %v2731
    %3821 = vmatprep.subr.bf16.mxu0 %v2735
    %3822 = vmatpush1.bf16.msra.mxu0 %v2734
    %3823 = vmatprep.subr.bf16.mxu0 %v2738
    %3824 = vmatpush1.bf16.msra.mxu0 %v2737
    %3825 = vmatprep.subr.bf16.mxu0 %v2741
    %3826 = vmatpush1.bf16.msra.mxu0 %v2740
    %3827 = vmatprep.mubr.bf16.mxu0 %v129
    %3828 = vmatmul.mubr.bf16.gmra.mrb[0].mxu0 %v128
    %v3829 = vpop.f32.mrb[0].mxu0
    %v3830 = vadd.f32 %v878, %v3829
    %v3831 = vpop.f32.mrb[0].mxu0
    %v3832 = vadd.f32 %v882, %v3831
    %v3833 = vpop.f32.mrb[0].mxu0
    %v3834 = vpop.f32.mrb[0].mxu0
    %3835 = vdwg.mxu0
    %3836 = vmatprep.subr.bf16.mxu0 %v2744
    %3837 = vmatpush1.bf16.msra.mxu0 %v2743
    %3838 = vmatprep.subr.bf16.mxu0 %v2747
    %3839 = vmatpush1.bf16.msra.mxu0 %v2746
    %3840 = vmatprep.subr.bf16.mxu0 %v2750
    %3841 = vmatpush1.bf16.msra.mxu0 %v2749
    %3842 = vmatprep.subr.bf16.mxu0 %v2753
    %3843 = vmatpush1.bf16.msra.mxu0 %v2752
    %3844 = vmatprep.subr.bf16.mxu0 %v2756
    %3845 = vmatpush1.bf16.msra.mxu0 %v2755
    %3846 = vmatprep.subr.bf16.mxu0 %v2759
    %3847 = vmatpush1.bf16.msra.mxu0 %v2758
    %3848 = vmatprep.subr.bf16.mxu0 %v2762
    %3849 = vmatpush1.bf16.msra.mxu0 %v2761
    %3850 = vmatprep.subr.bf16.mxu0 %v2765
    %3851 = vmatpush1.bf16.msra.mxu0 %v2764
    %3852 = vmatprep.subr.bf16.mxu0 %v2768
    %3853 = vmatpush1.bf16.msra.mxu0 %v2767
    %3854 = vmatprep.subr.bf16.mxu0 %v2771
    %3855 = vmatpush1.bf16.msra.mxu0 %v2770
    %3856 = vmatprep.subr.bf16.mxu0 %v2774
    %3857 = vmatpush1.bf16.msra.mxu0 %v2773
    %3858 = vmatprep.subr.bf16.mxu0 %v2777
    %3859 = vmatpush1.bf16.msra.mxu0 %v2776
    %3860 = vmatprep.subr.bf16.mxu0 %v2780
    %3861 = vmatpush1.bf16.msra.mxu0 %v2779
    %3862 = vmatprep.subr.bf16.mxu0 %v2783
    %3863 = vmatpush1.bf16.msra.mxu0 %v2782
    %3864 = vmatprep.subr.bf16.mxu0 %v2786
    %3865 = vmatpush1.bf16.msra.mxu0 %v2785
    %3866 = vmatprep.subr.bf16.mxu0 %v2789
    %3867 = vmatpush1.bf16.msra.mxu0 %v2788
    %3868 = vmatprep.mubr.bf16.mxu0 %v131
    %3869 = vmatmul.mubr.bf16.gmra.mrb[0].mxu0 %v130
    %v3870 = vpop.f32.mrb[0].mxu0
    %v3871 = vadd.f32 %v3830, %v3870
    %v3872 = vpop.f32.mrb[0].mxu0
    %v3873 = vadd.f32 %v3832, %v3872
    %v3874 = vpop.f32.mrb[0].mxu0
    %v3875 = vpop.f32.mrb[0].mxu0
    %3876 = vdwg.mxu0
    %3877 = vmatprep.subr.bf16.mxu0 %v2792
    %3878 = vmatpush1.bf16.msra.mxu0 %v2791
    %3879 = vmatprep.subr.bf16.mxu0 %v2795
    %3880 = vmatpush1.bf16.msra.mxu0 %v2794
    %3881 = vmatprep.subr.bf16.mxu0 %v2798
    %3882 = vmatpush1.bf16.msra.mxu0 %v2797
    %3883 = vmatprep.subr.bf16.mxu0 %v2801
    %3884 = vmatpush1.bf16.msra.mxu0 %v2800
    %3885 = vmatprep.subr.bf16.mxu0 %v2804
    %3886 = vmatpush1.bf16.msra.mxu0 %v2803
    %3887 = vmatprep.subr.bf16.mxu0 %v2807
    %3888 = vmatpush1.bf16.msra.mxu0 %v2806
    %3889 = vmatprep.subr.bf16.mxu0 %v2810
    %3890 = vmatpush1.bf16.msra.mxu0 %v2809
    %3891 = vmatprep.subr.bf16.mxu0 %v2813
    %3892 = vmatpush1.bf16.msra.mxu0 %v2812
    %3893 = vmatprep.subr.bf16.mxu0 %v2816
    %3894 = vmatpush1.bf16.msra.mxu0 %v2815
    %3895 = vmatprep.subr.bf16.mxu0 %v2819
    %3896 = vmatpush1.bf16.msra.mxu0 %v2818
    %3897 = vmatprep.subr.bf16.mxu0 %v2822
    %3898 = vmatpush1.bf16.msra.mxu0 %v2821
    %3899 = vmatprep.subr.bf16.mxu0 %v2825
    %3900 = vmatpush1.bf16.msra.mxu0 %v2824
    %3901 = vmatprep.subr.bf16.mxu0 %v2828
    %3902 = vmatpush1.bf16.msra.mxu0 %v2827
    %3903 = vmatprep.subr.bf16.mxu0 %v2831
    %3904 = vmatpush1.bf16.msra.mxu0 %v2830
    %3905 = vmatprep.subr.bf16.mxu0 %v2834
    %3906 = vmatpush1.bf16.msra.mxu0 %v2833
    %3907 = vmatprep.subr.bf16.mxu0 %v2837
    %3908 = vmatpush1.bf16.msra.mxu0 %v2836
    %3909 = vmatprep.mubr.bf16.mxu0 %v133
    %3910 = vmatmul.mubr.bf16.gmra.mrb[0].mxu0 %v132
    %v3911 = vpop.f32.mrb[0].mxu0
    %v3912 = vadd.f32 %v3871, %v3911
    %v3913 = vpop.f32.mrb[0].mxu0
    %v3914 = vadd.f32 %v3873, %v3913
    %v3915 = vpop.f32.mrb[0].mxu0
    %v3916 = vpop.f32.mrb[0].mxu0
    %3917 = vdwg.mxu0
    %3918 = vmatprep.subr.bf16.mxu0 %v2840
    %3919 = vmatpush1.bf16.msra.mxu0 %v2839
    %3920 = vmatprep.subr.bf16.mxu0 %v2843
    %3921 = vmatpush1.bf16.msra.mxu0 %v2842
    %3922 = vmatprep.subr.bf16.mxu0 %v2846
    %3923 = vmatpush1.bf16.msra.mxu0 %v2845
    %3924 = vmatprep.subr.bf16.mxu0 %v2849
    %3925 = vmatpush1.bf16.msra.mxu0 %v2848
    %3926 = vmatprep.subr.bf16.mxu0 %v2852
    %3927 = vmatpush1.bf16.msra.mxu0 %v2851
    %3928 = vmatprep.subr.bf16.mxu0 %v2855
    %3929 = vmatpush1.bf16.msra.mxu0 %v2854
    %3930 = vmatprep.subr.bf16.mxu0 %v2858
    %3931 = vmatpush1.bf16.msra.mxu0 %v2857
    %3932 = vmatprep.subr.bf16.mxu0 %v2861
    %3933 = vmatpush1.bf16.msra.mxu0 %v2860
    %3934 = vmatprep.subr.bf16.mxu0 %v2864
    %3935 = vmatpush1.bf16.msra.mxu0 %v2863
    %3936 = vmatprep.subr.bf16.mxu0 %v2867
    %3937 = vmatpush1.bf16.msra.mxu0 %v2866
    %3938 = vmatprep.subr.bf16.mxu0 %v2870
    %3939 = vmatpush1.bf16.msra.mxu0 %v2869
    %3940 = vmatprep.subr.bf16.mxu0 %v2873
    %3941 = vmatpush1.bf16.msra.mxu0 %v2872
    %3942 = vmatprep.subr.bf16.mxu0 %v2876
    %3943 = vmatpush1.bf16.msra.mxu0 %v2875
    %3944 = vmatprep.subr.bf16.mxu0 %v2879
    %3945 = vmatpush1.bf16.msra.mxu0 %v2878
    %3946 = vmatprep.subr.bf16.mxu0 %v2882
    %3947 = vmatpush1.bf16.msra.mxu0 %v2881
    %3948 = vmatprep.subr.bf16.mxu0 %v2885
    %3949 = vmatpush1.bf16.msra.mxu0 %v2884
    %3950 = vmatprep.mubr.bf16.mxu0 %v135
    %3951 = vmatmul.mubr.bf16.gmra.mrb[0].mxu0 %v134
    %v3952 = vpop.f32.mrb[0].mxu0
    %v3953 = vadd.f32 %v3912, %v3952
    %v3954 = vpop.f32.mrb[0].mxu0
    %v3955 = vadd.f32 %v3914, %v3954
    %v3956 = vpop.f32.mrb[0].mxu0
    %v3957 = vpop.f32.mrb[0].mxu0
    %3958 = vdwg.mxu0
    %3959 = vmatprep.subr.bf16.mxu0 %v2888
    %3960 = vmatpush1.bf16.msra.mxu0 %v2887
    %3961 = vmatprep.subr.bf16.mxu0 %v2891
    %3962 = vmatpush1.bf16.msra.mxu0 %v2890
    %3963 = vmatprep.subr.bf16.mxu0 %v2894
    %3964 = vmatpush1.bf16.msra.mxu0 %v2893
    %3965 = vmatprep.subr.bf16.mxu0 %v2897
    %3966 = vmatpush1.bf16.msra.mxu0 %v2896
    %3967 = vmatprep.subr.bf16.mxu0 %v2900
    %3968 = vmatpush1.bf16.msra.mxu0 %v2899
    %3969 = vmatprep.subr.bf16.mxu0 %v2903
    %3970 = vmatpush1.bf16.msra.mxu0 %v2902
    %3971 = vmatprep.subr.bf16.mxu0 %v2906
    %3972 = vmatpush1.bf16.msra.mxu0 %v2905
    %3973 = vmatprep.subr.bf16.mxu0 %v2909
    %3974 = vmatpush1.bf16.msra.mxu0 %v2908
    %3975 = vmatprep.subr.bf16.mxu0 %v2912
    %3976 = vmatpush1.bf16.msra.mxu0 %v2911
    %3977 = vmatprep.subr.bf16.mxu0 %v2915
    %3978 = vmatpush1.bf16.msra.mxu0 %v2914
    %3979 = vmatprep.subr.bf16.mxu0 %v2918
    %3980 = vmatpush1.bf16.msra.mxu0 %v2917
    %3981 = vmatprep.subr.bf16.mxu0 %v2921
    %3982 = vmatpush1.bf16.msra.mxu0 %v2920
    %3983 = vmatprep.subr.bf16.mxu0 %v2924
    %3984 = vmatpush1.bf16.msra.mxu0 %v2923
    %3985 = vmatprep.subr.bf16.mxu0 %v2927
    %3986 = vmatpush1.bf16.msra.mxu0 %v2926
    %3987 = vmatprep.subr.bf16.mxu0 %v2930
    %3988 = vmatpush1.bf16.msra.mxu0 %v2929
    %3989 = vmatprep.subr.bf16.mxu0 %v2933
    %3990 = vmatpush1.bf16.msra.mxu0 %v2932
    %3991 = vmatprep.mubr.bf16.mxu0 %v137
    %3992 = vmatmul.mubr.bf16.gmra.mrb[0].mxu0 %v136
    %v3993 = vpop.f32.mrb[0].mxu0
    %v3994 = vadd.f32 %v3953, %v3993
    %v3995 = vpop.f32.mrb[0].mxu0
    %v3996 = vadd.f32 %v3955, %v3995
    %v3997 = vpop.f32.mrb[0].mxu0
    %v3998 = vpop.f32.mrb[0].mxu0
    %3999 = vdwg.mxu0
    %4000 = vmatprep.subr.bf16.mxu0 %v2936
    %4001 = vmatpush1.bf16.msra.mxu0 %v2935
    %4002 = vmatprep.subr.bf16.mxu0 %v2939
    %4003 = vmatpush1.bf16.msra.mxu0 %v2938
    %4004 = vmatprep.subr.bf16.mxu0 %v2942
    %4005 = vmatpush1.bf16.msra.mxu0 %v2941
    %4006 = vmatprep.subr.bf16.mxu0 %v2945
    %4007 = vmatpush1.bf16.msra.mxu0 %v2944
    %4008 = vmatprep.subr.bf16.mxu0 %v2948
    %4009 = vmatpush1.bf16.msra.mxu0 %v2947
    %4010 = vmatprep.subr.bf16.mxu0 %v2951
    %4011 = vmatpush1.bf16.msra.mxu0 %v2950
    %4012 = vmatprep.subr.bf16.mxu0 %v2954
    %4013 = vmatpush1.bf16.msra.mxu0 %v2953
    %4014 = vmatprep.subr.bf16.mxu0 %v2957
    %4015 = vmatpush1.bf16.msra.mxu0 %v2956
    %4016 = vmatprep.subr.bf16.mxu0 %v2960
    %4017 = vmatpush1.bf16.msra.mxu0 %v2959
    %4018 = vmatprep.subr.bf16.mxu0 %v2963
    %4019 = vmatpush1.bf16.msra.mxu0 %v2962
    %4020 = vmatprep.subr.bf16.mxu0 %v2966
    %4021 = vmatpush1.bf16.msra.mxu0 %v2965
    %4022 = vmatprep.subr.bf16.mxu0 %v2969
    %4023 = vmatpush1.bf16.msra.mxu0 %v2968
    %4024 = vmatprep.subr.bf16.mxu0 %v2972
    %4025 = vmatpush1.bf16.msra.mxu0 %v2971
    %4026 = vmatprep.subr.bf16.mxu0 %v2975
    %4027 = vmatpush1.bf16.msra.mxu0 %v2974
    %4028 = vmatprep.subr.bf16.mxu0 %v2978
    %4029 = vmatpush1.bf16.msra.mxu0 %v2977
    %4030 = vmatprep.subr.bf16.mxu0 %v2981
    %4031 = vmatpush1.bf16.msra.mxu0 %v2980
    %4032 = vmatprep.mubr.bf16.mxu0 %v139
    %4033 = vmatmul.mubr.bf16.gmra.mrb[0].mxu0 %v138
    %v4034 = vpop.f32.mrb[0].mxu0
    %v4035 = vadd.f32 %v3994, %v4034
    %v4036 = vpop.f32.mrb[0].mxu0
    %v4037 = vadd.f32 %v3996, %v4036
    %v4038 = vpop.f32.mrb[0].mxu0
    %v4039 = vpop.f32.mrb[0].mxu0
    %4040 = vdwg.mxu0
    %4041 = vmatprep.subr.bf16.mxu0 %v2984
    %4042 = vmatpush1.bf16.msra.mxu0 %v2983
    %4043 = vmatprep.subr.bf16.mxu0 %v2987
    %4044 = vmatpush1.bf16.msra.mxu0 %v2986
    %4045 = vmatprep.subr.bf16.mxu0 %v2990
    %4046 = vmatpush1.bf16.msra.mxu0 %v2989
    %4047 = vmatprep.subr.bf16.mxu0 %v2993
    %4048 = vmatpush1.bf16.msra.mxu0 %v2992
    %4049 = vmatprep.subr.bf16.mxu0 %v2996
    %4050 = vmatpush1.bf16.msra.mxu0 %v2995
    %4051 = vmatprep.subr.bf16.mxu0 %v2999
    %4052 = vmatpush1.bf16.msra.mxu0 %v2998
    %4053 = vmatprep.subr.bf16.mxu0 %v3002
    %4054 = vmatpush1.bf16.msra.mxu0 %v3001
    %4055 = vmatprep.subr.bf16.mxu0 %v3005
    %4056 = vmatpush1.bf16.msra.mxu0 %v3004
    %4057 = vmatprep.subr.bf16.mxu0 %v3008
    %4058 = vmatpush1.bf16.msra.mxu0 %v3007
    %4059 = vmatprep.subr.bf16.mxu0 %v3011
    %4060 = vmatpush1.bf16.msra.mxu0 %v3010
    %4061 = vmatprep.subr.bf16.mxu0 %v3014
    %4062 = vmatpush1.bf16.msra.mxu0 %v3013
    %4063 = vmatprep.subr.bf16.mxu0 %v3017
    %4064 = vmatpush1.bf16.msra.mxu0 %v3016
    %4065 = vmatprep.subr.bf16.mxu0 %v3020
    %4066 = vmatpush1.bf16.msra.mxu0 %v3019
    %4067 = vmatprep.subr.bf16.mxu0 %v3023
    %4068 = vmatpush1.bf16.msra.mxu0 %v3022
    %4069 = vmatprep.subr.bf16.mxu0 %v3026
    %4070 = vmatpush1.bf16.msra.mxu0 %v3025
    %4071 = vmatprep.subr.bf16.mxu0 %v3029
    %4072 = vmatpush1.bf16.msra.mxu0 %v3028
    %4073 = vmatprep.mubr.bf16.mxu0 %v141
    %4074 = vmatmul.mubr.bf16.gmra.mrb[0].mxu0 %v140
    %v4075 = vpop.f32.mrb[0].mxu0
    %v4076 = vadd.f32 %v4035, %v4075
    %v4077 = vpop.f32.mrb[0].mxu0
    %v4078 = vadd.f32 %v4037, %v4077
    %v4079 = vpop.f32.mrb[0].mxu0
    %v4080 = vpop.f32.mrb[0].mxu0
    %4081 = vdwg.mxu0
    %4082 = vmatprep.subr.bf16.mxu0 %v3032
    %4083 = vmatpush1.bf16.msra.mxu0 %v3031
    %4084 = vmatprep.subr.bf16.mxu0 %v3035
    %4085 = vmatpush1.bf16.msra.mxu0 %v3034
    %4086 = vmatprep.subr.bf16.mxu0 %v3038
    %4087 = vmatpush1.bf16.msra.mxu0 %v3037
    %4088 = vmatprep.subr.bf16.mxu0 %v3041
    %4089 = vmatpush1.bf16.msra.mxu0 %v3040
    %4090 = vmatprep.subr.bf16.mxu0 %v3044
    %4091 = vmatpush1.bf16.msra.mxu0 %v3043
    %4092 = vmatprep.subr.bf16.mxu0 %v3047
    %4093 = vmatpush1.bf16.msra.mxu0 %v3046
    %4094 = vmatprep.subr.bf16.mxu0 %v3050
    %4095 = vmatpush1.bf16.msra.mxu0 %v3049
    %4096 = vmatprep.subr.bf16.mxu0 %v3053
    %4097 = vmatpush1.bf16.msra.mxu0 %v3052
    %4098 = vmatprep.subr.bf16.mxu0 %v3056
    %4099 = vmatpush1.bf16.msra.mxu0 %v3055
    %4100 = vmatprep.subr.bf16.mxu0 %v3059
    %4101 = vmatpush1.bf16.msra.mxu0 %v3058
    %4102 = vmatprep.subr.bf16.mxu0 %v3062
    %4103 = vmatpush1.bf16.msra.mxu0 %v3061
    %4104 = vmatprep.subr.bf16.mxu0 %v3065
    %4105 = vmatpush1.bf16.msra.mxu0 %v3064
    %4106 = vmatprep.subr.bf16.mxu0 %v3068
    %4107 = vmatpush1.bf16.msra.mxu0 %v3067
    %4108 = vmatprep.subr.bf16.mxu0 %v3071
    %4109 = vmatpush1.bf16.msra.mxu0 %v3070
    %4110 = vmatprep.subr.bf16.mxu0 %v3074
    %4111 = vmatpush1.bf16.msra.mxu0 %v3073
    %4112 = vmatprep.subr.bf16.mxu0 %v3077
    %4113 = vmatpush1.bf16.msra.mxu0 %v3076
    %4114 = vmatprep.mubr.bf16.mxu0 %v143
    %4115 = vmatmul.mubr.bf16.gmra.mrb[0].mxu0 %v142
    %v4116 = vpop.f32.mrb[0].mxu0
    %v4117 = vadd.f32 %v4076, %v4116
    %v4118 = vpop.f32.mrb[0].mxu0
    %v4119 = vadd.f32 %v4078, %v4118
    %v4120 = vpop.f32.mrb[0].mxu0
    %v4121 = vpop.f32.mrb[0].mxu0
    %4122 = vdwg.mxu0
    %4123 = vmatprep.subr.bf16.mxu0 %v3080
    %4124 = vmatpush1.bf16.msra.mxu0 %v3079
    %4125 = vmatprep.subr.bf16.mxu0 %v3083
    %4126 = vmatpush1.bf16.msra.mxu0 %v3082
    %4127 = vmatprep.subr.bf16.mxu0 %v3086
    %4128 = vmatpush1.bf16.msra.mxu0 %v3085
    %4129 = vmatprep.subr.bf16.mxu0 %v3089
    %4130 = vmatpush1.bf16.msra.mxu0 %v3088
    %4131 = vmatprep.subr.bf16.mxu0 %v3092
    %4132 = vmatpush1.bf16.msra.mxu0 %v3091
    %4133 = vmatprep.subr.bf16.mxu0 %v3095
    %4134 = vmatpush1.bf16.msra.mxu0 %v3094
    %4135 = vmatprep.subr.bf16.mxu0 %v3098
    %4136 = vmatpush1.bf16.msra.mxu0 %v3097
    %4137 = vmatprep.subr.bf16.mxu0 %v3101
    %4138 = vmatpush1.bf16.msra.mxu0 %v3100
    %4139 = vmatprep.subr.bf16.mxu0 %v3104
    %4140 = vmatpush1.bf16.msra.mxu0 %v3103
    %4141 = vmatprep.subr.bf16.mxu0 %v3107
    %4142 = vmatpush1.bf16.msra.mxu0 %v3106
    %4143 = vmatprep.subr.bf16.mxu0 %v3110
    %4144 = vmatpush1.bf16.msra.mxu0 %v3109
    %4145 = vmatprep.subr.bf16.mxu0 %v3113
    %4146 = vmatpush1.bf16.msra.mxu0 %v3112
    %4147 = vmatprep.subr.bf16.mxu0 %v3116
    %4148 = vmatpush1.bf16.msra.mxu0 %v3115
    %4149 = vmatprep.subr.bf16.mxu0 %v3119
    %4150 = vmatpush1.bf16.msra.mxu0 %v3118
    %4151 = vmatprep.subr.bf16.mxu0 %v3122
    %4152 = vmatpush1.bf16.msra.mxu0 %v3121
    %4153 = vmatprep.subr.bf16.mxu0 %v3125
    %4154 = vmatpush1.bf16.msra.mxu0 %v3124
    %4155 = vmatprep.mubr.bf16.mxu0 %v145
    %4156 = vmatmul.mubr.bf16.gmra.mrb[0].mxu0 %v144
    %v4157 = vpop.f32.mrb[0].mxu0
    %v4158 = vadd.f32 %v4117, %v4157
    %v4159 = vpop.f32.mrb[0].mxu0
    %v4160 = vadd.f32 %v4119, %v4159
    %v4161 = vpop.f32.mrb[0].mxu0
    %v4162 = vpop.f32.mrb[0].mxu0
    %4163 = vdwg.mxu0
    %4164 = vmatprep.subr.bf16.mxu0 %v3128
    %4165 = vmatpush1.bf16.msra.mxu0 %v3127
    %4166 = vmatprep.subr.bf16.mxu0 %v3131
    %4167 = vmatpush1.bf16.msra.mxu0 %v3130
    %4168 = vmatprep.subr.bf16.mxu0 %v3134
    %4169 = vmatpush1.bf16.msra.mxu0 %v3133
    %4170 = vmatprep.subr.bf16.mxu0 %v3137
    %4171 = vmatpush1.bf16.msra.mxu0 %v3136
    %4172 = vmatprep.subr.bf16.mxu0 %v3140
    %4173 = vmatpush1.bf16.msra.mxu0 %v3139
    %4174 = vmatprep.subr.bf16.mxu0 %v3143
    %4175 = vmatpush1.bf16.msra.mxu0 %v3142
    %4176 = vmatprep.subr.bf16.mxu0 %v3146
    %4177 = vmatpush1.bf16.msra.mxu0 %v3145
    %4178 = vmatprep.subr.bf16.mxu0 %v3149
    %4179 = vmatpush1.bf16.msra.mxu0 %v3148
    %4180 = vmatprep.subr.bf16.mxu0 %v3152
    %4181 = vmatpush1.bf16.msra.mxu0 %v3151
    %4182 = vmatprep.subr.bf16.mxu0 %v3155
    %4183 = vmatpush1.bf16.msra.mxu0 %v3154
    %4184 = vmatprep.subr.bf16.mxu0 %v3158
    %4185 = vmatpush1.bf16.msra.mxu0 %v3157
    %4186 = vmatprep.subr.bf16.mxu0 %v3161
    %4187 = vmatpush1.bf16.msra.mxu0 %v3160
    %4188 = vmatprep.subr.bf16.mxu0 %v3164
    %4189 = vmatpush1.bf16.msra.mxu0 %v3163
    %4190 = vmatprep.subr.bf16.mxu0 %v3167
    %4191 = vmatpush1.bf16.msra.mxu0 %v3166
    %4192 = vmatprep.subr.bf16.mxu0 %v3170
    %4193 = vmatpush1.bf16.msra.mxu0 %v3169
    %4194 = vmatprep.subr.bf16.mxu0 %v3173
    %4195 = vmatpush1.bf16.msra.mxu0 %v3172
    %4196 = vmatprep.mubr.bf16.mxu0 %v147
    %4197 = vmatmul.mubr.bf16.gmra.mrb[0].mxu0 %v146
    %v4198 = vpop.f32.mrb[0].mxu0
    %v4199 = vadd.f32 %v4158, %v4198
    %v4200 = vpop.f32.mrb[0].mxu0
    %v4201 = vadd.f32 %v4160, %v4200
    %v4202 = vpop.f32.mrb[0].mxu0
    %v4203 = vpop.f32.mrb[0].mxu0
    %4204 = vdwg.mxu0
    %4205 = vmatprep.subr.bf16.mxu0 %v3176
    %4206 = vmatpush1.bf16.msra.mxu0 %v3175
    %4207 = vmatprep.subr.bf16.mxu0 %v3179
    %4208 = vmatpush1.bf16.msra.mxu0 %v3178
    %4209 = vmatprep.subr.bf16.mxu0 %v3182
    %4210 = vmatpush1.bf16.msra.mxu0 %v3181
    %4211 = vmatprep.subr.bf16.mxu0 %v3185
    %4212 = vmatpush1.bf16.msra.mxu0 %v3184
    %4213 = vmatprep.subr.bf16.mxu0 %v3188
    %4214 = vmatpush1.bf16.msra.mxu0 %v3187
    %4215 = vmatprep.subr.bf16.mxu0 %v3191
    %4216 = vmatpush1.bf16.msra.mxu0 %v3190
    %4217 = vmatprep.subr.bf16.mxu0 %v3194
    %4218 = vmatpush1.bf16.msra.mxu0 %v3193
    %4219 = vmatprep.subr.bf16.mxu0 %v3197
    %4220 = vmatpush1.bf16.msra.mxu0 %v3196
    %4221 = vmatprep.subr.bf16.mxu0 %v3200
    %4222 = vmatpush1.bf16.msra.mxu0 %v3199
    %4223 = vmatprep.subr.bf16.mxu0 %v3203
    %4224 = vmatpush1.bf16.msra.mxu0 %v3202
    %4225 = vmatprep.subr.bf16.mxu0 %v3206
    %4226 = vmatpush1.bf16.msra.mxu0 %v3205
    %4227 = vmatprep.subr.bf16.mxu0 %v3209
    %4228 = vmatpush1.bf16.msra.mxu0 %v3208
    %4229 = vmatprep.subr.bf16.mxu0 %v3212
    %4230 = vmatpush1.bf16.msra.mxu0 %v3211
    %4231 = vmatprep.subr.bf16.mxu0 %v3215
    %4232 = vmatpush1.bf16.msra.mxu0 %v3214
    %4233 = vmatprep.subr.bf16.mxu0 %v3218
    %4234 = vmatpush1.bf16.msra.mxu0 %v3217
    %4235 = vmatprep.subr.bf16.mxu0 %v3221
    %4236 = vmatpush1.bf16.msra.mxu0 %v3220
    %4237 = vmatprep.mubr.bf16.mxu0 %v149
    %4238 = vmatmul.mubr.bf16.gmra.mrb[0].mxu0 %v148
    %v4239 = vpop.f32.mrb[0].mxu0
    %v4240 = vadd.f32 %v4199, %v4239
    %v4241 = vpop.f32.mrb[0].mxu0
    %v4242 = vadd.f32 %v4201, %v4241
    %v4243 = vpop.f32.mrb[0].mxu0
    %v4244 = vpop.f32.mrb[0].mxu0
    %4245 = vdwg.mxu0
    %4246 = vmatprep.subr.bf16.mxu0 %v3224
    %4247 = vmatpush1.bf16.msra.mxu0 %v3223
    %4248 = vmatprep.subr.bf16.mxu0 %v3227
    %4249 = vmatpush1.bf16.msra.mxu0 %v3226
    %4250 = vmatprep.subr.bf16.mxu0 %v3230
    %4251 = vmatpush1.bf16.msra.mxu0 %v3229
    %4252 = vmatprep.subr.bf16.mxu0 %v3233
    %4253 = vmatpush1.bf16.msra.mxu0 %v3232
    %4254 = vmatprep.subr.bf16.mxu0 %v3790
    %4255 = vmatpush1.bf16.msra.mxu0 %v3787
    %4256 = vmatprep.subr.bf16.mxu0 0
    %4257 = vmatpush1.bf16.msra.mxu0 0
    %4258 = vmatprep.subr.bf16.mxu0 0
    %4259 = vmatpush1.bf16.msra.mxu0 0
    %4260 = vmatprep.subr.bf16.mxu0 0
    %4261 = vmatpush1.bf16.msra.mxu0 0
    %4262 = vmatprep.subr.bf16.mxu0 0
    %4263 = vmatpush1.bf16.msra.mxu0 0
    %4264 = vmatprep.subr.bf16.mxu0 0
    %4265 = vmatpush1.bf16.msra.mxu0 0
    %4266 = vmatprep.subr.bf16.mxu0 0
    %4267 = vmatpush1.bf16.msra.mxu0 0
    %4268 = vmatprep.subr.bf16.mxu0 0
    %4269 = vmatpush1.bf16.msra.mxu0 0
    %4270 = vmatprep.subr.bf16.mxu0 0
    %4271 = vmatpush1.bf16.msra.mxu0 0
    %4272 = vmatprep.subr.bf16.mxu0 0
    %4273 = vmatpush1.bf16.msra.mxu0 0
    %4274 = vmatprep.subr.bf16.mxu0 0
    %4275 = vmatpush1.bf16.msra.mxu0 0
    %4276 = vmatprep.subr.bf16.mxu0 0
    %4277 = vmatpush1.bf16.msra.mxu0 0
    %4278 = vmatprep.mubr.bf16.mxu0 0
    %4279 = vmatmul.mubr.bf16.gmra.mrb[0].mxu0 %v3780
    %v4280 = vpop.f32.mrb[0].mxu0
    %v4281 = vadd.f32 %v4240, %v4280
    %v4282 = vpop.f32.mrb[0].mxu0
    %v4283 = vadd.f32 %v4242, %v4282
    %v4284 = vpop.f32.mrb[0].mxu0
    %v4285 = vpop.f32.mrb[0].mxu0
    %4286 = vdwg.mxu0
    %4287 = vmatprep.subr.bf16.mxu0 0
    %4288 = vmatpush1.bf16.msra.mxu0 %v2697
    %4289 = vmatprep.subr.bf16.mxu0 0
    %4290 = vmatpush1.bf16.msra.mxu0 %v2700
    %4291 = vmatprep.subr.bf16.mxu0 0
    %4292 = vmatpush1.bf16.msra.mxu0 %v2703
    %4293 = vmatprep.subr.bf16.mxu0 0
    %4294 = vmatpush1.bf16.msra.mxu0 %v2706
    %4295 = vmatprep.subr.bf16.mxu0 0
    %4296 = vmatpush1.bf16.msra.mxu0 %v2709
    %4297 = vmatprep.subr.bf16.mxu0 0
    %4298 = vmatpush1.bf16.msra.mxu0 %v2712
    %4299 = vmatprep.subr.bf16.mxu0 0
    %4300 = vmatpush1.bf16.msra.mxu0 %v2715
    %4301 = vmatprep.subr.bf16.mxu0 0
    %4302 = vmatpush1.bf16.msra.mxu0 %v2718
    %4303 = vmatprep.subr.bf16.mxu0 0
    %4304 = vmatpush1.bf16.msra.mxu0 %v2721
    %4305 = vmatprep.subr.bf16.mxu0 0
    %4306 = vmatpush1.bf16.msra.mxu0 %v2724
    %4307 = vmatprep.subr.bf16.mxu0 0
    %4308 = vmatpush1.bf16.msra.mxu0 %v2727
    %4309 = vmatprep.subr.bf16.mxu0 0
    %4310 = vmatpush1.bf16.msra.mxu0 %v2730
    %4311 = vmatprep.subr.bf16.mxu0 0
    %4312 = vmatpush1.bf16.msra.mxu0 %v2733
    %4313 = vmatprep.subr.bf16.mxu0 0
    %4314 = vmatpush1.bf16.msra.mxu0 %v2736
    %4315 = vmatprep.subr.bf16.mxu0 0
    %4316 = vmatpush1.bf16.msra.mxu0 %v2739
    %4317 = vmatprep.subr.bf16.mxu0 0
    %4318 = vmatpush1.bf16.msra.mxu0 %v2742
    %4319 = vmatprep.mubr.bf16.mxu0 %v129
    %4320 = vmatmul.mubr.bf16.gmra.mrb[0].mxu0 %v128
    %v4321 = vpop.f32.mrb[0].mxu0
    %v4322 = vadd.f32 %v886, %v4321
    %v4323 = vpop.f32.mrb[0].mxu0
    %v4324 = vpop.f32.mrb[0].mxu0
    %v4325 = vpop.f32.mrb[0].mxu0
    %4326 = vdwg.mxu0
    %4327 = vmatprep.subr.bf16.mxu0 0
    %4328 = vmatpush1.bf16.msra.mxu0 %v2745
    %4329 = vmatprep.subr.bf16.mxu0 0
    %4330 = vmatpush1.bf16.msra.mxu0 %v2748
    %4331 = vmatprep.subr.bf16.mxu0 0
    %4332 = vmatpush1.bf16.msra.mxu0 %v2751
    %4333 = vmatprep.subr.bf16.mxu0 0
    %4334 = vmatpush1.bf16.msra.mxu0 %v2754
    %4335 = vmatprep.subr.bf16.mxu0 0
    %4336 = vmatpush1.bf16.msra.mxu0 %v2757
    %4337 = vmatprep.subr.bf16.mxu0 0
    %4338 = vmatpush1.bf16.msra.mxu0 %v2760
    %4339 = vmatprep.subr.bf16.mxu0 0
    %4340 = vmatpush1.bf16.msra.mxu0 %v2763
    %4341 = vmatprep.subr.bf16.mxu0 0
    %4342 = vmatpush1.bf16.msra.mxu0 %v2766
    %4343 = vmatprep.subr.bf16.mxu0 0
    %4344 = vmatpush1.bf16.msra.mxu0 %v2769
    %4345 = vmatprep.subr.bf16.mxu0 0
    %4346 = vmatpush1.bf16.msra.mxu0 %v2772
    %4347 = vmatprep.subr.bf16.mxu0 0
    %4348 = vmatpush1.bf16.msra.mxu0 %v2775
    %4349 = vmatprep.subr.bf16.mxu0 0
    %4350 = vmatpush1.bf16.msra.mxu0 %v2778
    %4351 = vmatprep.subr.bf16.mxu0 0
    %4352 = vmatpush1.bf16.msra.mxu0 %v2781
    %4353 = vmatprep.subr.bf16.mxu0 0
    %4354 = vmatpush1.bf16.msra.mxu0 %v2784
    %4355 = vmatprep.subr.bf16.mxu0 0
    %4356 = vmatpush1.bf16.msra.mxu0 %v2787
    %4357 = vmatprep.subr.bf16.mxu0 0
    %4358 = vmatpush1.bf16.msra.mxu0 %v2790
    %4359 = vmatprep.mubr.bf16.mxu0 %v131
    %4360 = vmatmul.mubr.bf16.gmra.mrb[0].mxu0 %v130
    %v4361 = vpop.f32.mrb[0].mxu0
    %v4362 = vadd.f32 %v4322, %v4361
    %v4363 = vpop.f32.mrb[0].mxu0
    %v4364 = vpop.f32.mrb[0].mxu0
    %v4365 = vpop.f32.mrb[0].mxu0
    %4366 = vdwg.mxu0
    %4367 = vmatprep.subr.bf16.mxu0 0
    %4368 = vmatpush1.bf16.msra.mxu0 %v2793
    %4369 = vmatprep.subr.bf16.mxu0 0
    %4370 = vmatpush1.bf16.msra.mxu0 %v2796
    %4371 = vmatprep.subr.bf16.mxu0 0
    %4372 = vmatpush1.bf16.msra.mxu0 %v2799
    %4373 = vmatprep.subr.bf16.mxu0 0
    %4374 = vmatpush1.bf16.msra.mxu0 %v2802
    %4375 = vmatprep.subr.bf16.mxu0 0
    %4376 = vmatpush1.bf16.msra.mxu0 %v2805
    %4377 = vmatprep.subr.bf16.mxu0 0
    %4378 = vmatpush1.bf16.msra.mxu0 %v2808
    %4379 = vmatprep.subr.bf16.mxu0 0
    %4380 = vmatpush1.bf16.msra.mxu0 %v2811
    %4381 = vmatprep.subr.bf16.mxu0 0
    %4382 = vmatpush1.bf16.msra.mxu0 %v2814
    %4383 = vmatprep.subr.bf16.mxu0 0
    %4384 = vmatpush1.bf16.msra.mxu0 %v2817
    %4385 = vmatprep.subr.bf16.mxu0 0
    %4386 = vmatpush1.bf16.msra.mxu0 %v2820
    %4387 = vmatprep.subr.bf16.mxu0 0
    %4388 = vmatpush1.bf16.msra.mxu0 %v2823
    %4389 = vmatprep.subr.bf16.mxu0 0
    %4390 = vmatpush1.bf16.msra.mxu0 %v2826
    %4391 = vmatprep.subr.bf16.mxu0 0
    %4392 = vmatpush1.bf16.msra.mxu0 %v2829
    %4393 = vmatprep.subr.bf16.mxu0 0
    %4394 = vmatpush1.bf16.msra.mxu0 %v2832
    %4395 = vmatprep.subr.bf16.mxu0 0
    %4396 = vmatpush1.bf16.msra.mxu0 %v2835
    %4397 = vmatprep.subr.bf16.mxu0 0
    %4398 = vmatpush1.bf16.msra.mxu0 %v2838
    %4399 = vmatprep.mubr.bf16.mxu0 %v133
    %4400 = vmatmul.mubr.bf16.gmra.mrb[0].mxu0 %v132
    %v4401 = vpop.f32.mrb[0].mxu0
    %v4402 = vadd.f32 %v4362, %v4401
    %v4403 = vpop.f32.mrb[0].mxu0
    %v4404 = vpop.f32.mrb[0].mxu0
    %v4405 = vpop.f32.mrb[0].mxu0
    %4406 = vdwg.mxu0
    %4407 = vmatprep.subr.bf16.mxu0 0
    %4408 = vmatpush1.bf16.msra.mxu0 %v2841
    %4409 = vmatprep.subr.bf16.mxu0 0
    %4410 = vmatpush1.bf16.msra.mxu0 %v2844
    %4411 = vmatprep.subr.bf16.mxu0 0
    %4412 = vmatpush1.bf16.msra.mxu0 %v2847
    %4413 = vmatprep.subr.bf16.mxu0 0
    %4414 = vmatpush1.bf16.msra.mxu0 %v2850
    %4415 = vmatprep.subr.bf16.mxu0 0
    %4416 = vmatpush1.bf16.msra.mxu0 %v2853
    %4417 = vmatprep.subr.bf16.mxu0 0
    %4418 = vmatpush1.bf16.msra.mxu0 %v2856
    %4419 = vmatprep.subr.bf16.mxu0 0
    %4420 = vmatpush1.bf16.msra.mxu0 %v2859
    %4421 = vmatprep.subr.bf16.mxu0 0
    %4422 = vmatpush1.bf16.msra.mxu0 %v2862
    %4423 = vmatprep.subr.bf16.mxu0 0
    %4424 = vmatpush1.bf16.msra.mxu0 %v2865
    %4425 = vmatprep.subr.bf16.mxu0 0
    %4426 = vmatpush1.bf16.msra.mxu0 %v2868
    %4427 = vmatprep.subr.bf16.mxu0 0
    %4428 = vmatpush1.bf16.msra.mxu0 %v2871
    %4429 = vmatprep.subr.bf16.mxu0 0
    %4430 = vmatpush1.bf16.msra.mxu0 %v2874
    %4431 = vmatprep.subr.bf16.mxu0 0
    %4432 = vmatpush1.bf16.msra.mxu0 %v2877
    %4433 = vmatprep.subr.bf16.mxu0 0
    %4434 = vmatpush1.bf16.msra.mxu0 %v2880
    %4435 = vmatprep.subr.bf16.mxu0 0
    %4436 = vmatpush1.bf16.msra.mxu0 %v2883
    %4437 = vmatprep.subr.bf16.mxu0 0
    %4438 = vmatpush1.bf16.msra.mxu0 %v2886
    %4439 = vmatprep.mubr.bf16.mxu0 %v135
    %4440 = vmatmul.mubr.bf16.gmra.mrb[0].mxu0 %v134
    %v4441 = vpop.f32.mrb[0].mxu0
    %v4442 = vadd.f32 %v4402, %v4441
    %v4443 = vpop.f32.mrb[0].mxu0
    %v4444 = vpop.f32.mrb[0].mxu0
    %v4445 = vpop.f32.mrb[0].mxu0
    %4446 = vdwg.mxu0
    %4447 = vmatprep.subr.bf16.mxu0 0
    %4448 = vmatpush1.bf16.msra.mxu0 %v2889
    %4449 = vmatprep.subr.bf16.mxu0 0
    %4450 = vmatpush1.bf16.msra.mxu0 %v2892
    %4451 = vmatprep.subr.bf16.mxu0 0
    %4452 = vmatpush1.bf16.msra.mxu0 %v2895
    %4453 = vmatprep.subr.bf16.mxu0 0
    %4454 = vmatpush1.bf16.msra.mxu0 %v2898
    %4455 = vmatprep.subr.bf16.mxu0 0
    %4456 = vmatpush1.bf16.msra.mxu0 %v2901
    %4457 = vmatprep.subr.bf16.mxu0 0
    %4458 = vmatpush1.bf16.msra.mxu0 %v2904
    %4459 = vmatprep.subr.bf16.mxu0 0
    %4460 = vmatpush1.bf16.msra.mxu0 %v2907
    %4461 = vmatprep.subr.bf16.mxu0 0
    %4462 = vmatpush1.bf16.msra.mxu0 %v2910
    %4463 = vmatprep.subr.bf16.mxu0 0
    %4464 = vmatpush1.bf16.msra.mxu0 %v2913
    %4465 = vmatprep.subr.bf16.mxu0 0
    %4466 = vmatpush1.bf16.msra.mxu0 %v2916
    %4467 = vmatprep.subr.bf16.mxu0 0
    %4468 = vmatpush1.bf16.msra.mxu0 %v2919
    %4469 = vmatprep.subr.bf16.mxu0 0
    %4470 = vmatpush1.bf16.msra.mxu0 %v2922
    %4471 = vmatprep.subr.bf16.mxu0 0
    %4472 = vmatpush1.bf16.msra.mxu0 %v2925
    %4473 = vmatprep.subr.bf16.mxu0 0
    %4474 = vmatpush1.bf16.msra.mxu0 %v2928
    %4475 = vmatprep.subr.bf16.mxu0 0
    %4476 = vmatpush1.bf16.msra.mxu0 %v2931
    %4477 = vmatprep.subr.bf16.mxu0 0
    %4478 = vmatpush1.bf16.msra.mxu0 %v2934
    %4479 = vmatprep.mubr.bf16.mxu0 %v137
    %4480 = vmatmul.mubr.bf16.gmra.mrb[0].mxu0 %v136
    %v4481 = vpop.f32.mrb[0].mxu0
    %v4482 = vadd.f32 %v4442, %v4481
    %v4483 = vpop.f32.mrb[0].mxu0
    %v4484 = vpop.f32.mrb[0].mxu0
    %v4485 = vpop.f32.mrb[0].mxu0
    %4486 = vdwg.mxu0
    %4487 = vmatprep.subr.bf16.mxu0 0
    %4488 = vmatpush1.bf16.msra.mxu0 %v2937
    %4489 = vmatprep.subr.bf16.mxu0 0
    %4490 = vmatpush1.bf16.msra.mxu0 %v2940
    %4491 = vmatprep.subr.bf16.mxu0 0
    %4492 = vmatpush1.bf16.msra.mxu0 %v2943
    %4493 = vmatprep.subr.bf16.mxu0 0
    %4494 = vmatpush1.bf16.msra.mxu0 %v2946
    %4495 = vmatprep.subr.bf16.mxu0 0
    %4496 = vmatpush1.bf16.msra.mxu0 %v2949
    %4497 = vmatprep.subr.bf16.mxu0 0
    %4498 = vmatpush1.bf16.msra.mxu0 %v2952
    %4499 = vmatprep.subr.bf16.mxu0 0
    %4500 = vmatpush1.bf16.msra.mxu0 %v2955
    %4501 = vmatprep.subr.bf16.mxu0 0
    %4502 = vmatpush1.bf16.msra.mxu0 %v2958
    %4503 = vmatprep.subr.bf16.mxu0 0
    %4504 = vmatpush1.bf16.msra.mxu0 %v2961
    %4505 = vmatprep.subr.bf16.mxu0 0
    %4506 = vmatpush1.bf16.msra.mxu0 %v2964
    %4507 = vmatprep.subr.bf16.mxu0 0
    %4508 = vmatpush1.bf16.msra.mxu0 %v2967
    %4509 = vmatprep.subr.bf16.mxu0 0
    %4510 = vmatpush1.bf16.msra.mxu0 %v2970
    %4511 = vmatprep.subr.bf16.mxu0 0
    %4512 = vmatpush1.bf16.msra.mxu0 %v2973
    %4513 = vmatprep.subr.bf16.mxu0 0
    %4514 = vmatpush1.bf16.msra.mxu0 %v2976
    %4515 = vmatprep.subr.bf16.mxu0 0
    %4516 = vmatpush1.bf16.msra.mxu0 %v2979
    %4517 = vmatprep.subr.bf16.mxu0 0
    %4518 = vmatpush1.bf16.msra.mxu0 %v2982
    %4519 = vmatprep.mubr.bf16.mxu0 %v139
    %4520 = vmatmul.mubr.bf16.gmra.mrb[0].mxu0 %v138
    %v4521 = vpop.f32.mrb[0].mxu0
    %v4522 = vadd.f32 %v4482, %v4521
    %v4523 = vpop.f32.mrb[0].mxu0
    %v4524 = vpop.f32.mrb[0].mxu0
    %v4525 = vpop.f32.mrb[0].mxu0
    %4526 = vdwg.mxu0
    %4527 = vmatprep.subr.bf16.mxu0 0
    %4528 = vmatpush1.bf16.msra.mxu0 %v2985
    %4529 = vmatprep.subr.bf16.mxu0 0
    %4530 = vmatpush1.bf16.msra.mxu0 %v2988
    %4531 = vmatprep.subr.bf16.mxu0 0
    %4532 = vmatpush1.bf16.msra.mxu0 %v2991
    %4533 = vmatprep.subr.bf16.mxu0 0
    %4534 = vmatpush1.bf16.msra.mxu0 %v2994
    %4535 = vmatprep.subr.bf16.mxu0 0
    %4536 = vmatpush1.bf16.msra.mxu0 %v2997
    %4537 = vmatprep.subr.bf16.mxu0 0
    %4538 = vmatpush1.bf16.msra.mxu0 %v3000
    %4539 = vmatprep.subr.bf16.mxu0 0
    %4540 = vmatpush1.bf16.msra.mxu0 %v3003
    %4541 = vmatprep.subr.bf16.mxu0 0
    %4542 = vmatpush1.bf16.msra.mxu0 %v3006
    %4543 = vmatprep.subr.bf16.mxu0 0
    %4544 = vmatpush1.bf16.msra.mxu0 %v3009
    %4545 = vmatprep.subr.bf16.mxu0 0
    %4546 = vmatpush1.bf16.msra.mxu0 %v3012
    %4547 = vmatprep.subr.bf16.mxu0 0
    %4548 = vmatpush1.bf16.msra.mxu0 %v3015
    %4549 = vmatprep.subr.bf16.mxu0 0
    %4550 = vmatpush1.bf16.msra.mxu0 %v3018
    %4551 = vmatprep.subr.bf16.mxu0 0
    %4552 = vmatpush1.bf16.msra.mxu0 %v3021
    %4553 = vmatprep.subr.bf16.mxu0 0
    %4554 = vmatpush1.bf16.msra.mxu0 %v3024
    %4555 = vmatprep.subr.bf16.mxu0 0
    %4556 = vmatpush1.bf16.msra.mxu0 %v3027
    %4557 = vmatprep.subr.bf16.mxu0 0
    %4558 = vmatpush1.bf16.msra.mxu0 %v3030
    %4559 = vmatprep.mubr.bf16.mxu0 %v141
    %4560 = vmatmul.mubr.bf16.gmra.mrb[0].mxu0 %v140
    %v4561 = vpop.f32.mrb[0].mxu0
    %v4562 = vadd.f32 %v4522, %v4561
    %v4563 = vpop.f32.mrb[0].mxu0
    %v4564 = vpop.f32.mrb[0].mxu0
    %v4565 = vpop.f32.mrb[0].mxu0
    %4566 = vdwg.mxu0
    %4567 = vmatprep.subr.bf16.mxu0 0
    %4568 = vmatpush1.bf16.msra.mxu0 %v3033
    %4569 = vmatprep.subr.bf16.mxu0 0
    %4570 = vmatpush1.bf16.msra.mxu0 %v3036
    %4571 = vmatprep.subr.bf16.mxu0 0
    %4572 = vmatpush1.bf16.msra.mxu0 %v3039
    %4573 = vmatprep.subr.bf16.mxu0 0
    %4574 = vmatpush1.bf16.msra.mxu0 %v3042
    %4575 = vmatprep.subr.bf16.mxu0 0
    %4576 = vmatpush1.bf16.msra.mxu0 %v3045
    %4577 = vmatprep.subr.bf16.mxu0 0
    %4578 = vmatpush1.bf16.msra.mxu0 %v3048
    %4579 = vmatprep.subr.bf16.mxu0 0
    %4580 = vmatpush1.bf16.msra.mxu0 %v3051
    %4581 = vmatprep.subr.bf16.mxu0 0
    %4582 = vmatpush1.bf16.msra.mxu0 %v3054
    %4583 = vmatprep.subr.bf16.mxu0 0
    %4584 = vmatpush1.bf16.msra.mxu0 %v3057
    %4585 = vmatprep.subr.bf16.mxu0 0
    %4586 = vmatpush1.bf16.msra.mxu0 %v3060
    %4587 = vmatprep.subr.bf16.mxu0 0
    %4588 = vmatpush1.bf16.msra.mxu0 %v3063
    %4589 = vmatprep.subr.bf16.mxu0 0
    %4590 = vmatpush1.bf16.msra.mxu0 %v3066
    %4591 = vmatprep.subr.bf16.mxu0 0
    %4592 = vmatpush1.bf16.msra.mxu0 %v3069
    %4593 = vmatprep.subr.bf16.mxu0 0
    %4594 = vmatpush1.bf16.msra.mxu0 %v3072
    %4595 = vmatprep.subr.bf16.mxu0 0
    %4596 = vmatpush1.bf16.msra.mxu0 %v3075
    %4597 = vmatprep.subr.bf16.mxu0 0
    %4598 = vmatpush1.bf16.msra.mxu0 %v3078
    %4599 = vmatprep.mubr.bf16.mxu0 %v143
    %4600 = vmatmul.mubr.bf16.gmra.mrb[0].mxu0 %v142
    %v4601 = vpop.f32.mrb[0].mxu0
    %v4602 = vadd.f32 %v4562, %v4601
    %v4603 = vpop.f32.mrb[0].mxu0
    %v4604 = vpop.f32.mrb[0].mxu0
    %v4605 = vpop.f32.mrb[0].mxu0
    %4606 = vdwg.mxu0
    %4607 = vmatprep.subr.bf16.mxu0 0
    %4608 = vmatpush1.bf16.msra.mxu0 %v3081
    %4609 = vmatprep.subr.bf16.mxu0 0
    %4610 = vmatpush1.bf16.msra.mxu0 %v3084
    %4611 = vmatprep.subr.bf16.mxu0 0
    %4612 = vmatpush1.bf16.msra.mxu0 %v3087
    %4613 = vmatprep.subr.bf16.mxu0 0
    %4614 = vmatpush1.bf16.msra.mxu0 %v3090
    %4615 = vmatprep.subr.bf16.mxu0 0
    %4616 = vmatpush1.bf16.msra.mxu0 %v3093
    %4617 = vmatprep.subr.bf16.mxu0 0
    %4618 = vmatpush1.bf16.msra.mxu0 %v3096
    %4619 = vmatprep.subr.bf16.mxu0 0
    %4620 = vmatpush1.bf16.msra.mxu0 %v3099
    %4621 = vmatprep.subr.bf16.mxu0 0
    %4622 = vmatpush1.bf16.msra.mxu0 %v3102
    %4623 = vmatprep.subr.bf16.mxu0 0
    %4624 = vmatpush1.bf16.msra.mxu0 %v3105
    %4625 = vmatprep.subr.bf16.mxu0 0
    %4626 = vmatpush1.bf16.msra.mxu0 %v3108
    %4627 = vmatprep.subr.bf16.mxu0 0
    %4628 = vmatpush1.bf16.msra.mxu0 %v3111
    %4629 = vmatprep.subr.bf16.mxu0 0
    %4630 = vmatpush1.bf16.msra.mxu0 %v3114
    %4631 = vmatprep.subr.bf16.mxu0 0
    %4632 = vmatpush1.bf16.msra.mxu0 %v3117
    %4633 = vmatprep.subr.bf16.mxu0 0
    %4634 = vmatpush1.bf16.msra.mxu0 %v3120
    %4635 = vmatprep.subr.bf16.mxu0 0
    %4636 = vmatpush1.bf16.msra.mxu0 %v3123
    %4637 = vmatprep.subr.bf16.mxu0 0
    %4638 = vmatpush1.bf16.msra.mxu0 %v3126
    %4639 = vmatprep.mubr.bf16.mxu0 %v145
    %4640 = vmatmul.mubr.bf16.gmra.mrb[0].mxu0 %v144
    %v4641 = vpop.f32.mrb[0].mxu0
    %v4642 = vadd.f32 %v4602, %v4641
    %v4643 = vpop.f32.mrb[0].mxu0
    %v4644 = vpop.f32.mrb[0].mxu0
    %v4645 = vpop.f32.mrb[0].mxu0
    %4646 = vdwg.mxu0
    %4647 = vmatprep.subr.bf16.mxu0 0
    %4648 = vmatpush1.bf16.msra.mxu0 %v3129
    %4649 = vmatprep.subr.bf16.mxu0 0
    %4650 = vmatpush1.bf16.msra.mxu0 %v3132
    %4651 = vmatprep.subr.bf16.mxu0 0
    %4652 = vmatpush1.bf16.msra.mxu0 %v3135
    %4653 = vmatprep.subr.bf16.mxu0 0
    %4654 = vmatpush1.bf16.msra.mxu0 %v3138
    %4655 = vmatprep.subr.bf16.mxu0 0
    %4656 = vmatpush1.bf16.msra.mxu0 %v3141
    %4657 = vmatprep.subr.bf16.mxu0 0
    %4658 = vmatpush1.bf16.msra.mxu0 %v3144
    %4659 = vmatprep.subr.bf16.mxu0 0
    %4660 = vmatpush1.bf16.msra.mxu0 %v3147
    %4661 = vmatprep.subr.bf16.mxu0 0
    %4662 = vmatpush1.bf16.msra.mxu0 %v3150
    %4663 = vmatprep.subr.bf16.mxu0 0
    %4664 = vmatpush1.bf16.msra.mxu0 %v3153
    %4665 = vmatprep.subr.bf16.mxu0 0
    %4666 = vmatpush1.bf16.msra.mxu0 %v3156
    %4667 = vmatprep.subr.bf16.mxu0 0
    %4668 = vmatpush1.bf16.msra.mxu0 %v3159
    %4669 = vmatprep.subr.bf16.mxu0 0
    %4670 = vmatpush1.bf16.msra.mxu0 %v3162
    %4671 = vmatprep.subr.bf16.mxu0 0
    %4672 = vmatpush1.bf16.msra.mxu0 %v3165
    %4673 = vmatprep.subr.bf16.mxu0 0
    %4674 = vmatpush1.bf16.msra.mxu0 %v3168
    %4675 = vmatprep.subr.bf16.mxu0 0
    %4676 = vmatpush1.bf16.msra.mxu0 %v3171
    %4677 = vmatprep.subr.bf16.mxu0 0
    %4678 = vmatpush1.bf16.msra.mxu0 %v3174
    %4679 = vmatprep.mubr.bf16.mxu0 %v147
    %4680 = vmatmul.mubr.bf16.gmra.mrb[0].mxu0 %v146
    %v4681 = vpop.f32.mrb[0].mxu0
    %v4682 = vadd.f32 %v4642, %v4681
    %v4683 = vpop.f32.mrb[0].mxu0
    %v4684 = vpop.f32.mrb[0].mxu0
    %v4685 = vpop.f32.mrb[0].mxu0
    %4686 = vdwg.mxu0
    %4687 = vmatprep.subr.bf16.mxu0 0
    %4688 = vmatpush1.bf16.msra.mxu0 %v3177
    %4689 = vmatprep.subr.bf16.mxu0 0
    %4690 = vmatpush1.bf16.msra.mxu0 %v3180
    %4691 = vmatprep.subr.bf16.mxu0 0
    %4692 = vmatpush1.bf16.msra.mxu0 %v3183
    %4693 = vmatprep.subr.bf16.mxu0 0
    %4694 = vmatpush1.bf16.msra.mxu0 %v3186
    %4695 = vmatprep.subr.bf16.mxu0 0
    %4696 = vmatpush1.bf16.msra.mxu0 %v3189
    %4697 = vmatprep.subr.bf16.mxu0 0
    %4698 = vmatpush1.bf16.msra.mxu0 %v3192
    %4699 = vmatprep.subr.bf16.mxu0 0
    %4700 = vmatpush1.bf16.msra.mxu0 %v3195
    %4701 = vmatprep.subr.bf16.mxu0 0
    %4702 = vmatpush1.bf16.msra.mxu0 %v3198
    %4703 = vmatprep.subr.bf16.mxu0 0
    %4704 = vmatpush1.bf16.msra.mxu0 %v3201
    %4705 = vmatprep.subr.bf16.mxu0 0
    %4706 = vmatpush1.bf16.msra.mxu0 %v3204
    %4707 = vmatprep.subr.bf16.mxu0 0
    %4708 = vmatpush1.bf16.msra.mxu0 %v3207
    %4709 = vmatprep.subr.bf16.mxu0 0
    %4710 = vmatpush1.bf16.msra.mxu0 %v3210
    %4711 = vmatprep.subr.bf16.mxu0 0
    %4712 = vmatpush1.bf16.msra.mxu0 %v3213
    %4713 = vmatprep.subr.bf16.mxu0 0
    %4714 = vmatpush1.bf16.msra.mxu0 %v3216
    %4715 = vmatprep.subr.bf16.mxu0 0
    %4716 = vmatpush1.bf16.msra.mxu0 %v3219
    %4717 = vmatprep.subr.bf16.mxu0 0
    %4718 = vmatpush1.bf16.msra.mxu0 %v3222
    %4719 = vmatprep.mubr.bf16.mxu0 %v149
    %4720 = vmatmul.mubr.bf16.gmra.mrb[0].mxu0 %v148
    %v4721 = vpop.f32.mrb[0].mxu0
    %v4722 = vadd.f32 %v4682, %v4721
    %v4723 = vpop.f32.mrb[0].mxu0
    %v4724 = vpop.f32.mrb[0].mxu0
    %v4725 = vpop.f32.mrb[0].mxu0
    %4726 = vdwg.mxu0
    %4727 = vmatprep.subr.bf16.mxu0 0
    %4728 = vmatpush1.bf16.msra.mxu0 %v3225
    %4729 = vmatprep.subr.bf16.mxu0 0
    %4730 = vmatpush1.bf16.msra.mxu0 %v3228
    %4731 = vmatprep.subr.bf16.mxu0 0
    %4732 = vmatpush1.bf16.msra.mxu0 %v3231
    %4733 = vmatprep.subr.bf16.mxu0 0
    %4734 = vmatpush1.bf16.msra.mxu0 %v3234
    %4735 = vmatprep.subr.bf16.mxu0 0
    %4736 = vmatpush1.bf16.msra.mxu0 %v3793
    %4737 = vmatprep.subr.bf16.mxu0 0
    %4738 = vmatpush1.bf16.msra.mxu0 0
    %4739 = vmatprep.subr.bf16.mxu0 0
    %4740 = vmatpush1.bf16.msra.mxu0 0
    %4741 = vmatprep.subr.bf16.mxu0 0
    %4742 = vmatpush1.bf16.msra.mxu0 0
    %4743 = vmatprep.subr.bf16.mxu0 0
    %4744 = vmatpush1.bf16.msra.mxu0 0
    %4745 = vmatprep.subr.bf16.mxu0 0
    %4746 = vmatpush1.bf16.msra.mxu0 0
    %4747 = vmatprep.subr.bf16.mxu0 0
    %4748 = vmatpush1.bf16.msra.mxu0 0
    %4749 = vmatprep.subr.bf16.mxu0 0
    %4750 = vmatpush1.bf16.msra.mxu0 0
    %4751 = vmatprep.subr.bf16.mxu0 0
    %4752 = vmatpush1.bf16.msra.mxu0 0
    %4753 = vmatprep.subr.bf16.mxu0 0
    %4754 = vmatpush1.bf16.msra.mxu0 0
    %4755 = vmatprep.subr.bf16.mxu0 0
    %4756 = vmatpush1.bf16.msra.mxu0 0
    %4757 = vmatprep.subr.bf16.mxu0 0
    %4758 = vmatpush1.bf16.msra.mxu0 0
    %4759 = vmatprep.mubr.bf16.mxu0 0
    %4760 = vmatmul.mubr.bf16.gmra.mrb[0].mxu0 %v3780
    %v4761 = vpop.f32.mrb[0].mxu0
    %v4762 = vadd.f32 %v4722, %v4761
    %v4763 = vpop.f32.mrb[0].mxu0
    %v4764 = vpop.f32.mrb[0].mxu0
    %v4765 = vpop.f32.mrb[0].mxu0
    %4766 = vdwg.mxu0
    %v4767 = vmax.f32 %v4281, 0.0
    %v4768 = vmax.f32 %v4283, 0.0
    %v4769 = vmax.f32 %v4762, 0.0
    %v4770 = vpack.c.bf16 %v4767, %v4767
    %v4771 = vpack.c.bf16 %v4768, %v4768
    %v4772 = vpack.c.bf16 %v4769, %v4769
    %v4773 = vld [vmem:[#allocation7] sm:$0xf]
    %v4774 = vld [vmem:[#allocation7 + $0x4] sm:$0xf]
    %v4775 = vld [vmem:[#allocation7 + $0x8] sm:$0xf]
    %v4776 = vld [vmem:[#allocation7 + $0xc] sm:$0xf]
    %v4777 = vld [vmem:[#allocation7 + $0x10] sm:$0xf]
    %v4778 = vld [vmem:[#allocation7 + $0x14] sm:$0xf]
    %v4779 = vld [vmem:[#allocation7 + $0x18] sm:$0xf]
    %v4780 = vld [vmem:[#allocation7 + $0x1c] sm:$0xf]
    %v4781 = vld [vmem:[#allocation7 + $0x20] sm:$0xf]
    %v4782 = vld [vmem:[#allocation7 + $0x24] sm:$0xf]
    %v4783 = vld [vmem:[#allocation7 + $0x28] sm:$0xf]
    %v4784 = vld [vmem:[#allocation7 + $0x2c] sm:$0xf]
    %v4785 = vld [vmem:[#allocation7 + $0x30] sm:$0xf]
    %v4786 = vld [vmem:[#allocation7 + $0x34] sm:$0xf]
    %v4787 = vld [vmem:[#allocation7 + $0x38] sm:$0xf]
    %v4788 = vld [vmem:[#allocation7 + $0x3c] sm:$0xf]
    %v4789 = vld [vmem:[#allocation7 + $0x40] sm:$0xf]
    %v4790 = vld [vmem:[#allocation7 + $0x44] sm:$0xf]
    %v4791 = vld [vmem:[#allocation7 + $0x48] sm:$0xf]
    %v4792 = vld [vmem:[#allocation7 + $0x4c] sm:$0xf]
    %v4793 = vld [vmem:[#allocation7 + $0x50] sm:$0xf]
    %v4794 = vld [vmem:[#allocation7 + $0x54] sm:$0xf]
    %v4795 = vld [vmem:[#allocation7 + $0x58] sm:$0xf]
    %v4796 = vld [vmem:[#allocation7 + $0x5c] sm:$0xf]
    %v4797 = vld [vmem:[#allocation7 + $0x60] sm:$0xf]
    %v4798 = vld [vmem:[#allocation7 + $0x64] sm:$0xf]
    %v4799 = vld [vmem:[#allocation7 + $0x68] sm:$0xf]
    %v4800 = vld [vmem:[#allocation7 + $0x6c] sm:$0xf]
    %v4801 = vld [vmem:[#allocation7 + $0x70] sm:$0xf]
    %v4802 = vld [vmem:[#allocation7 + $0x74] sm:$0xf]
    %v4803 = vld [vmem:[#allocation7 + $0x78] sm:$0xf]
    %v4804 = vld [vmem:[#allocation7 + $0x7c] sm:$0xf]
    %v4805 = vld [vmem:[#allocation7 + $0x80] sm:$0xf]
    %v4806 = vld [vmem:[#allocation7 + $0x84] sm:$0xf]
    %v4807 = vld [vmem:[#allocation7 + $0x88] sm:$0xf]
    %v4808 = vld [vmem:[#allocation7 + $0x8c] sm:$0xf]
    %v4809 = vld [vmem:[#allocation7 + $0x90] sm:$0xf]
    %v4810 = vld [vmem:[#allocation7 + $0x94] sm:$0xf]
    %v4811 = vld [vmem:[#allocation7 + $0x98] sm:$0xf]
    %v4812 = vld [vmem:[#allocation7 + $0x9c] sm:$0xf]
    %v4813 = vld [vmem:[#allocation7 + $0xa0] sm:$0xf]
    %v4814 = vld [vmem:[#allocation7 + $0xa4] sm:$0xf]
    %v4815 = vld [vmem:[#allocation7 + $0xa8] sm:$0xf]
    %v4816 = vld [vmem:[#allocation7 + $0xac] sm:$0xf]
    %v4817 = vld [vmem:[#allocation7 + $0xb0] sm:$0xf]
    %v4818 = vld [vmem:[#allocation7 + $0xb4] sm:$0xf]
    %v4819 = vld [vmem:[#allocation7 + $0xb8] sm:$0xf]
    %v4820 = vld [vmem:[#allocation7 + $0xbc] sm:$0xf]
    %v4821 = vld [vmem:[#allocation9] sm:$0x1]
    %v4823 = vlaneseq
    %v4824 = vshrl.u32 %v4823, 7
    %v4825 = vsub.s32 0, %v4824
    %v4826 = vrot.slane %v4821, %v4825
    %v4876 = vunpack.c.l.b16 %v4773
    %v4877 = vunpack.c.l.b16 %v4774
    %v4878 = vunpack.c.l.b16 %v4775
    %v4879 = vunpack.c.l.b16 %v4776
    %v4880 = vunpack.c.l.b16 %v4777
    %v4881 = vunpack.c.l.b16 %v4778
    %v4882 = vunpack.c.l.b16 %v4779
    %v4883 = vunpack.c.l.b16 %v4780
    %v4884 = vunpack.c.l.b16 %v4781
    %v4885 = vunpack.c.l.b16 %v4782
    %v4886 = vunpack.c.l.b16 %v4783
    %v4887 = vunpack.c.l.b16 %v4784
    %v4888 = vunpack.c.l.b16 %v4785
    %v4889 = vunpack.c.l.b16 %v4786
    %v4890 = vunpack.c.l.b16 %v4787
    %v4891 = vunpack.c.l.b16 %v4788
    %v4892 = vunpack.c.l.b16 %v4789
    %v4893 = vunpack.c.l.b16 %v4790
    %v4894 = vunpack.c.l.b16 %v4791
    %v4895 = vunpack.c.l.b16 %v4792
    %v4896 = vunpack.c.l.b16 %v4793
    %v4897 = vunpack.c.l.b16 %v4794
    %v4898 = vunpack.c.l.b16 %v4795
    %v4899 = vunpack.c.l.b16 %v4796
    %v4900 = vunpack.c.l.b16 %v4797
    %v4901 = vunpack.c.l.b16 %v4798
    %v4902 = vunpack.c.l.b16 %v4799
    %v4903 = vunpack.c.l.b16 %v4800
    %v4904 = vunpack.c.l.b16 %v4801
    %v4905 = vunpack.c.l.b16 %v4802
    %v4906 = vunpack.c.l.b16 %v4803
    %v4907 = vunpack.c.l.b16 %v4804
    %v4908 = vunpack.c.l.b16 %v4805
    %v4909 = vunpack.c.l.b16 %v4806
    %v4910 = vunpack.c.l.b16 %v4807
    %v4911 = vunpack.c.l.b16 %v4808
    %v4912 = vunpack.c.l.b16 %v4809
    %v4913 = vunpack.c.l.b16 %v4810
    %v4914 = vunpack.c.l.b16 %v4811
    %v4915 = vunpack.c.l.b16 %v4812
    %v4916 = vunpack.c.l.b16 %v4813
    %v4917 = vunpack.c.l.b16 %v4814
    %v4918 = vunpack.c.l.b16 %v4815
    %v4919 = vunpack.c.l.b16 %v4816
    %v4920 = vunpack.c.l.b16 %v4817
    %v4921 = vunpack.c.l.b16 %v4818
    %v4922 = vunpack.c.l.b16 %v4819
    %v4923 = vunpack.c.l.b16 %v4820
    %v4924 = vpack.c.b16 %v4877, %v4876
    %v4925 = vpack.c.b16 %v4879, %v4878
    %v4926 = vpack.c.b16 %v4881, %v4880
    %v4927 = vpack.c.b16 %v4883, %v4882
    %v4928 = vpack.c.b16 %v4885, %v4884
    %v4929 = vpack.c.b16 %v4887, %v4886
    %v4930 = vpack.c.b16 %v4889, %v4888
    %v4931 = vpack.c.b16 %v4891, %v4890
    %v4932 = vpack.c.b16 %v4893, %v4892
    %v4933 = vpack.c.b16 %v4895, %v4894
    %v4934 = vpack.c.b16 %v4897, %v4896
    %v4935 = vpack.c.b16 %v4899, %v4898
    %v4936 = vpack.c.b16 %v4901, %v4900
    %v4937 = vpack.c.b16 %v4903, %v4902
    %v4938 = vpack.c.b16 %v4905, %v4904
    %v4939 = vpack.c.b16 %v4907, %v4906
    %v4940 = vpack.c.b16 %v4909, %v4908
    %v4941 = vpack.c.b16 %v4911, %v4910
    %v4942 = vpack.c.b16 %v4913, %v4912
    %v4943 = vpack.c.b16 %v4915, %v4914
    %v4944 = vpack.c.b16 %v4917, %v4916
    %v4945 = vpack.c.b16 %v4919, %v4918
    %v4946 = vpack.c.b16 %v4921, %v4920
    %v4947 = vpack.c.b16 %v4923, %v4922
    %4972 = vmatprep.subr.bf16.mxu0 0
    %4973 = vmatpush1.bf16.msra.mxu0 %v4924
    %4974 = vmatprep.subr.bf16.mxu0 0
    %4975 = vmatpush1.bf16.msra.mxu0 %v4925
    %4976 = vmatprep.subr.bf16.mxu0 0
    %4977 = vmatpush1.bf16.msra.mxu0 %v4926
    %4978 = vmatprep.subr.bf16.mxu0 0
    %4979 = vmatpush1.bf16.msra.mxu0 %v4927
    %4980 = vmatprep.subr.bf16.mxu0 0
    %4981 = vmatpush1.bf16.msra.mxu0 %v4928
    %4982 = vmatprep.subr.bf16.mxu0 0
    %4983 = vmatpush1.bf16.msra.mxu0 %v4929
    %4984 = vmatprep.subr.bf16.mxu0 0
    %4985 = vmatpush1.bf16.msra.mxu0 %v4930
    %4986 = vmatprep.subr.bf16.mxu0 0
    %4987 = vmatpush1.bf16.msra.mxu0 %v4931
    %4988 = vmatprep.subr.bf16.mxu0 0
    %4989 = vmatpush1.bf16.msra.mxu0 %v4932
    %4990 = vmatprep.subr.bf16.mxu0 0
    %4991 = vmatpush1.bf16.msra.mxu0 %v4933
    %4992 = vmatprep.subr.bf16.mxu0 0
    %4993 = vmatpush1.bf16.msra.mxu0 %v4934
    %4994 = vmatprep.subr.bf16.mxu0 0
    %4995 = vmatpush1.bf16.msra.mxu0 %v4935
    %4996 = vmatprep.subr.bf16.mxu0 0
    %4997 = vmatpush1.bf16.msra.mxu0 %v4936
    %4998 = vmatprep.subr.bf16.mxu0 0
    %4999 = vmatpush1.bf16.msra.mxu0 %v4937
    %5000 = vmatprep.subr.bf16.mxu0 0
    %5001 = vmatpush1.bf16.msra.mxu0 %v4938
    %5002 = vmatprep.subr.bf16.mxu0 0
    %5003 = vmatpush1.bf16.msra.mxu0 %v4939
    %5004 = vmatprep.mubr.bf16.mxu0 %v4771
    %5005 = vmatmul.mubr.bf16.gmra.mrb[0].mxu0 %v4770
    %v5006 = vpop.f32.mrb[0].mxu0
    %v5007 = vadd.f32 %v4826, %v5006
    %v5008 = vpop.f32.mrb[0].mxu0
    %v5009 = vpop.f32.mrb[0].mxu0
    %v5010 = vpop.f32.mrb[0].mxu0
    %5011 = vdwg.mxu0
    %5012 = vmatprep.subr.bf16.mxu0 0
    %5013 = vmatpush1.bf16.msra.mxu0 %v4940
    %5014 = vmatprep.subr.bf16.mxu0 0
    %5015 = vmatpush1.bf16.msra.mxu0 %v4941
    %5016 = vmatprep.subr.bf16.mxu0 0
    %5017 = vmatpush1.bf16.msra.mxu0 %v4942
    %5018 = vmatprep.subr.bf16.mxu0 0
    %5019 = vmatpush1.bf16.msra.mxu0 %v4943
    %5020 = vmatprep.subr.bf16.mxu0 0
    %5021 = vmatpush1.bf16.msra.mxu0 %v4944
    %5022 = vmatprep.subr.bf16.mxu0 0
    %5023 = vmatpush1.bf16.msra.mxu0 %v4945
    %5024 = vmatprep.subr.bf16.mxu0 0
    %5025 = vmatpush1.bf16.msra.mxu0 %v4946
    %5026 = vmatprep.subr.bf16.mxu0 0
    %5027 = vmatpush1.bf16.msra.mxu0 %v4947
    %5028 = vmatprep.subr.bf16.mxu0 0
    %5029 = vmatpush1.bf16.msra.mxu0 0
    %5030 = vmatprep.subr.bf16.mxu0 0
    %5031 = vmatpush1.bf16.msra.mxu0 0
    %5032 = vmatprep.subr.bf16.mxu0 0
    %5033 = vmatpush1.bf16.msra.mxu0 0
    %5034 = vmatprep.subr.bf16.mxu0 0
    %5035 = vmatpush1.bf16.msra.mxu0 0
    %5036 = vmatprep.subr.bf16.mxu0 0
    %5037 = vmatpush1.bf16.msra.mxu0 0
    %5038 = vmatprep.subr.bf16.mxu0 0
    %5039 = vmatpush1.bf16.msra.mxu0 0
    %5040 = vmatprep.subr.bf16.mxu0 0
    %5041 = vmatpush1.bf16.msra.mxu0 0
    %5042 = vmatprep.subr.bf16.mxu0 0
    %5043 = vmatpush1.bf16.msra.mxu0 0
    %5044 = vmatprep.mubr.bf16.mxu0 0
    %5045 = vmatmul.mubr.bf16.gmra.mrb[0].mxu0 %v4772
    %v5046 = vpop.f32.mrb[0].mxu0
    %v5047 = vadd.f32 %v5007, %v5046
    %v5048 = vpop.f32.mrb[0].mxu0
    %v5049 = vpop.f32.mrb[0].mxu0
    %v5050 = vpop.f32.mrb[0].mxu0
    %5051 = vdwg.mxu0
    %v5052 = vpack.c.bf16 %v5047, %v5047
    %5053 = vst [vmem:[%s5] sm:$0x3] %v5052
    // Predicated region
    $region42: #{neural_net_forward.1} parent=1 // pred_check
      _
    $region43: #{neural_net_forward.1} parent=1 // pred_check_branch
      %5055 = sbr.rel (0) target = $region45
    $region44: #{neural_net_forward.1} parent=1 // pred_region
      _
    $region45: #{neural_net_forward.1} parent=1 // pred_fallthru
      _
    // Predicated region
    $region46: #{neural_net_forward.1} parent=1 // pred_check
      _
    $region47: #{neural_net_forward.1} parent=1 // pred_check_branch
      %5057 = sbr.rel (0) target = $region49
    $region48: #{neural_net_forward.1} parent=1 // pred_region
      _
    $region49: #{neural_net_forward.1} parent=1 // pred_fallthru
      _
    %5058 = vsyncpa [#allocation3], 1
    %5059 = vsyncpa [#allocation5], 1
    %5060 = vsyncpa [#allocation8], 1

</llo_original>
